<compile_context>
chip_gen: v7x
topology: tpu7x:2x2x1
jax: 0.10.0
libtpu: 0.0.40
codegen_flags: <defaults>
</compile_context>

<pallas_src>
import functools

import jax
import jax.numpy as jnp
from jax.experimental import pallas as pl
from jax.experimental.pallas import tpu as pltpu


def _round_up(x: int, m: int) -> int:
    return (x + m - 1) // m * m


# ----------------------------------------------------------------------------
# Fused 3x3 conv (pad=1) + bias + ReLU Pallas kernel (no im2col in HBM)
# ----------------------------------------------------------------------------
def _conv3x3_relu_kernel(x_ref, w_ref, b_ref, o_ref, *, Wp, L):
    """x_ref: (1, Hp*Wp, Cin) flattened zero-padded NHWC image (bf16).
    w_ref: (9, Cin, Cout) per-tap weights (bf16).  b_ref: (1, Cout) f32.
    o_ref: (1, L, Cout) conv output over the padded row grid (bf16).

    Output row q corresponds to padded position (h, w) = (q // Wp, q % Wp);
    rows with w >= W are wrap-around garbage and are killed downstream by
    zeroed classifier weights."""
    cout = o_ref.shape[-1]
    acc = jnp.zeros((L, cout), jnp.float32)
    for kh in range(3):
        for kw in range(3):
            off = kh * Wp + kw                       # static shift per tap
            tap = x_ref[0, off:off + L, :]           # (L, Cin) shifted view
            acc += jnp.dot(tap, w_ref[kh * 3 + kw],
                           preferred_element_type=jnp.float32)
    acc += b_ref[...]                                # f32 epilogue (v5e-safe)
    o_ref[0] = jnp.maximum(acc, 0.0).astype(o_ref.dtype)


def _conv3x3_relu(x_flat, w_taps, b, *, H, W, out_dtype=jnp.bfloat16):
    """Fused conv3x3(pad=1) + ReLU.  x_flat: (N, (H+2)*(W+2), Cin) bf16."""
    N, R, Cin = x_flat.shape
    Wp = W + 2
    assert R == (H + 2) * Wp
    L = (H - 1) * Wp + W                             # last valid row + 1
    Cout = w_taps.shape[-1]

    kernel = functools.partial(_conv3x3_relu_kernel, Wp=Wp, L=L)
    return pl.pallas_call(
        kernel,
        out_shape=jax.ShapeDtypeStruct((N, L, Cout), out_dtype),
        grid_spec=pltpu.PrefetchScalarGridSpec(
            num_scalar_prefetch=0,
            grid=(N,),
            in_specs=[
                pl.BlockSpec((1, R, Cin), lambda n: (n, 0, 0)),
                pl.BlockSpec((9, Cin, Cout), lambda n: (0, 0, 0)),
                pl.BlockSpec((1, Cout), lambda n: (0, 0)),
            ],
            out_specs=pl.BlockSpec((1, L, Cout), lambda n: (n, 0, 0)),
        ),
        compiler_params=pltpu.CompilerParams(
            # Batch shards across the two v7x TensorCores.
            dimension_semantics=("parallel",),
        ),
        cost_estimate=pl.CostEstimate(
            flops=2 * N * L * 9 * Cin * Cout,
            transcendentals=0,
            bytes_accessed=(N * R * Cin * 2 + 9 * Cin * Cout * 2 + Cout * 4
                            + N * L * Cout * 2),
        ),
    )(x_flat, w_taps, b)


# ----------------------------------------------------------------------------
# Tiled matmul (+bias, +optional ReLU) Pallas kernel (classifier)
# ----------------------------------------------------------------------------
def _matmul_bias_act_kernel(x_ref, w_ref, b_ref, o_ref, acc_ref, *, relu):
    # Grid = (M//tm, N//tn, K//tk); K is innermost ("arbitrary") so the f32
    # VMEM accumulator stays resident across the contraction.
    @pl.when(pl.program_id(2) == 0)
    def _init():
        acc_ref[...] = jnp.zeros_like(acc_ref)

    acc_ref[...] += jnp.dot(x_ref[...], w_ref[...],
                            preferred_element_type=jnp.float32)

    @pl.when(pl.program_id(2) == pl.num_programs(2) - 1)
    def _finalize():
        acc = acc_ref[...] + b_ref[...]              # f32 epilogue
        if relu:
            acc = jnp.maximum(acc, 0.0)
        o_ref[...] = acc.astype(o_ref.dtype)


def _matmul_bias_act(x, w, b, *, relu, out_dtype=jnp.float32):
    """y = relu?(x @ w + b): bf16 operands, f32 accumulation, tiled MXU matmul.

    M padded to a multiple of 8, N/K zero-padded to multiples of 128 so the
    outputs are lane-dense (no masked vst.msk) and the MXU sees full tiles;
    the result is sliced back to (M, N)."""
    M, K = x.shape
    K2, N = w.shape
    assert K == K2, (K, K2)

    tm = min(256, _round_up(M, 8))
    tn = min(256, _round_up(N, 128))
    tk = min(512, _round_up(K, 128))
    Mp, Np, Kp = _round_up(M, tm), _round_up(N, tn), _round_up(K, tk)

    xb = jnp.pad(x.astype(jnp.bfloat16), ((0, Mp - M), (0, Kp - K)))
    wb = jnp.pad(w.astype(jnp.bfloat16), ((0, Kp - K), (0, Np - N)))
    bp = jnp.pad(b.astype(jnp.float32), (0, Np - N)).reshape(1, Np)

    grid = (Mp // tm, Np // tn, Kp // tk)
    kernel = functools.partial(_matmul_bias_act_kernel, relu=relu)

    out = pl.pallas_call(
        kernel,
        out_shape=jax.ShapeDtypeStruct((Mp, Np), out_dtype),
        grid_spec=pltpu.PrefetchScalarGridSpec(
            num_scalar_prefetch=0,
            grid=grid,
            in_specs=[
                pl.BlockSpec((tm, tk), lambda i, j, k: (i, k)),
                pl.BlockSpec((tk, tn), lambda i, j, k: (k, j)),
                pl.BlockSpec((1, tn), lambda i, j, k: (0, j)),
            ],
            out_specs=pl.BlockSpec((tm, tn), lambda i, j, k: (i, j)),
            scratch_shapes=[pltpu.VMEM((tm, tn), jnp.float32)],
        ),
        compiler_params=pltpu.CompilerParams(
            dimension_semantics=("parallel", "parallel", "arbitrary"),
        ),
        cost_estimate=pl.CostEstimate(
            flops=2 * Mp * Np * Kp,
            transcendentals=0,
            bytes_accessed=(Mp * Kp * 2 + Kp * Np * 2 + Np * 4
                            + Mp * Np * jnp.dtype(out_dtype).itemsize),
        ),
    )(xb, wb, bp)
    return out[:M, :N]


# ----------------------------------------------------------------------------
# Parameter prep (one-time, host-side) and full module forward
# ----------------------------------------------------------------------------
def prepare_params(params, *, image_hw):
    """One-time weight preparation:
      * conv weight (Cout,Cin,3,3) -> per-tap (9, Cin, Cout), bf16
      * classifier weight permuted from the PyTorch NCHW flatten order into
        the padded-grid NHWC-major order produced by the fused conv kernel,
        with zeros at the wrap-around columns, bf16."""
    H, W = image_hw
    Wp = W + 2
    L = (H - 1) * Wp + W

    conv_w = params["conv_w"]                        # (Cout, Cin, 3, 3)
    Cout, Cin = conv_w.shape[0], conv_w.shape[1]
    lin_w = params["lin_w"]                          # (ncls, Cout*H*W), NCHW-major
    ncls = lin_w.shape[0]
    assert lin_w.shape[1] == Cout * H * W

    w_taps = jnp.transpose(conv_w, (2, 3, 1, 0)).reshape(
        9, Cin, Cout).astype(jnp.bfloat16)           # (kh*3+kw, Cin, Cout)

    # lin_w[n, c*H*W + h*W + w] -> Wl[(h*Wp + w)*Cout + c, n]; zero for w >= W.
    lw = lin_w.reshape(ncls, Cout, H, W)
    Wl = jnp.transpose(lw, (2, 3, 1, 0))             # (H, W, Cout, ncls)
    Wl = jnp.pad(Wl, ((0, 0), (0, Wp - W), (0, 0), (0, 0)))
    Wl = Wl.reshape(H * Wp * Cout, ncls)[: L * Cout].astype(jnp.bfloat16)

    return {
        "conv_w_taps": w_taps,
        "conv_b": params["conv_b"].astype(jnp.float32).reshape(1, Cout),
        "lin_w_flat": Wl,                            # (L*Cout, ncls)
        "lin_b": params["lin_b"].astype(jnp.float32),
    }


def customization_net_forward(x_nchw, prepped):
    """feature_extractor (conv3x3 pad=1 + ReLU) -> Flatten -> Linear."""
    N, Cin, H, W = x_nchw.shape
    Hp, Wp = H + 2, W + 2
    L = (H - 1) * Wp + W
    Cout = prepped["conv_w_taps"].shape[-1]

    # NCHW -> NHWC, zero-pad the 3x3 halo, flatten the padded spatial grid.
    xb = jnp.transpose(x_nchw.astype(jnp.bfloat16), (0, 2, 3, 1))
    xb = jnp.pad(xb, ((0, 0), (1, 1), (1, 1), (0, 0)))
    x_flat = xb.reshape(N, Hp * Wp, Cin)

    # Fused conv + bias + ReLU; features stay on-chip friendly bf16.
    feat = _conv3x3_relu(x_flat, prepped["conv_w_taps"], prepped["conv_b"],
                         H=H, W=W)                   # (N, L, Cout)

    # nn.Flatten: pure reshape (classifier weight already matches this order,
    # with zeros at the padded-grid garbage columns).
    flat = feat.reshape(N, L * Cout)

    # nn.Linear(num_elems, num_classes)
    return _matmul_bias_act(flat, prepped["lin_w_flat"], prepped["lin_b"],
                            relu=False, out_dtype=jnp.float32)


def init_params(key, *, cin, cout, h, w, num_classes):
    k1, k2, k3, k4 = jax.random.split(key, 4)
    num_elems = cout * h * w
    return {
        "conv_w": 0.1 * jax.random.normal(k1, (cout, cin, 3, 3), jnp.float32),
        "conv_b": 0.1 * jax.random.normal(k2, (cout,), jnp.float32),
        "lin_w": 0.05 * jax.random.normal(k3, (num_classes, num_elems), jnp.float32),
        "lin_b": 0.05 * jax.random.normal(k4, (num_classes,), jnp.float32),
    }


if __name__ == "__main__":
    key = jax.random.PRNGKey(0)
    kx, kp = jax.random.split(key)

    N, Cin, H, W = 2, 4, 16, 16
    Cout = 8
    num_classes = 10

    x = jax.random.normal(kx, (N, Cin, H, W), jnp.float32)
    params = init_params(kp, cin=Cin, cout=Cout, h=H, w=W,
                         num_classes=num_classes)
    prepped = prepare_params(params, image_hw=(H, W))

    fwd = jax.jit(customization_net_forward)
    pred = jax.block_until_ready(fwd(x, prepped))
    assert pred.shape == (N, num_classes), pred.shape

    # Cross-check against a pure-JAX reference with matched bf16 rounding
    # (original NCHW flatten + un-permuted weights => same math, different
    # summation order / layout only).
    f32 = jnp.float32
    xb = x.astype(jnp.bfloat16).astype(f32)
    cwb = params["conv_w"].astype(jnp.bfloat16).astype(f32)
    feat_ref = jax.lax.conv_general_dilated(
        xb, cwb, window_strides=(1, 1), padding="SAME",
        dimension_numbers=("NCHW", "OIHW", "NCHW"))
    feat_ref = jnp.maximum(feat_ref + params["conv_b"][None, :, None, None], 0.0)
    flat_ref = feat_ref.reshape(N, -1).astype(jnp.bfloat16).astype(f32)
    lwb = params["lin_w"].astype(jnp.bfloat16).astype(f32)
    pred_ref = flat_ref @ lwb.T + params["lin_b"]
    assert jnp.allclose(pred, pred_ref, atol=1e-2, rtol=1e-2), (
        float(jnp.max(jnp.abs(pred - pred_ref))))

    print("KERNEL_OK")
</pallas_src>

<mosaic_0001>
module attributes {stable_mosaic.version = 11 : i64} {
  func.func @_conv3x3_relu_kernel(%arg0: i32, %arg1: memref<1x324x4xbf16, #tpu.memory_space<vmem>>, %arg2: memref<9x4x8xbf16, #tpu.memory_space<vmem>>, %arg3: memref<1x8xf32, #tpu.memory_space<vmem>>, %arg4: memref<1x286x8xbf16, #tpu.memory_space<vmem>>) attributes {dimension_semantics = [#tpu.dimension_semantics<parallel>], iteration_bounds = array<i64: 2>, scalar_prefetch = 0 : i64, scratch_operands = 0 : i64, tpu.core_type = #tpu.core_type<tc>, window_params = [{transform_indices = @transform_0, window_bounds = array<i64: 1, 324, 4>}, {pipeline_mode = #tpu.pipeline_mode<synchronous>, transform_indices = @transform_1, window_bounds = array<i64: 9, 4, 8>}, {pipeline_mode = #tpu.pipeline_mode<synchronous>, transform_indices = @transform_2, window_bounds = array<i64: 1, 8>}, {transform_indices = @transform_3, window_bounds = array<i64: 1, 286, 8>}]} {
    %cst = arith.constant 0.000000e+00 : f32
    %0 = vector.broadcast %cst : f32 to vector<286x8xf32>
    %c0 = arith.constant 0 : index
    %c0_0 = arith.constant 0 : index
    %c0_1 = arith.constant 0 : index
    %1 = vector.load %arg1[%c0, %c0_0, %c0_1] : memref<1x324x4xbf16, #tpu.memory_space<vmem>>, vector<1x286x4xbf16>
    %2 = vector.shape_cast %1 : vector<1x286x4xbf16> to vector<286x4xbf16>
    %c0_2 = arith.constant 0 : index
    %c0_3 = arith.constant 0 : index
    %c0_4 = arith.constant 0 : index
    %3 = vector.load %arg2[%c0_2, %c0_3, %c0_4] : memref<9x4x8xbf16, #tpu.memory_space<vmem>>, vector<1x4x8xbf16>
    %4 = vector.shape_cast %3 : vector<1x4x8xbf16> to vector<4x8xbf16>
    %cst_5 = arith.constant dense<0.000000e+00> : vector<286x8xf32>
    %5 = tpu.matmul %2, %4, %cst_5 {dimension_numbers = #tpu.dot_dimension_numbers<[1], [0], [0], [1], [0, 0, 1, 1], [], []>} : vector<286x4xbf16>, vector<4x8xbf16>, vector<286x8xf32> -> vector<286x8xf32>
    %6 = arith.addf %0, %5 : vector<286x8xf32>
    %c0_6 = arith.constant 0 : index
    %c1 = arith.constant 1 : index
    %c0_7 = arith.constant 0 : index
    %7 = vector.load %arg1[%c0_6, %c1, %c0_7] : memref<1x324x4xbf16, #tpu.memory_space<vmem>>, vector<1x286x4xbf16>
    %8 = vector.shape_cast %7 : vector<1x286x4xbf16> to vector<286x4xbf16>
    %c1_8 = arith.constant 1 : index
    %c0_9 = arith.constant 0 : index
    %c0_10 = arith.constant 0 : index
    %9 = vector.load %arg2[%c1_8, %c0_9, %c0_10] : memref<9x4x8xbf16, #tpu.memory_space<vmem>>, vector<1x4x8xbf16>
    %10 = vector.shape_cast %9 : vector<1x4x8xbf16> to vector<4x8xbf16>
    %cst_11 = arith.constant dense<0.000000e+00> : vector<286x8xf32>
    %11 = tpu.matmul %8, %10, %cst_11 {dimension_numbers = #tpu.dot_dimension_numbers<[1], [0], [0], [1], [0, 0, 1, 1], [], []>} : vector<286x4xbf16>, vector<4x8xbf16>, vector<286x8xf32> -> vector<286x8xf32>
    %12 = arith.addf %6, %11 : vector<286x8xf32>
    %c0_12 = arith.constant 0 : index
    %c2 = arith.constant 2 : index
    %c0_13 = arith.constant 0 : index
    %13 = vector.load %arg1[%c0_12, %c2, %c0_13] : memref<1x324x4xbf16, #tpu.memory_space<vmem>>, vector<1x286x4xbf16>
    %14 = vector.shape_cast %13 : vector<1x286x4xbf16> to vector<286x4xbf16>
    %c2_14 = arith.constant 2 : index
    %c0_15 = arith.constant 0 : index
    %c0_16 = arith.constant 0 : index
    %15 = vector.load %arg2[%c2_14, %c0_15, %c0_16] : memref<9x4x8xbf16, #tpu.memory_space<vmem>>, vector<1x4x8xbf16>
    %16 = vector.shape_cast %15 : vector<1x4x8xbf16> to vector<4x8xbf16>
    %cst_17 = arith.constant dense<0.000000e+00> : vector<286x8xf32>
    %17 = tpu.matmul %14, %16, %cst_17 {dimension_numbers = #tpu.dot_dimension_numbers<[1], [0], [0], [1], [0, 0, 1, 1], [], []>} : vector<286x4xbf16>, vector<4x8xbf16>, vector<286x8xf32> -> vector<286x8xf32>
    %18 = arith.addf %12, %17 : vector<286x8xf32>
    %c0_18 = arith.constant 0 : index
    %c18 = arith.constant 18 : index
    %c0_19 = arith.constant 0 : index
    %19 = vector.load %arg1[%c0_18, %c18, %c0_19] : memref<1x324x4xbf16, #tpu.memory_space<vmem>>, vector<1x286x4xbf16>
    %20 = vector.shape_cast %19 : vector<1x286x4xbf16> to vector<286x4xbf16>
    %c3 = arith.constant 3 : index
    %c0_20 = arith.constant 0 : index
    %c0_21 = arith.constant 0 : index
    %21 = vector.load %arg2[%c3, %c0_20, %c0_21] : memref<9x4x8xbf16, #tpu.memory_space<vmem>>, vector<1x4x8xbf16>
    %22 = vector.shape_cast %21 : vector<1x4x8xbf16> to vector<4x8xbf16>
    %cst_22 = arith.constant dense<0.000000e+00> : vector<286x8xf32>
    %23 = tpu.matmul %20, %22, %cst_22 {dimension_numbers = #tpu.dot_dimension_numbers<[1], [0], [0], [1], [0, 0, 1, 1], [], []>} : vector<286x4xbf16>, vector<4x8xbf16>, vector<286x8xf32> -> vector<286x8xf32>
    %24 = arith.addf %18, %23 : vector<286x8xf32>
    %c0_23 = arith.constant 0 : index
    %c19 = arith.constant 19 : index
    %c0_24 = arith.constant 0 : index
    %25 = vector.load %arg1[%c0_23, %c19, %c0_24] : memref<1x324x4xbf16, #tpu.memory_space<vmem>>, vector<1x286x4xbf16>
    %26 = vector.shape_cast %25 : vector<1x286x4xbf16> to vector<286x4xbf16>
    %c4 = arith.constant 4 : index
    %c0_25 = arith.constant 0 : index
    %c0_26 = arith.constant 0 : index
    %27 = vector.load %arg2[%c4, %c0_25, %c0_26] : memref<9x4x8xbf16, #tpu.memory_space<vmem>>, vector<1x4x8xbf16>
    %28 = vector.shape_cast %27 : vector<1x4x8xbf16> to vector<4x8xbf16>
    %cst_27 = arith.constant dense<0.000000e+00> : vector<286x8xf32>
    %29 = tpu.matmul %26, %28, %cst_27 {dimension_numbers = #tpu.dot_dimension_numbers<[1], [0], [0], [1], [0, 0, 1, 1], [], []>} : vector<286x4xbf16>, vector<4x8xbf16>, vector<286x8xf32> -> vector<286x8xf32>
    %30 = arith.addf %24, %29 : vector<286x8xf32>
    %c0_28 = arith.constant 0 : index
    %c20 = arith.constant 20 : index
    %c0_29 = arith.constant 0 : index
    %31 = vector.load %arg1[%c0_28, %c20, %c0_29] : memref<1x324x4xbf16, #tpu.memory_space<vmem>>, vector<1x286x4xbf16>
    %32 = vector.shape_cast %31 : vector<1x286x4xbf16> to vector<286x4xbf16>
    %c5 = arith.constant 5 : index
    %c0_30 = arith.constant 0 : index
    %c0_31 = arith.constant 0 : index
    %33 = vector.load %arg2[%c5, %c0_30, %c0_31] : memref<9x4x8xbf16, #tpu.memory_space<vmem>>, vector<1x4x8xbf16>
    %34 = vector.shape_cast %33 : vector<1x4x8xbf16> to vector<4x8xbf16>
    %cst_32 = arith.constant dense<0.000000e+00> : vector<286x8xf32>
    %35 = tpu.matmul %32, %34, %cst_32 {dimension_numbers = #tpu.dot_dimension_numbers<[1], [0], [0], [1], [0, 0, 1, 1], [], []>} : vector<286x4xbf16>, vector<4x8xbf16>, vector<286x8xf32> -> vector<286x8xf32>
    %36 = arith.addf %30, %35 : vector<286x8xf32>
    %c0_33 = arith.constant 0 : index
    %c36 = arith.constant 36 : index
    %c0_34 = arith.constant 0 : index
    %37 = vector.load %arg1[%c0_33, %c36, %c0_34] : memref<1x324x4xbf16, #tpu.memory_space<vmem>>, vector<1x286x4xbf16>
    %38 = vector.shape_cast %37 : vector<1x286x4xbf16> to vector<286x4xbf16>
    %c6 = arith.constant 6 : index
    %c0_35 = arith.constant 0 : index
    %c0_36 = arith.constant 0 : index
    %39 = vector.load %arg2[%c6, %c0_35, %c0_36] : memref<9x4x8xbf16, #tpu.memory_space<vmem>>, vector<1x4x8xbf16>
    %40 = vector.shape_cast %39 : vector<1x4x8xbf16> to vector<4x8xbf16>
    %cst_37 = arith.constant dense<0.000000e+00> : vector<286x8xf32>
    %41 = tpu.matmul %38, %40, %cst_37 {dimension_numbers = #tpu.dot_dimension_numbers<[1], [0], [0], [1], [0, 0, 1, 1], [], []>} : vector<286x4xbf16>, vector<4x8xbf16>, vector<286x8xf32> -> vector<286x8xf32>
    %42 = arith.addf %36, %41 : vector<286x8xf32>
    %c0_38 = arith.constant 0 : index
    %c37 = arith.constant 37 : index
    %c0_39 = arith.constant 0 : index
    %43 = vector.load %arg1[%c0_38, %c37, %c0_39] : memref<1x324x4xbf16, #tpu.memory_space<vmem>>, vector<1x286x4xbf16>
    %44 = vector.shape_cast %43 : vector<1x286x4xbf16> to vector<286x4xbf16>
    %c7 = arith.constant 7 : index
    %c0_40 = arith.constant 0 : index
    %c0_41 = arith.constant 0 : index
    %45 = vector.load %arg2[%c7, %c0_40, %c0_41] : memref<9x4x8xbf16, #tpu.memory_space<vmem>>, vector<1x4x8xbf16>
    %46 = vector.shape_cast %45 : vector<1x4x8xbf16> to vector<4x8xbf16>
    %cst_42 = arith.constant dense<0.000000e+00> : vector<286x8xf32>
    %47 = tpu.matmul %44, %46, %cst_42 {dimension_numbers = #tpu.dot_dimension_numbers<[1], [0], [0], [1], [0, 0, 1, 1], [], []>} : vector<286x4xbf16>, vector<4x8xbf16>, vector<286x8xf32> -> vector<286x8xf32>
    %48 = arith.addf %42, %47 : vector<286x8xf32>
    %c0_43 = arith.constant 0 : index
    %c38 = arith.constant 38 : index
    %c0_44 = arith.constant 0 : index
    %49 = vector.load %arg1[%c0_43, %c38, %c0_44] : memref<1x324x4xbf16, #tpu.memory_space<vmem>>, vector<1x286x4xbf16>
    %50 = vector.shape_cast %49 : vector<1x286x4xbf16> to vector<286x4xbf16>
    %c8 = arith.constant 8 : index
    %c0_45 = arith.constant 0 : index
    %c0_46 = arith.constant 0 : index
    %51 = vector.load %arg2[%c8, %c0_45, %c0_46] : memref<9x4x8xbf16, #tpu.memory_space<vmem>>, vector<1x4x8xbf16>
    %52 = vector.shape_cast %51 : vector<1x4x8xbf16> to vector<4x8xbf16>
    %cst_47 = arith.constant dense<0.000000e+00> : vector<286x8xf32>
    %53 = tpu.matmul %50, %52, %cst_47 {dimension_numbers = #tpu.dot_dimension_numbers<[1], [0], [0], [1], [0, 0, 1, 1], [], []>} : vector<286x4xbf16>, vector<4x8xbf16>, vector<286x8xf32> -> vector<286x8xf32>
    %54 = arith.addf %48, %53 : vector<286x8xf32>
    %c0_48 = arith.constant 0 : index
    %c0_49 = arith.constant 0 : index
    %55 = vector.load %arg3[%c0_48, %c0_49] : memref<1x8xf32, #tpu.memory_space<vmem>>, vector<1x8xf32>
    %56 = vector.broadcast %55 : vector<1x8xf32> to vector<286x8xf32>
    %57 = arith.addf %54, %56 : vector<286x8xf32>
    %cst_50 = arith.constant 0.000000e+00 : f32
    %58 = vector.broadcast %cst_50 : f32 to vector<286x8xf32>
    %59 = arith.maximumf %57, %58 : vector<286x8xf32>
    %60 = arith.truncf %59 : vector<286x8xf32> to vector<286x8xbf16>
    %c0_51 = arith.constant 0 : index
    %c0_52 = arith.constant 0 : index
    %c0_53 = arith.constant 0 : index
    %61 = vector.load %arg4[%c0_51, %c0_52, %c0_53] : memref<1x286x8xbf16, #tpu.memory_space<vmem>>, vector<1x286x8xbf16>
    %62 = vector.shape_cast %61 : vector<1x286x8xbf16> to vector<286x8xbf16>
    %63 = vector.shape_cast %60 : vector<286x8xbf16> to vector<1x286x8xbf16>
    tpu.vector_store %arg4[%c0_51, %c0_52, %c0_53], %63 {strides = array<i32>} : memref<1x286x8xbf16, #tpu.memory_space<vmem>>, vector<1x286x8xbf16>,
    return
  }
  func.func @transform_0(%arg0: i32) -> (i32, i32, i32) {
    %c0_i32 = arith.constant 0 : i32
    %c0_i32_0 = arith.constant 0 : i32
    %c0_i32_1 = arith.constant 0 : i32
    return %arg0, %c0_i32, %c0_i32_0 : i32, i32, i32
  }
  func.func @transform_1(%arg0: i32) -> (i32, i32, i32) {
    %c0_i32 = arith.constant 0 : i32
    %c0_i32_0 = arith.constant 0 : i32
    %c0_i32_1 = arith.constant 0 : i32
    %c0_i32_2 = arith.constant 0 : i32
    return %c0_i32, %c0_i32_0, %c0_i32_1 : i32, i32, i32
  }
  func.func @transform_2(%arg0: i32) -> (i32, i32) {
    %c0_i32 = arith.constant 0 : i32
    %c0_i32_0 = arith.constant 0 : i32
    %c0_i32_1 = arith.constant 0 : i32
    return %c0_i32, %c0_i32_0 : i32, i32
  }
  func.func @transform_3(%arg0: i32) -> (i32, i32, i32) {
    %c0_i32 = arith.constant 0 : i32
    %c0_i32_0 = arith.constant 0 : i32
    %c0_i32_1 = arith.constant 0 : i32
    return %arg0, %c0_i32, %c0_i32_0 : i32, i32, i32
  }
}

module attributes {stable_mosaic.version = 11 : i64} {
  func.func @_matmul_bias_act_kernel(%arg0: i32, %arg1: i32, %arg2: i32, %arg3: memref<8x512xbf16, #tpu.memory_space<vmem>>, %arg4: memref<512x128xbf16, #tpu.memory_space<vmem>>, %arg5: memref<1x128xf32, #tpu.memory_space<vmem>>, %arg6: memref<8x128xf32, #tpu.memory_space<vmem>>, %arg7: memref<8x128xf32, #tpu.memory_space<vmem>>) attributes {dimension_semantics = [#tpu.dimension_semantics<parallel>, #tpu.dimension_semantics<parallel>, #tpu.dimension_semantics<arbitrary>], iteration_bounds = array<i64: 1, 1, 5>, scalar_prefetch = 0 : i64, scratch_operands = 1 : i64, tpu.core_type = #tpu.core_type<tc>, window_params = [{transform_indices = @transform_0, window_bounds = array<i64: 8, 512>}, {transform_indices = @transform_1, window_bounds = array<i64: 512, 128>}, {transform_indices = @transform_2, window_bounds = array<i64: 1, 128>}, {transform_indices = @transform_3, window_bounds = array<i64: 8, 128>}]} {
    %c0_i32 = arith.constant 0 : i32
    %0 = arith.cmpi eq, %arg2, %c0_i32 : i32
    %1 = arith.extui %0 : i1 to i32
    %c0_i32_0 = arith.constant 0 : i32
    %2 = arith.cmpi ne, %1, %c0_i32_0 : i32
    scf.if %2 {
      %cst_9 = arith.constant 0.000000e+00 : f32
      %12 = vector.broadcast %cst_9 : f32 to vector<8x128xf32>
      %c0_10 = arith.constant 0 : index
      %c0_11 = arith.constant 0 : index
      %13 = vector.load %arg7[%c0_10, %c0_11] : memref<8x128xf32, #tpu.memory_space<vmem>>, vector<8x128xf32>
      tpu.vector_store %arg7[%c0_10, %c0_11], %12 {strides = array<i32>} : memref<8x128xf32, #tpu.memory_space<vmem>>, vector<8x128xf32>,
    } else {
    }
    %c0 = arith.constant 0 : index
    %c0_1 = arith.constant 0 : index
    %3 = vector.load %arg7[%c0, %c0_1] : memref<8x128xf32, #tpu.memory_space<vmem>>, vector<8x128xf32>
    %c0_2 = arith.constant 0 : index
    %c0_3 = arith.constant 0 : index
    %4 = vector.load %arg3[%c0_2, %c0_3] : memref<8x512xbf16, #tpu.memory_space<vmem>>, vector<8x512xbf16>
    %c0_4 = arith.constant 0 : index
    %c0_5 = arith.constant 0 : index
    %5 = vector.load %arg4[%c0_4, %c0_5] : memref<512x128xbf16, #tpu.memory_space<vmem>>, vector<512x128xbf16>
    %cst = arith.constant dense<0.000000e+00> : vector<8x128xf32>
    %6 = tpu.matmul %4, %5, %cst {dimension_numbers = #tpu.dot_dimension_numbers<[1], [0], [0], [1], [0, 0, 1, 1], [], []>} : vector<8x512xbf16>, vector<512x128xbf16>, vector<8x128xf32> -> vector<8x128xf32>
    %7 = arith.addf %3, %6 : vector<8x128xf32>
    %c0_6 = arith.constant 0 : index
    %c0_7 = arith.constant 0 : index
    %8 = vector.load %arg7[%c0_6, %c0_7] : memref<8x128xf32, #tpu.memory_space<vmem>>, vector<8x128xf32>
    tpu.vector_store %arg7[%c0_6, %c0_7], %7 {strides = array<i32>} : memref<8x128xf32, #tpu.memory_space<vmem>>, vector<8x128xf32>,
    %c4_i32 = arith.constant 4 : i32
    %9 = arith.cmpi eq, %arg2, %c4_i32 : i32
    %10 = arith.extui %9 : i1 to i32
    %c0_i32_8 = arith.constant 0 : i32
    %11 = arith.cmpi ne, %10, %c0_i32_8 : i32
    scf.if %11 {
      %c0_9 = arith.constant 0 : index
      %c0_10 = arith.constant 0 : index
      %12 = vector.load %arg7[%c0_9, %c0_10] : memref<8x128xf32, #tpu.memory_space<vmem>>, vector<8x128xf32>
      %c0_11 = arith.constant 0 : index
      %c0_12 = arith.constant 0 : index
      %13 = vector.load %arg5[%c0_11, %c0_12] : memref<1x128xf32, #tpu.memory_space<vmem>>, vector<1x128xf32>
      %14 = vector.broadcast %13 : vector<1x128xf32> to vector<8x128xf32>
      %15 = arith.addf %12, %14 : vector<8x128xf32>
      %c0_13 = arith.constant 0 : index
      %c0_14 = arith.constant 0 : index
      %16 = vector.load %arg6[%c0_13, %c0_14] : memref<8x128xf32, #tpu.memory_space<vmem>>, vector<8x128xf32>
      tpu.vector_store %arg6[%c0_13, %c0_14], %15 {strides = array<i32>} : memref<8x128xf32, #tpu.memory_space<vmem>>, vector<8x128xf32>,
    } else {
    }
    return
  }
  func.func @transform_0(%arg0: i32, %arg1: i32, %arg2: i32) -> (i32, i32) {
    %c0_i32 = arith.constant 0 : i32
    return %arg0, %arg2 : i32, i32
  }
  func.func @transform_1(%arg0: i32, %arg1: i32, %arg2: i32) -> (i32, i32) {
    %c0_i32 = arith.constant 0 : i32
    return %arg2, %arg1 : i32, i32
  }
  func.func @transform_2(%arg0: i32, %arg1: i32, %arg2: i32) -> (i32, i32) {
    %c0_i32 = arith.constant 0 : i32
    %c0_i32_0 = arith.constant 0 : i32
    return %c0_i32, %arg1 : i32, i32
  }
  func.func @transform_3(%arg0: i32, %arg1: i32, %arg2: i32) -> (i32, i32) {
    %c0_i32 = arith.constant 0 : i32
    return %arg0, %arg1 : i32, i32
  }
}

</mosaic_0001>

<llo_original>
// kernel: customization_net_forward.3
$region0: #{customization_net_forward.3}
  #allocation0 [shape = 'u32[]', space=smem, size = 0x4, offset = 0x4, fixed_abs, tag = 'smem constant byte address 0x4 - core index']
  #allocation1 [shape = 'u32[144,128]{1,0:T(1,128)}', space=vmem, size = 0x12000, scoped, tag = 'internal scratch']
  #allocation2 [shape = 'f32[8,128]{1,0:T(8,128)}', space=vmem, size = 0x1000, scoped, tag = 'scratch operand']
  %s0 = inlined_call_operand.vmem [shape: bf16[8,2560], index: 0, kind: input, shape index: {}]
  %s1 = inlined_call_operand.vmem [shape: bf16[2560,128], index: 1, kind: input, shape index: {}]
  %s2 = inlined_call_operand.vmem [shape: f32[1,128], index: 2, kind: input, shape index: {}]
  %s3 = inlined_call_operand.vmem [shape: f32[8,128], index: 3, kind: output, shape index: {}]
  %s4 = sld [smem:[#allocation0]]
  $region53: #{customization_net_forward.3} parent=0
    _
  %s6 = ssub.s32 1, %s4
  %s7 = scalar_select 0, %s6, %s4
  loop: start=0, step=1, limit=7
  $region2: #{customization_net_forward.3} parent=0 // loop_pre_header
    _
  $region3: #{customization_net_forward.3} parent=0 // loop_header
    %s9 = sphi 0, %s13
    %p10 = scmp.ge.s32.totalorder %s9, 7
    %s16 = sphi 0, %s35
    %s17 = sphi 0, %s31
    %s18 = sphi 0, %s27
    %s19 = sphi 0, %s16
    %s20 = sphi 0, %s17
    %s21 = sphi 0, %s18
    %s22 = sphi 0, %s19
    %s23 = sphi 0, %s20
    %s24 = sphi 0, %s21
    %s40 = sphi 0, %s42
    %s43 = sphi 0, %s40
    %s44 = sphi 0, %s43
    %s60 = sphi 0, %s44
    %s68 = sphi 0, %s70
    %s71 = sphi 0, %s68
    %s72 = sphi 0, %s71
    %s88 = sphi 0, %s72
    %s94 = sphi 0, %s96
    %s97 = sphi 0, %s94
    %s98 = sphi 0, %s97
    %s114 = sphi 0, %s98
    %s122 = sphi 0, %s124
    %s125 = sphi 0, %s122
    %s126 = sphi 0, %s125
    %s142 = sphi 0, %s126
  $region4: #{customization_net_forward.3} parent=0 // loop_header_branch
    %12 = sbr.rel (%p10) target = $region8
  $region5: #{customization_net_forward.3} parent=0 // loop_body
    %s14 = ssub.s32 %s9, 1
    %s15 = ssub.s32 %s9, 2
    %s25 = sadd.s32 1, %s18
    %p26 = scmp.ge.s32.totalorder %s25, 5
    %s27 = scalar_select %p26, 0, %s25
    %s28 = sadd.s32 1, %s17
    %s29 = scalar_select %p26, %s28, %s17
    %p30 = scmp.ge.s32.totalorder %s29, 1
    %s31 = scalar_select %p30, 0, %s29
    %s32 = sadd.s32 1, %s16
    %s33 = scalar_select %p30, %s32, %s16
    %p34 = scmp.ge.s32.totalorder %s33, 1
    %s35 = scalar_select %p34, 0, %s33
    %s36 = ssub.s32 %s16, %s35
    %s37 = ssub.s32 %s18, %s27
    %s38 = sor.u32 %s36, %s37
    %p39 = scmp.eq.s32.totalorder %s38, 0
    %s41 = sadd.s32 %s40, 1
    %s42 = scalar_select %p39, %s40, %s41
    %p45 = pneg %p39
    %p46 = scmp.eq.s32.totalorder %s9, 4
    %p47 = por %p45, %p46
    %p48 = scmp.ne.s32.totalorder %s40, %s43
    %p49 = scmp.eq.s32.totalorder %s9, 0
    %p50 = por %p48, %p49
    %p51 = scmp.ne.s32.totalorder %s40, %s43
    %p52 = scmp.eq.s32.totalorder %s14, 4
    %p53 = por %p51, %p52
    %p54 = scmp.ne.s32.totalorder %s43, %s44
    %p55 = scmp.eq.s32.totalorder %s14, 0
    %p56 = por %p54, %p55
    %p57 = scmp.ne.s32.totalorder %s43, %s44
    %p58 = scmp.eq.s32.totalorder %s15, 4
    %p59 = por %p57, %p58
    %p61 = scmp.ne.s32.totalorder %s44, %s60
    %p62 = scmp.eq.s32.totalorder %s15, 0
    %p63 = por %p61, %p62
    %s64 = ssub.s32 %s18, %s27
    %s65 = ssub.s32 %s17, %s31
    %s66 = sor.u32 %s64, %s65
    %p67 = scmp.eq.s32.totalorder %s66, 0
    %s69 = sadd.s32 %s68, 1
    %s70 = scalar_select %p67, %s68, %s69
    %p73 = pneg %p67
    %p74 = scmp.eq.s32.totalorder %s9, 4
    %p75 = por %p73, %p74
    %p76 = scmp.ne.s32.totalorder %s68, %s71
    %p77 = scmp.eq.s32.totalorder %s9, 0
    %p78 = por %p76, %p77
    %p79 = scmp.ne.s32.totalorder %s68, %s71
    %p80 = scmp.eq.s32.totalorder %s14, 4
    %p81 = por %p79, %p80
    %p82 = scmp.ne.s32.totalorder %s71, %s72
    %p83 = scmp.eq.s32.totalorder %s14, 0
    %p84 = por %p82, %p83
    %p85 = scmp.ne.s32.totalorder %s71, %s72
    %p86 = scmp.eq.s32.totalorder %s15, 4
    %p87 = por %p85, %p86
    %p89 = scmp.ne.s32.totalorder %s72, %s88
    %p90 = scmp.eq.s32.totalorder %s15, 0
    %p91 = por %p89, %p90
    %s92 = ssub.s32 %s17, %s31
    %p93 = scmp.eq.s32.totalorder %s92, 0
    %s95 = sadd.s32 %s94, 1
    %s96 = scalar_select %p93, %s94, %s95
    %p99 = pneg %p93
    %p100 = scmp.eq.s32.totalorder %s9, 4
    %p101 = por %p99, %p100
    %p102 = scmp.ne.s32.totalorder %s94, %s97
    %p103 = scmp.eq.s32.totalorder %s9, 0
    %p104 = por %p102, %p103
    %p105 = scmp.ne.s32.totalorder %s94, %s97
    %p106 = scmp.eq.s32.totalorder %s14, 4
    %p107 = por %p105, %p106
    %p108 = scmp.ne.s32.totalorder %s97, %s98
    %p109 = scmp.eq.s32.totalorder %s14, 0
    %p110 = por %p108, %p109
    %p111 = scmp.ne.s32.totalorder %s97, %s98
    %p112 = scmp.eq.s32.totalorder %s15, 4
    %p113 = por %p111, %p112
    %p115 = scmp.ne.s32.totalorder %s98, %s114
    %p116 = scmp.eq.s32.totalorder %s15, 0
    %p117 = por %p115, %p116
    %s118 = ssub.s32 %s16, %s35
    %s119 = ssub.s32 %s17, %s31
    %s120 = sor.u32 %s118, %s119
    %p121 = scmp.eq.s32.totalorder %s120, 0
    %s123 = sadd.s32 %s122, 1
    %s124 = scalar_select %p121, %s122, %s123
    %p127 = pneg %p121
    %p128 = scmp.eq.s32.totalorder %s9, 4
    %p129 = por %p127, %p128
    %p130 = scmp.ne.s32.totalorder %s122, %s125
    %p131 = scmp.eq.s32.totalorder %s9, 0
    %p132 = por %p130, %p131
    %p133 = scmp.ne.s32.totalorder %s122, %s125
    %p134 = scmp.eq.s32.totalorder %s14, 4
    %p135 = por %p133, %p134
    %p136 = scmp.ne.s32.totalorder %s125, %s126
    %p137 = scmp.eq.s32.totalorder %s14, 0
    %p138 = por %p136, %p137
    %p139 = scmp.ne.s32.totalorder %s125, %s126
    %p140 = scmp.eq.s32.totalorder %s15, 4
    %p141 = por %p139, %p140
    %p143 = scmp.ne.s32.totalorder %s126, %s142
    %p144 = scmp.eq.s32.totalorder %s15, 0
    %p145 = por %p143, %p144
    %p146 = scmp.le.s32.totalorder 1, %s9
    %p147 = scmp.lt.s32.totalorder %s9, 6
    %p148 = pnand %p146, %p147
    %p149 = pneg %p148
    // Predicated region
    $region9: #{customization_net_forward.3} parent=5 // pred_check
      _
    $region10: #{customization_net_forward.3} parent=5 // pred_check_branch
      %151 = sbr.rel (%p148) target = $region12
    $region11: #{customization_net_forward.3} parent=5 // pred_region
      %s152 = ssub.s32 %s9, 1
      // Predicated region
      $region13: #{customization_net_forward.3} parent=11 // pred_check
        %p153 = pneg %p110
      $region14: #{customization_net_forward.3} parent=11 // pred_check_branch
        %155 = sbr.rel (%p153) target = $region16
      $region15: #{customization_net_forward.3} parent=11 // pred_region
        %p156 = scmp.lt.s32.totalorder %s20, 0
        %s157 = scalar_select %p156, %s20, 0
        %s158 = scalar_lea.vmem %s2, %s157
      $region16: #{customization_net_forward.3} parent=11 // pred_fallthru
        _
    $region12: #{customization_net_forward.3} parent=5 // pred_fallthru
      _
    %p159 = scmp.lt.s32.totalorder %s9, 5
    // Predicated region
    $region17: #{customization_net_forward.3} parent=5 // pred_check
      %p160 = pneg %p159
    $region18: #{customization_net_forward.3} parent=5 // pred_check_branch
      %162 = sbr.rel (%p160) target = $region20
    $region19: #{customization_net_forward.3} parent=5 // pred_region
      // Predicated region
      $region21: #{customization_net_forward.3} parent=19 // pred_check
        %p163 = pneg %p50
      $region22: #{customization_net_forward.3} parent=19 // pred_check_branch
        %165 = sbr.rel (%p163) target = $region24
      $region23: #{customization_net_forward.3} parent=19 // pred_region
        %s166 = smul.u32 4, %s18
        %p167 = scmp.lt.s32.totalorder %s16, 0
        %s168 = scalar_select %p167, %s16, 0
        %p169 = scmp.lt.s32.totalorder %s166, 19
        %s170 = scalar_select %p169, %s166, 19
        %s171 = smul.addr %s168, 20
        %s172 = sadd.s32 %s170, %s171
        %s173 = smul.addr %s172, 4
        %s174 = scalar_lea.vmem %s0, %s173
        %s175 = smul.u32 4, %s18
      $region24: #{customization_net_forward.3} parent=19 // pred_fallthru
        _
      // Predicated region
      $region25: #{customization_net_forward.3} parent=19 // pred_check
        %p176 = pneg %p78
      $region26: #{customization_net_forward.3} parent=19 // pred_check_branch
        %178 = sbr.rel (%p176) target = $region28
      $region27: #{customization_net_forward.3} parent=19 // pred_region
        %s179 = smul.u32 64, %s18
        %p180 = scmp.lt.s32.totalorder %s179, 319
        %s181 = scalar_select %p180, %s179, 319
        %p182 = scmp.lt.s32.totalorder %s17, 0
        %s183 = scalar_select %p182, %s17, 0
        %s184 = sadd.s32 %s183, %s181
        %s185 = smul.addr %s184, 4
        %s186 = scalar_lea.vmem %s1, %s185
        %s187 = smul.u32 64, %s18
      $region28: #{customization_net_forward.3} parent=19 // pred_fallthru
        _
    $region20: #{customization_net_forward.3} parent=5 // pred_fallthru
      _
    %p188 = scmp.le.s32.totalorder 1, %s9
    %p189 = scmp.lt.s32.totalorder %s9, 6
    %p190 = pnand %p188, %p189
    %p191 = pneg %p190
    // Predicated region
    $region29: #{customization_net_forward.3} parent=5 // pred_check
      _
    $region30: #{customization_net_forward.3} parent=5 // pred_check_branch
      %193 = sbr.rel (%p190) target = $region32
    $region31: #{customization_net_forward.3} parent=5 // pred_region
      %s194 = ssub.s32 %s9, 1
      %s195 = smul.u32 4, %s21
      %p196 = scmp.lt.s32.totalorder %s19, 0
      %s197 = scalar_select %p196, %s19, 0
      %p198 = scmp.lt.s32.totalorder %s195, 19
      %s199 = scalar_select %p198, %s195, 19
      %s200 = smul.addr %s197, 20
      %s201 = sadd.s32 %s199, %s200
      %s202 = smul.addr %s201, 4
      %s203 = scalar_lea.vmem %s0, %s202
      %p204 = pneg %p56
      %p205 = pneg %p53
      %s206 = smul.u32 64, %s21
      %p207 = scmp.lt.s32.totalorder %s206, 319
      %s208 = scalar_select %p207, %s206, 319
      %p209 = scmp.lt.s32.totalorder %s20, 0
      %s210 = scalar_select %p209, %s20, 0
      %s211 = sadd.s32 %s210, %s208
      %s212 = smul.addr %s211, 4
      %s213 = scalar_lea.vmem %s1, %s212
      %p214 = pneg %p84
      %p215 = pneg %p81
      %p216 = scmp.lt.s32.totalorder %s20, 0
      %s217 = scalar_select %p216, %s20, 0
      %s218 = scalar_lea.vmem %s2, %s217
      %p219 = pneg %p110
      %p220 = pneg %p107
      %p221 = pneg %p138
      %p222 = pneg %p135
      %p223 = scmp.lt.s32.totalorder %s19, 0
      %s224 = scalar_select %p223, %s19, 0
      %p225 = scmp.lt.s32.totalorder %s20, 0
      %s226 = scalar_select %p225, %s20, 0
      %s227 = sadd.s32 %s226, %s224
      %s228 = smul.addr %s227, 8
      %s229 = scalar_lea.vmem %s3, %s228
      %s230 = smul.u32 4, %s21
      %p231 = scmp.lt.s32.totalorder %s19, 0
      %s232 = scalar_select %p231, %s19, 0
      %p233 = scmp.lt.s32.totalorder %s230, 19
      %s234 = scalar_select %p233, %s230, 19
      %s235 = smul.addr %s232, 20
      %s236 = sadd.s32 %s234, %s235
      %s237 = smul.addr %s236, 4
      %s238 = scalar_lea.vmem %s0, %s237
      %s239 = smul.u32 4, %s21
      %s240 = smul.u32 64, %s21
      %p241 = scmp.lt.s32.totalorder %s240, 319
      %s242 = scalar_select %p241, %s240, 319
      %p243 = scmp.lt.s32.totalorder %s20, 0
      %s244 = scalar_select %p243, %s20, 0
      %s245 = sadd.s32 %s244, %s242
      %s246 = smul.addr %s245, 4
      %s247 = scalar_lea.vmem %s1, %s246
      %s248 = smul.u32 64, %s21
      %p249 = scmp.lt.s32.totalorder %s20, 0
      %s250 = scalar_select %p249, %s20, 0
      %s251 = scalar_lea.vmem %s2, %s250
      %p252 = scmp.lt.s32.totalorder %s19, 0
      %s253 = scalar_select %p252, %s19, 0
      %p254 = scmp.lt.s32.totalorder %s20, 0
      %s255 = scalar_select %p254, %s20, 0
      %s256 = sadd.s32 %s255, %s253
      %s257 = smul.addr %s256, 8
      %s258 = scalar_lea.vmem %s3, %s257
      %p260 = scmp.eq.s32.totalorder %s21, 0
      // Predicated region
      $region33: #{customization_net_forward.3} parent=31 // pred_check
        %p261 = pneg %p260
      $region34: #{customization_net_forward.3} parent=31 // pred_check_branch
        %263 = sbr.rel (%p261) target = $region36
      $region35: #{customization_net_forward.3} parent=31 // pred_region
        %264 = vst [vmem:[#allocation2] sm:$0xff] 0.0
      $region36: #{customization_net_forward.3} parent=31 // pred_fallthru
        _
      %v265 = vld [vmem:[#allocation2] sm:$0xff]
      %v266 = vld [vmem:[%s238] sm:$0xff]
      %v267 = vld [vmem:[%s238 + $0x8] sm:$0xff]
      %v268 = vld [vmem:[%s247] sm:$0xf]
      %v269 = vld [vmem:[%s247 + $0x4] sm:$0xf]
      %v270 = vld [vmem:[%s247 + $0x8] sm:$0xf]
      %v271 = vld [vmem:[%s247 + $0xc] sm:$0xf]
      %v272 = vld [vmem:[%s247 + $0x10] sm:$0xf]
      %v273 = vld [vmem:[%s247 + $0x14] sm:$0xf]
      %v274 = vld [vmem:[%s247 + $0x18] sm:$0xf]
      %v275 = vld [vmem:[%s247 + $0x1c] sm:$0xf]
      %v276 = vld [vmem:[%s247 + $0x20] sm:$0xf]
      %v277 = vld [vmem:[%s247 + $0x24] sm:$0xf]
      %v278 = vld [vmem:[%s247 + $0x28] sm:$0xf]
      %v279 = vld [vmem:[%s247 + $0x2c] sm:$0xf]
      %v280 = vld [vmem:[%s247 + $0x30] sm:$0xf]
      %v281 = vld [vmem:[%s247 + $0x34] sm:$0xf]
      %v282 = vld [vmem:[%s247 + $0x38] sm:$0xf]
      %v283 = vld [vmem:[%s247 + $0x3c] sm:$0xf]
      %v284 = vld [vmem:[%s247 + $0x40] sm:$0xf]
      %v285 = vld [vmem:[%s247 + $0x44] sm:$0xf]
      %v286 = vld [vmem:[%s247 + $0x48] sm:$0xf]
      %v287 = vld [vmem:[%s247 + $0x4c] sm:$0xf]
      %v288 = vld [vmem:[%s247 + $0x50] sm:$0xf]
      %v289 = vld [vmem:[%s247 + $0x54] sm:$0xf]
      %v290 = vld [vmem:[%s247 + $0x58] sm:$0xf]
      %v291 = vld [vmem:[%s247 + $0x5c] sm:$0xf]
      %v292 = vld [vmem:[%s247 + $0x60] sm:$0xf]
      %v293 = vld [vmem:[%s247 + $0x64] sm:$0xf]
      %v294 = vld [vmem:[%s247 + $0x68] sm:$0xf]
      %v295 = vld [vmem:[%s247 + $0x6c] sm:$0xf]
      %v296 = vld [vmem:[%s247 + $0x70] sm:$0xf]
      %v297 = vld [vmem:[%s247 + $0x74] sm:$0xf]
      %v298 = vld [vmem:[%s247 + $0x78] sm:$0xf]
      %v299 = vld [vmem:[%s247 + $0x7c] sm:$0xf]
      %v300 = vld [vmem:[%s247 + $0x80] sm:$0xf]
      %v301 = vld [vmem:[%s247 + $0x84] sm:$0xf]
      %v302 = vld [vmem:[%s247 + $0x88] sm:$0xf]
      %v303 = vld [vmem:[%s247 + $0x8c] sm:$0xf]
      %v304 = vld [vmem:[%s247 + $0x90] sm:$0xf]
      %v305 = vld [vmem:[%s247 + $0x94] sm:$0xf]
      %v306 = vld [vmem:[%s247 + $0x98] sm:$0xf]
      %v307 = vld [vmem:[%s247 + $0x9c] sm:$0xf]
      %v308 = vld [vmem:[%s247 + $0xa0] sm:$0xf]
      %v309 = vld [vmem:[%s247 + $0xa4] sm:$0xf]
      %v310 = vld [vmem:[%s247 + $0xa8] sm:$0xf]
      %v311 = vld [vmem:[%s247 + $0xac] sm:$0xf]
      %v312 = vld [vmem:[%s247 + $0xb0] sm:$0xf]
      %v313 = vld [vmem:[%s247 + $0xb4] sm:$0xf]
      %v314 = vld [vmem:[%s247 + $0xb8] sm:$0xf]
      %v315 = vld [vmem:[%s247 + $0xbc] sm:$0xf]
      %v316 = vld [vmem:[%s247 + $0xc0] sm:$0xf]
      %v317 = vld [vmem:[%s247 + $0xc4] sm:$0xf]
      %v318 = vld [vmem:[%s247 + $0xc8] sm:$0xf]
      %v319 = vld [vmem:[%s247 + $0xcc] sm:$0xf]
      %v320 = vld [vmem:[%s247 + $0xd0] sm:$0xf]
      %v321 = vld [vmem:[%s247 + $0xd4] sm:$0xf]
      %v322 = vld [vmem:[%s247 + $0xd8] sm:$0xf]
      %v323 = vld [vmem:[%s247 + $0xdc] sm:$0xf]
      %v324 = vld [vmem:[%s247 + $0xe0] sm:$0xf]
      %v325 = vld [vmem:[%s247 + $0xe4] sm:$0xf]
      %v326 = vld [vmem:[%s247 + $0xe8] sm:$0xf]
      %v327 = vld [vmem:[%s247 + $0xec] sm:$0xf]
      %v328 = vld [vmem:[%s247 + $0xf0] sm:$0xf]
      %v329 = vld [vmem:[%s247 + $0xf4] sm:$0xf]
      %v330 = vld [vmem:[%s247 + $0xf8] sm:$0xf]
      %v331 = vld [vmem:[%s247 + $0xfc] sm:$0xf]
      %v334 = vunpack.c.l.b16 %v266
      %v335 = vunpack.c.h.b16 %v266
      %v336 = vunpack.c.l.b16 %v267
      %v337 = vunpack.c.h.b16 %v267
      %v338 = vpack.c.b16 %v334, %v334
      %v339 = vpack.c.b16 %v335, %v335
      %v340 = vpack.c.b16 %v336, %v336
      %v341 = vpack.c.b16 %v337, %v337
      %v410 = vunpack.c.l.b16 %v268
      %v411 = vunpack.c.l.b16 %v269
      %v412 = vunpack.c.l.b16 %v270
      %v413 = vunpack.c.l.b16 %v271
      %v414 = vunpack.c.l.b16 %v272
      %v415 = vunpack.c.l.b16 %v273
      %v416 = vunpack.c.l.b16 %v274
      %v417 = vunpack.c.l.b16 %v275
      %v418 = vunpack.c.l.b16 %v276
      %v419 = vunpack.c.l.b16 %v277
      %v420 = vunpack.c.l.b16 %v278
      %v421 = vunpack.c.l.b16 %v279
      %v422 = vunpack.c.l.b16 %v280
      %v423 = vunpack.c.l.b16 %v281
      %v424 = vunpack.c.l.b16 %v282
      %v425 = vunpack.c.l.b16 %v283
      %v426 = vunpack.c.l.b16 %v284
      %v427 = vunpack.c.l.b16 %v285
      %v428 = vunpack.c.l.b16 %v286
      %v429 = vunpack.c.l.b16 %v287
      %v430 = vunpack.c.l.b16 %v288
      %v431 = vunpack.c.l.b16 %v289
      %v432 = vunpack.c.l.b16 %v290
      %v433 = vunpack.c.l.b16 %v291
      %v434 = vunpack.c.l.b16 %v292
      %v435 = vunpack.c.l.b16 %v293
      %v436 = vunpack.c.l.b16 %v294
      %v437 = vunpack.c.l.b16 %v295
      %v438 = vunpack.c.l.b16 %v296
      %v439 = vunpack.c.l.b16 %v297
      %v440 = vunpack.c.l.b16 %v298
      %v441 = vunpack.c.l.b16 %v299
      %v442 = vunpack.c.l.b16 %v300
      %v443 = vunpack.c.l.b16 %v301
      %v444 = vunpack.c.l.b16 %v302
      %v445 = vunpack.c.l.b16 %v303
      %v446 = vunpack.c.l.b16 %v304
      %v447 = vunpack.c.l.b16 %v305
      %v448 = vunpack.c.l.b16 %v306
      %v449 = vunpack.c.l.b16 %v307
      %v450 = vunpack.c.l.b16 %v308
      %v451 = vunpack.c.l.b16 %v309
      %v452 = vunpack.c.l.b16 %v310
      %v453 = vunpack.c.l.b16 %v311
      %v454 = vunpack.c.l.b16 %v312
      %v455 = vunpack.c.l.b16 %v313
      %v456 = vunpack.c.l.b16 %v314
      %v457 = vunpack.c.l.b16 %v315
      %v458 = vunpack.c.l.b16 %v316
      %v459 = vunpack.c.l.b16 %v317
      %v460 = vunpack.c.l.b16 %v318
      %v461 = vunpack.c.l.b16 %v319
      %v462 = vunpack.c.l.b16 %v320
      %v463 = vunpack.c.l.b16 %v321
      %v464 = vunpack.c.l.b16 %v322
      %v465 = vunpack.c.l.b16 %v323
      %v466 = vunpack.c.l.b16 %v324
      %v467 = vunpack.c.l.b16 %v325
      %v468 = vunpack.c.l.b16 %v326
      %v469 = vunpack.c.l.b16 %v327
      %v470 = vunpack.c.l.b16 %v328
      %v471 = vunpack.c.l.b16 %v329
      %v472 = vunpack.c.l.b16 %v330
      %v473 = vunpack.c.l.b16 %v331
      %v474 = vpack.c.b16 %v411, %v410
      %v475 = vpack.c.b16 %v413, %v412
      %v476 = vpack.c.b16 %v415, %v414
      %v477 = vpack.c.b16 %v417, %v416
      %v478 = vpack.c.b16 %v419, %v418
      %v479 = vpack.c.b16 %v421, %v420
      %v480 = vpack.c.b16 %v423, %v422
      %v481 = vpack.c.b16 %v425, %v424
      %v482 = vpack.c.b16 %v427, %v426
      %v483 = vpack.c.b16 %v429, %v428
      %v484 = vpack.c.b16 %v431, %v430
      %v485 = vpack.c.b16 %v433, %v432
      %v486 = vpack.c.b16 %v435, %v434
      %v487 = vpack.c.b16 %v437, %v436
      %v488 = vpack.c.b16 %v439, %v438
      %v489 = vpack.c.b16 %v441, %v440
      %v490 = vpack.c.b16 %v443, %v442
      %v491 = vpack.c.b16 %v445, %v444
      %v492 = vpack.c.b16 %v447, %v446
      %v493 = vpack.c.b16 %v449, %v448
      %v494 = vpack.c.b16 %v451, %v450
      %v495 = vpack.c.b16 %v453, %v452
      %v496 = vpack.c.b16 %v455, %v454
      %v497 = vpack.c.b16 %v457, %v456
      %v498 = vpack.c.b16 %v459, %v458
      %v499 = vpack.c.b16 %v461, %v460
      %v500 = vpack.c.b16 %v463, %v462
      %v501 = vpack.c.b16 %v465, %v464
      %v502 = vpack.c.b16 %v467, %v466
      %v503 = vpack.c.b16 %v469, %v468
      %v504 = vpack.c.b16 %v471, %v470
      %v505 = vpack.c.b16 %v473, %v472
      %538 = vmatprep.subr.bf16.mxu0 0
      %539 = vmatpush1.bf16.msra.mxu0 %v474
      %540 = vmatprep.subr.bf16.mxu0 0
      %541 = vmatpush1.bf16.msra.mxu0 %v475
      %542 = vmatprep.subr.bf16.mxu0 0
      %543 = vmatpush1.bf16.msra.mxu0 %v476
      %544 = vmatprep.subr.bf16.mxu0 0
      %545 = vmatpush1.bf16.msra.mxu0 %v477
      %546 = vmatprep.subr.bf16.mxu0 0
      %547 = vmatpush1.bf16.msra.mxu0 %v478
      %548 = vmatprep.subr.bf16.mxu0 0
      %549 = vmatpush1.bf16.msra.mxu0 %v479
      %550 = vmatprep.subr.bf16.mxu0 0
      %551 = vmatpush1.bf16.msra.mxu0 %v480
      %552 = vmatprep.subr.bf16.mxu0 0
      %553 = vmatpush1.bf16.msra.mxu0 %v481
      %554 = vmatprep.subr.bf16.mxu0 0
      %555 = vmatpush1.bf16.msra.mxu0 %v482
      %556 = vmatprep.subr.bf16.mxu0 0
      %557 = vmatpush1.bf16.msra.mxu0 %v483
      %558 = vmatprep.subr.bf16.mxu0 0
      %559 = vmatpush1.bf16.msra.mxu0 %v484
      %560 = vmatprep.subr.bf16.mxu0 0
      %561 = vmatpush1.bf16.msra.mxu0 %v485
      %562 = vmatprep.subr.bf16.mxu0 0
      %563 = vmatpush1.bf16.msra.mxu0 %v486
      %564 = vmatprep.subr.bf16.mxu0 0
      %565 = vmatpush1.bf16.msra.mxu0 %v487
      %566 = vmatprep.subr.bf16.mxu0 0
      %567 = vmatpush1.bf16.msra.mxu0 %v488
      %568 = vmatprep.subr.bf16.mxu0 0
      %569 = vmatpush1.bf16.msra.mxu0 %v489
      %570 = vmatprep.mubr.bf16.mxu0 %v339
      %571 = vmatmul.mubr.bf16.gmra.mrb[0].mxu0 %v338
      %v572 = vpop.f32.mrb[0].mxu0
      %v573 = vadd.f32 0.0, %v572
      %v574 = vpop.f32.mrb[0].mxu0
      %v575 = vpop.f32.mrb[0].mxu0
      %v576 = vpop.f32.mrb[0].mxu0
      %577 = vdwg.mxu0
      %578 = vmatprep.subr.bf16.mxu0 0
      %579 = vmatpush1.bf16.msra.mxu0 %v490
      %580 = vmatprep.subr.bf16.mxu0 0
      %581 = vmatpush1.bf16.msra.mxu0 %v491
      %582 = vmatprep.subr.bf16.mxu0 0
      %583 = vmatpush1.bf16.msra.mxu0 %v492
      %584 = vmatprep.subr.bf16.mxu0 0
      %585 = vmatpush1.bf16.msra.mxu0 %v493
      %586 = vmatprep.subr.bf16.mxu0 0
      %587 = vmatpush1.bf16.msra.mxu0 %v494
      %588 = vmatprep.subr.bf16.mxu0 0
      %589 = vmatpush1.bf16.msra.mxu0 %v495
      %590 = vmatprep.subr.bf16.mxu0 0
      %591 = vmatpush1.bf16.msra.mxu0 %v496
      %592 = vmatprep.subr.bf16.mxu0 0
      %593 = vmatpush1.bf16.msra.mxu0 %v497
      %594 = vmatprep.subr.bf16.mxu0 0
      %595 = vmatpush1.bf16.msra.mxu0 %v498
      %596 = vmatprep.subr.bf16.mxu0 0
      %597 = vmatpush1.bf16.msra.mxu0 %v499
      %598 = vmatprep.subr.bf16.mxu0 0
      %599 = vmatpush1.bf16.msra.mxu0 %v500
      %600 = vmatprep.subr.bf16.mxu0 0
      %601 = vmatpush1.bf16.msra.mxu0 %v501
      %602 = vmatprep.subr.bf16.mxu0 0
      %603 = vmatpush1.bf16.msra.mxu0 %v502
      %604 = vmatprep.subr.bf16.mxu0 0
      %605 = vmatpush1.bf16.msra.mxu0 %v503
      %606 = vmatprep.subr.bf16.mxu0 0
      %607 = vmatpush1.bf16.msra.mxu0 %v504
      %608 = vmatprep.subr.bf16.mxu0 0
      %609 = vmatpush1.bf16.msra.mxu0 %v505
      %610 = vmatprep.mubr.bf16.mxu0 %v341
      %611 = vmatmul.mubr.bf16.gmra.mrb[0].mxu0 %v340
      %v612 = vpop.f32.mrb[0].mxu0
      %v613 = vadd.f32 %v573, %v612
      %v614 = vpop.f32.mrb[0].mxu0
      %v615 = vpop.f32.mrb[0].mxu0
      %v616 = vpop.f32.mrb[0].mxu0
      %617 = vdwg.mxu0
      %v618 = vadd.f32 %v265, %v613
      %619 = vst [vmem:[#allocation2] sm:$0xff] %v618
      %p620 = scmp.eq.s32.totalorder %s21, 4
      // Predicated region
      $region37: #{customization_net_forward.3} parent=31 // pred_check
        %p621 = pneg %p620
      $region38: #{customization_net_forward.3} parent=31 // pred_check_branch
        %623 = sbr.rel (%p621) target = $region40
      $region39: #{customization_net_forward.3} parent=31 // pred_region
        %v624 = vld [vmem:[#allocation2] sm:$0xff]
        %v625 = vld [vmem:[%s251] sm:$0x1]
        %v627 = vlaneseq
        %v628 = vshrl.u32 %v627, 7
        %v629 = vsub.s32 0, %v628
        %v630 = vrot.slane %v625, %v629
        %v632 = vadd.f32 %v624, %v630
        %633 = vst [vmem:[%s258] sm:$0xff] %v632
      $region40: #{customization_net_forward.3} parent=31 // pred_fallthru
        _
      %p634 = scmp.lt.s32.totalorder %s19, 0
      %s635 = scalar_select %p634, %s19, 0
      %p636 = scmp.lt.s32.totalorder %s20, 0
      %s637 = scalar_select %p636, %s20, 0
      %s638 = sadd.s32 %s637, %s635
      %s639 = smul.addr %s638, 8
      %s640 = scalar_lea.vmem %s3, %s639
      // Predicated region
      $region41: #{customization_net_forward.3} parent=31 // pred_check
        %p641 = pneg %p135
      $region42: #{customization_net_forward.3} parent=31 // pred_check_branch
        %643 = sbr.rel (%p641) target = $region44
      $region43: #{customization_net_forward.3} parent=31 // pred_region
        _
      $region44: #{customization_net_forward.3} parent=31 // pred_fallthru
        _
      // Predicated region
      $region45: #{customization_net_forward.3} parent=31 // pred_check
        %p644 = pneg %p135
      $region46: #{customization_net_forward.3} parent=31 // pred_check_branch
        %646 = sbr.rel (%p644) target = $region48
      $region47: #{customization_net_forward.3} parent=31 // pred_region
        %p647 = scmp.lt.s32.totalorder %s19, 0
        %s648 = scalar_select %p647, %s19, 0
        %p649 = scmp.lt.s32.totalorder %s20, 0
        %s650 = scalar_select %p649, %s20, 0
        %s651 = sadd.s32 %s650, %s648
        %s652 = smul.addr %s651, 8
        %s653 = scalar_lea.vmem %s3, %s652
      $region48: #{customization_net_forward.3} parent=31 // pred_fallthru
        _
    $region32: #{customization_net_forward.3} parent=5 // pred_fallthru
      _
    %p654 = scmp.le.s32.totalorder 2, %s9
    // Predicated region
    $region49: #{customization_net_forward.3} parent=5 // pred_check
      %p655 = pneg %p654
    $region50: #{customization_net_forward.3} parent=5 // pred_check_branch
      %657 = sbr.rel (%p655) target = $region52
    $region51: #{customization_net_forward.3} parent=5 // pred_region
      %s658 = ssub.s32 %s9, 2
    $region52: #{customization_net_forward.3} parent=5 // pred_fallthru
      _
  $region6: #{customization_net_forward.3} parent=0 // loop_footer
    %s13 = sadd.s32 1, %s9
  $region7: #{customization_net_forward.3} parent=0 // loop_footer_branch
    %8 = sbr.rel target = $region3
  $region8: #{customization_net_forward.3} parent=0 // loop_exit
    _

// kernel: customization_net_forward.2
$region0: #{customization_net_forward.2}
  #allocation0 [shape = 'u32[]', space=smem, size = 0x4, offset = 0x4, fixed_abs, tag = 'smem constant byte address 0x4 - core index']
  #allocation1 [shape = 'u32[144,128]{1,0:T(1,128)}', space=vmem, size = 0x12000, scoped, tag = 'internal scratch']
  %s0 = inlined_call_operand.vmem [shape: bf16[2,324,4], index: 0, kind: input, shape index: {}]
  %s1 = inlined_call_operand.vmem [shape: bf16[9,4,8], index: 1, kind: input, shape index: {}]
  %s2 = inlined_call_operand.vmem [shape: f32[1,8], index: 2, kind: input, shape index: {}]
  %s3 = inlined_call_operand.vmem [shape: bf16[2,286,8], index: 3, kind: output, shape index: {}]
  %s4 = sld [smem:[#allocation0]]
  $region45: #{customization_net_forward.2} parent=0
    _
  %s6 = ssub.s32 1, %s4
  %s7 = scalar_select 0, %s6, %s4
  loop: start=0, step=1, limit=4
  $region2: #{customization_net_forward.2} parent=0 // loop_pre_header
    _
  $region3: #{customization_net_forward.2} parent=0 // loop_header
    %s9 = sphi 0, %s13
    %p10 = scmp.ge.s32.totalorder %s9, 4
    %s19 = sphi 0, %s21
    %s22 = sphi 0, %s19
    %s23 = sphi 0, %s22
    %s39 = sphi 0, %s23
    %s43 = sphi 0, %s43
    %s45 = sphi 0, %s43
    %s46 = sphi 0, %s45
    %s60 = sphi 0, %s46
    %s64 = sphi 0, %s64
    %s66 = sphi 0, %s64
    %s67 = sphi 0, %s66
    %s81 = sphi 0, %s67
    %s87 = sphi 0, %s89
    %s90 = sphi 0, %s87
    %s91 = sphi 0, %s90
    %s107 = sphi 0, %s91
  $region4: #{customization_net_forward.2} parent=0 // loop_header_branch
    %12 = sbr.rel (%p10) target = $region8
  $region5: #{customization_net_forward.2} parent=0 // loop_body
    %s14 = ssub.s32 %s9, 1
    %s15 = ssub.s32 %s9, 2
    %s16 = sadd.s32 %s9, 1
    %s17 = ssub.s32 %s9, %s16
    %p18 = scmp.eq.s32.totalorder %s17, 0
    %s20 = sadd.s32 %s19, 1
    %s21 = scalar_select %p18, %s19, %s20
    %p24 = pneg %p18
    %p25 = scmp.eq.s32.totalorder %s9, 1
    %p26 = por %p24, %p25
    %p27 = scmp.ne.s32.totalorder %s19, %s22
    %p28 = scmp.eq.s32.totalorder %s9, 0
    %p29 = por %p27, %p28
    %p30 = scmp.ne.s32.totalorder %s19, %s22
    %p31 = scmp.eq.s32.totalorder %s14, 1
    %p32 = por %p30, %p31
    %p33 = scmp.ne.s32.totalorder %s22, %s23
    %p34 = scmp.eq.s32.totalorder %s14, 0
    %p35 = por %p33, %p34
    %p36 = scmp.ne.s32.totalorder %s22, %s23
    %p37 = scmp.eq.s32.totalorder %s15, 1
    %p38 = por %p36, %p37
    %p40 = scmp.ne.s32.totalorder %s23, %s39
    %p41 = scmp.eq.s32.totalorder %s15, 0
    %p42 = por %p40, %p41
    %s44 = sadd.s32 %s43, 1
    %p47 = scmp.eq.s32.totalorder %s9, 1
    %p48 = scmp.ne.s32.totalorder %s43, %s45
    %p49 = scmp.eq.s32.totalorder %s9, 0
    %p50 = por %p48, %p49
    %p51 = scmp.ne.s32.totalorder %s43, %s45
    %p52 = scmp.eq.s32.totalorder %s14, 1
    %p53 = por %p51, %p52
    %p54 = scmp.ne.s32.totalorder %s45, %s46
    %p55 = scmp.eq.s32.totalorder %s14, 0
    %p56 = por %p54, %p55
    %p57 = scmp.ne.s32.totalorder %s45, %s46
    %p58 = scmp.eq.s32.totalorder %s15, 1
    %p59 = por %p57, %p58
    %p61 = scmp.ne.s32.totalorder %s46, %s60
    %p62 = scmp.eq.s32.totalorder %s15, 0
    %p63 = por %p61, %p62
    %s65 = sadd.s32 %s64, 1
    %p68 = scmp.eq.s32.totalorder %s9, 1
    %p69 = scmp.ne.s32.totalorder %s64, %s66
    %p70 = scmp.eq.s32.totalorder %s9, 0
    %p71 = por %p69, %p70
    %p72 = scmp.ne.s32.totalorder %s64, %s66
    %p73 = scmp.eq.s32.totalorder %s14, 1
    %p74 = por %p72, %p73
    %p75 = scmp.ne.s32.totalorder %s66, %s67
    %p76 = scmp.eq.s32.totalorder %s14, 0
    %p77 = por %p75, %p76
    %p78 = scmp.ne.s32.totalorder %s66, %s67
    %p79 = scmp.eq.s32.totalorder %s15, 1
    %p80 = por %p78, %p79
    %p82 = scmp.ne.s32.totalorder %s67, %s81
    %p83 = scmp.eq.s32.totalorder %s15, 0
    %p84 = por %p82, %p83
    %s85 = ssub.s32 %s9, %s16
    %p86 = scmp.eq.s32.totalorder %s85, 0
    %s88 = sadd.s32 %s87, 1
    %s89 = scalar_select %p86, %s87, %s88
    %p92 = pneg %p86
    %p93 = scmp.eq.s32.totalorder %s9, 1
    %p94 = por %p92, %p93
    %p95 = scmp.ne.s32.totalorder %s87, %s90
    %p96 = scmp.eq.s32.totalorder %s9, 0
    %p97 = por %p95, %p96
    %p98 = scmp.ne.s32.totalorder %s87, %s90
    %p99 = scmp.eq.s32.totalorder %s14, 1
    %p100 = por %p98, %p99
    %p101 = scmp.ne.s32.totalorder %s90, %s91
    %p102 = scmp.eq.s32.totalorder %s14, 0
    %p103 = por %p101, %p102
    %p104 = scmp.ne.s32.totalorder %s90, %s91
    %p105 = scmp.eq.s32.totalorder %s15, 1
    %p106 = por %p104, %p105
    %p108 = scmp.ne.s32.totalorder %s91, %s107
    %p109 = scmp.eq.s32.totalorder %s15, 0
    %p110 = por %p108, %p109
    %p111 = scmp.le.s32.totalorder 1, %s9
    %p112 = scmp.lt.s32.totalorder %s9, 3
    %p113 = pnand %p111, %p112
    %p114 = pneg %p113
    // Predicated region
    $region9: #{customization_net_forward.2} parent=5 // pred_check
      _
    $region10: #{customization_net_forward.2} parent=5 // pred_check_branch
      %116 = sbr.rel (%p113) target = $region12
    $region11: #{customization_net_forward.2} parent=5 // pred_region
      %s117 = ssub.s32 %s9, 1
      // Predicated region
      $region13: #{customization_net_forward.2} parent=11 // pred_check
        %p118 = pneg %p56
      $region14: #{customization_net_forward.2} parent=11 // pred_check_branch
        %120 = sbr.rel (%p118) target = $region16
      $region15: #{customization_net_forward.2} parent=11 // pred_region
        _
      $region16: #{customization_net_forward.2} parent=11 // pred_fallthru
        _
      // Predicated region
      $region17: #{customization_net_forward.2} parent=11 // pred_check
        %p121 = pneg %p77
      $region18: #{customization_net_forward.2} parent=11 // pred_check_branch
        %123 = sbr.rel (%p121) target = $region20
      $region19: #{customization_net_forward.2} parent=11 // pred_region
        _
      $region20: #{customization_net_forward.2} parent=11 // pred_fallthru
        _
    $region12: #{customization_net_forward.2} parent=5 // pred_fallthru
      _
    %p124 = scmp.lt.s32.totalorder %s9, 2
    // Predicated region
    $region21: #{customization_net_forward.2} parent=5 // pred_check
      %p125 = pneg %p124
    $region22: #{customization_net_forward.2} parent=5 // pred_check_branch
      %127 = sbr.rel (%p125) target = $region24
    $region23: #{customization_net_forward.2} parent=5 // pred_region
      // Predicated region
      $region25: #{customization_net_forward.2} parent=23 // pred_check
        %p128 = pneg %p29
      $region26: #{customization_net_forward.2} parent=23 // pred_check_branch
        %130 = sbr.rel (%p128) target = $region28
      $region27: #{customization_net_forward.2} parent=23 // pred_region
        %p131 = scmp.lt.s32.totalorder %s9, 1
        %s132 = scalar_select %p131, %s9, 1
        %s133 = smul.addr %s132, 41
        %s134 = smul.addr %s133, 4
        %s135 = scalar_lea.vmem %s0, %s134
      $region28: #{customization_net_forward.2} parent=23 // pred_fallthru
        _
    $region24: #{customization_net_forward.2} parent=5 // pred_fallthru
      _
    %p136 = scmp.le.s32.totalorder 1, %s9
    %p137 = scmp.lt.s32.totalorder %s9, 3
    %p138 = pnand %p136, %p137
    %p139 = pneg %p138
    // Predicated region
    $region29: #{customization_net_forward.2} parent=5 // pred_check
      _
    $region30: #{customization_net_forward.2} parent=5 // pred_check_branch
      %141 = sbr.rel (%p138) target = $region32
    $region31: #{customization_net_forward.2} parent=5 // pred_region
      %s142 = ssub.s32 %s9, 1
      %p143 = scmp.lt.s32.totalorder %s14, 1
      %s144 = scalar_select %p143, %s14, 1
      %s145 = smul.addr %s144, 41
      %s146 = smul.addr %s145, 4
      %s147 = scalar_lea.vmem %s0, %s146
      %p148 = pneg %p35
      %p149 = pneg %p32
      %p150 = pneg %p56
      %p151 = pneg %p53
      %p152 = pneg %p77
      %p153 = pneg %p74
      %p154 = pneg %p103
      %p155 = pneg %p100
      %p156 = scmp.lt.s32.totalorder %s14, 1
      %s157 = scalar_select %p156, %s14, 1
      %s158 = smul.addr %s157, 36
      %s159 = smul.addr %s158, 4
      %s160 = scalar_lea.vmem %s3, %s159
      %p161 = scmp.lt.s32.totalorder %s14, 1
      %s162 = scalar_select %p161, %s14, 1
      %s163 = smul.addr %s162, 41
      %s164 = smul.addr %s163, 4
      %s165 = scalar_lea.vmem %s0, %s164
      %p166 = scmp.lt.s32.totalorder %s14, 1
      %s167 = scalar_select %p166, %s14, 1
      %s168 = smul.addr %s167, 36
      %s169 = smul.addr %s168, 4
      %s170 = scalar_lea.vmem %s3, %s169
      %v172 = vld [vmem:[%s165] sm:$0xf]
      %v173 = vld [vmem:[%s165 + $0x4] sm:$0xf]
      %v174 = vld [vmem:[%s165 + $0x8] sm:$0xf]
      %v175 = vld [vmem:[%s165 + $0xc] sm:$0xf]
      %v176 = vld [vmem:[%s165 + $0x10] sm:$0xf]
      %v177 = vld [vmem:[%s165 + $0x14] sm:$0xf]
      %v178 = vld [vmem:[%s165 + $0x18] sm:$0xf]
      %v179 = vld [vmem:[%s165 + $0x1c] sm:$0xf]
      %v180 = vld [vmem:[%s165 + $0x20] sm:$0xf]
      %v181 = vld [vmem:[%s165 + $0x24] sm:$0xf]
      %v182 = vld [vmem:[%s165 + $0x28] sm:$0xf]
      %v183 = vld [vmem:[%s165 + $0x2c] sm:$0xf]
      %v184 = vld [vmem:[%s165 + $0x30] sm:$0xf]
      %v185 = vld [vmem:[%s165 + $0x34] sm:$0xf]
      %v186 = vld [vmem:[%s165 + $0x38] sm:$0xf]
      %v187 = vld [vmem:[%s165 + $0x3c] sm:$0xf]
      %v188 = vld [vmem:[%s165 + $0x40] sm:$0xf]
      %v189 = vld [vmem:[%s165 + $0x44] sm:$0xf]
      %v190 = vld [vmem:[%s165 + $0x48] sm:$0xf]
      %v191 = vld [vmem:[%s165 + $0x4c] sm:$0xf]
      %v192 = vld [vmem:[%s165 + $0x50] sm:$0xf]
      %v193 = vld [vmem:[%s165 + $0x54] sm:$0xf]
      %v194 = vld [vmem:[%s165 + $0x58] sm:$0xf]
      %v195 = vld [vmem:[%s165 + $0x5c] sm:$0xf]
      %v196 = vld [vmem:[%s165 + $0x60] sm:$0xf]
      %v197 = vld [vmem:[%s165 + $0x64] sm:$0xf]
      %v198 = vld [vmem:[%s165 + $0x68] sm:$0xf]
      %v199 = vld [vmem:[%s165 + $0x6c] sm:$0xf]
      %v200 = vld [vmem:[%s165 + $0x70] sm:$0xf]
      %v201 = vld [vmem:[%s165 + $0x74] sm:$0xf]
      %v202 = vld [vmem:[%s165 + $0x78] sm:$0xf]
      %v203 = vld [vmem:[%s165 + $0x7c] sm:$0xf]
      %v204 = vld [vmem:[%s165 + $0x80] sm:$0xf]
      %v205 = vld [vmem:[%s165 + $0x84] sm:$0xf]
      %v206 = vld [vmem:[%s165 + $0x88] sm:$0xf]
      %v207 = vld [vmem:[%s165 + $0x8c] sm:$0x7]
      %v208 = vld [vmem:[%s1] sm:$0x3]
      %v209 = vld [vmem:[%s165 + $0x8c] sm:$0xf]
      %s210 = scalar_lea.vmem %s1, 2
      %v211 = vld [vmem:[%s210] sm:$0x3]
      %v248 = vunpack.c.l.b16 %v172
      %v249 = vunpack.c.l.b16 %v173
      %v250 = vunpack.c.l.b16 %v174
      %v251 = vunpack.c.l.b16 %v175
      %v252 = vunpack.c.l.b16 %v176
      %v253 = vunpack.c.l.b16 %v177
      %v254 = vunpack.c.l.b16 %v178
      %v255 = vunpack.c.l.b16 %v179
      %v256 = vunpack.c.l.b16 %v180
      %v257 = vunpack.c.l.b16 %v181
      %v258 = vunpack.c.l.b16 %v182
      %v259 = vunpack.c.l.b16 %v183
      %v260 = vunpack.c.l.b16 %v184
      %v261 = vunpack.c.l.b16 %v185
      %v262 = vunpack.c.l.b16 %v186
      %v263 = vunpack.c.l.b16 %v187
      %v264 = vunpack.c.l.b16 %v188
      %v265 = vunpack.c.l.b16 %v189
      %v266 = vunpack.c.l.b16 %v190
      %v267 = vunpack.c.l.b16 %v191
      %v268 = vunpack.c.l.b16 %v192
      %v269 = vunpack.c.l.b16 %v193
      %v270 = vunpack.c.l.b16 %v194
      %v271 = vunpack.c.l.b16 %v195
      %v272 = vunpack.c.l.b16 %v196
      %v273 = vunpack.c.l.b16 %v197
      %v274 = vunpack.c.l.b16 %v198
      %v275 = vunpack.c.l.b16 %v199
      %v276 = vunpack.c.l.b16 %v200
      %v277 = vunpack.c.l.b16 %v201
      %v278 = vunpack.c.l.b16 %v202
      %v279 = vunpack.c.l.b16 %v203
      %v280 = vunpack.c.l.b16 %v204
      %v281 = vunpack.c.l.b16 %v205
      %v282 = vunpack.c.l.b16 %v206
      %v283 = vunpack.c.l.b16 %v209
      %v284 = vpack.c.b16 %v249, %v248
      %v285 = vpack.c.b16 %v251, %v250
      %v286 = vpack.c.b16 %v253, %v252
      %v287 = vpack.c.b16 %v255, %v254
      %v288 = vpack.c.b16 %v257, %v256
      %v289 = vpack.c.b16 %v259, %v258
      %v290 = vpack.c.b16 %v261, %v260
      %v291 = vpack.c.b16 %v263, %v262
      %v292 = vpack.c.b16 %v265, %v264
      %v293 = vpack.c.b16 %v267, %v266
      %v294 = vpack.c.b16 %v269, %v268
      %v295 = vpack.c.b16 %v271, %v270
      %v296 = vpack.c.b16 %v273, %v272
      %v297 = vpack.c.b16 %v275, %v274
      %v298 = vpack.c.b16 %v277, %v276
      %v299 = vpack.c.b16 %v279, %v278
      %v300 = vpack.c.b16 %v281, %v280
      %v301 = vpack.c.b16 %v283, %v282
      %vm302 = vsmask.f32 7424
      %v304 = vshrl.u32 %v284, 16
      %v306 = vshll.u32 %v284, 16
      %v308 = vrot.slane %v306, 1
      %v309 = vor.u32 %v304, %v308
      %v311 = vshll.u32 %v285, 16
      %v313 = vrot.slane %v311, 1
      %v314 = vsel %vm302, %v309, %v313
      %v315 = vshrl.u32 %v285, 16
      %v317 = vor.u32 %v315, %v313
      %v319 = vshll.u32 %v286, 16
      %v321 = vrot.slane %v319, 1
      %v322 = vsel %vm302, %v317, %v321
      %v323 = vshrl.u32 %v286, 16
      %v325 = vor.u32 %v323, %v321
      %v327 = vshll.u32 %v287, 16
      %v329 = vrot.slane %v327, 1
      %v330 = vsel %vm302, %v325, %v329
      %v331 = vshrl.u32 %v287, 16
      %v333 = vor.u32 %v331, %v329
      %v335 = vshll.u32 %v288, 16
      %v337 = vrot.slane %v335, 1
      %v338 = vsel %vm302, %v333, %v337
      %v339 = vshrl.u32 %v288, 16
      %v341 = vor.u32 %v339, %v337
      %v343 = vshll.u32 %v289, 16
      %v345 = vrot.slane %v343, 1
      %v346 = vsel %vm302, %v341, %v345
      %v347 = vshrl.u32 %v289, 16
      %v349 = vor.u32 %v347, %v345
      %v351 = vshll.u32 %v290, 16
      %v353 = vrot.slane %v351, 1
      %v354 = vsel %vm302, %v349, %v353
      %v355 = vshrl.u32 %v290, 16
      %v357 = vor.u32 %v355, %v353
      %v359 = vshll.u32 %v291, 16
      %v361 = vrot.slane %v359, 1
      %v362 = vsel %vm302, %v357, %v361
      %v363 = vshrl.u32 %v291, 16
      %v365 = vor.u32 %v363, %v361
      %v367 = vshll.u32 %v292, 16
      %v369 = vrot.slane %v367, 1
      %v370 = vsel %vm302, %v365, %v369
      %v371 = vshrl.u32 %v292, 16
      %v373 = vor.u32 %v371, %v369
      %v375 = vshll.u32 %v293, 16
      %v377 = vrot.slane %v375, 1
      %v378 = vsel %vm302, %v373, %v377
      %v379 = vshrl.u32 %v293, 16
      %v381 = vor.u32 %v379, %v377
      %v383 = vshll.u32 %v294, 16
      %v385 = vrot.slane %v383, 1
      %v386 = vsel %vm302, %v381, %v385
      %v387 = vshrl.u32 %v294, 16
      %v389 = vor.u32 %v387, %v385
      %v391 = vshll.u32 %v295, 16
      %v393 = vrot.slane %v391, 1
      %v394 = vsel %vm302, %v389, %v393
      %v395 = vshrl.u32 %v295, 16
      %v397 = vor.u32 %v395, %v393
      %v399 = vshll.u32 %v296, 16
      %v401 = vrot.slane %v399, 1
      %v402 = vsel %vm302, %v397, %v401
      %v403 = vshrl.u32 %v296, 16
      %v405 = vor.u32 %v403, %v401
      %v407 = vshll.u32 %v297, 16
      %v409 = vrot.slane %v407, 1
      %v410 = vsel %vm302, %v405, %v409
      %v411 = vshrl.u32 %v297, 16
      %v413 = vor.u32 %v411, %v409
      %v415 = vshll.u32 %v298, 16
      %v417 = vrot.slane %v415, 1
      %v418 = vsel %vm302, %v413, %v417
      %v419 = vshrl.u32 %v298, 16
      %v421 = vor.u32 %v419, %v417
      %v423 = vshll.u32 %v299, 16
      %v425 = vrot.slane %v423, 1
      %v426 = vsel %vm302, %v421, %v425
      %v427 = vshrl.u32 %v299, 16
      %v429 = vor.u32 %v427, %v425
      %v431 = vshll.u32 %v300, 16
      %v433 = vrot.slane %v431, 1
      %v434 = vsel %vm302, %v429, %v433
      %v435 = vshrl.u32 %v300, 16
      %v437 = vor.u32 %v435, %v433
      %v439 = vshll.u32 %v301, 16
      %v441 = vrot.slane %v439, 1
      %v442 = vsel %vm302, %v437, %v441
      %v443 = vshrl.u32 %v301, 16
      %v445 = vor.u32 %v443, %v441
      %vm446 = vcmask 31744
      %v448 = vsel %vm446, %v314, 0
      %v451 = vsel %vm446, %v322, 0
      %v454 = vsel %vm446, %v330, 0
      %v457 = vsel %vm446, %v338, 0
      %v460 = vsel %vm446, %v346, 0
      %v463 = vsel %vm446, %v354, 0
      %v466 = vsel %vm446, %v362, 0
      %v469 = vsel %vm446, %v370, 0
      %v472 = vsel %vm446, %v378, 0
      %v475 = vsel %vm446, %v386, 0
      %v478 = vsel %vm446, %v394, 0
      %v481 = vsel %vm446, %v402, 0
      %v484 = vsel %vm446, %v410, 0
      %v487 = vsel %vm446, %v418, 0
      %v490 = vsel %vm446, %v426, 0
      %v493 = vsel %vm446, %v434, 0
      %v496 = vsel %vm446, %v442, 0
      %v499 = vsel %vm446, %v445, 0
      %vm501 = vcmask 1041408
      %v503 = vsel %vm501, %v211, 0
      %505 = vmatprep.subr.bf16.mxu0 0
      %506 = vmatpush1.bf16.msra.mxu0 %v503
      %507 = vmatprep.subr.bf16.mxu0 0
      %508 = vmatpush1.bf16.msra.mxu0 0
      %509 = vmatprep.subr.bf16.mxu0 0
      %510 = vmatpush1.bf16.msra.mxu0 0
      %511 = vmatprep.subr.bf16.mxu0 0
      %512 = vmatpush1.bf16.msra.mxu0 0
      %513 = vmatprep.subr.bf16.mxu0 0
      %514 = vmatpush1.bf16.msra.mxu0 0
      %515 = vmatprep.subr.bf16.mxu0 0
      %516 = vmatpush1.bf16.msra.mxu0 0
      %517 = vmatprep.subr.bf16.mxu0 0
      %518 = vmatpush1.bf16.msra.mxu0 0
      %519 = vmatprep.subr.bf16.mxu0 0
      %520 = vmatpush1.bf16.msra.mxu0 0
      %521 = vmatprep.subr.bf16.mxu0 0
      %522 = vmatpush1.bf16.msra.mxu0 0
      %523 = vmatprep.subr.bf16.mxu0 0
      %524 = vmatpush1.bf16.msra.mxu0 0
      %525 = vmatprep.subr.bf16.mxu0 0
      %526 = vmatpush1.bf16.msra.mxu0 0
      %527 = vmatprep.subr.bf16.mxu0 0
      %528 = vmatpush1.bf16.msra.mxu0 0
      %529 = vmatprep.subr.bf16.mxu0 0
      %530 = vmatpush1.bf16.msra.mxu0 0
      %531 = vmatprep.subr.bf16.mxu0 0
      %532 = vmatpush1.bf16.msra.mxu0 0
      %533 = vmatprep.subr.bf16.mxu0 0
      %534 = vmatpush1.bf16.msra.mxu0 0
      %535 = vmatprep.subr.bf16.mxu0 0
      %536 = vmatpush1.bf16.msra.mxu0 0
      %537 = vmatprep.mubr.bf16.mxu0 0
      %538 = vmatmul.mubr.bf16.gmra.mrb[0].mxu0 %v448
      %v539 = vpop.f32.mrb[0].mxu0
      %v540 = vadd.f32 0.0, %v539
      %v541 = vpop.f32.mrb[0].mxu0
      %v542 = vpop.f32.mrb[0].mxu0
      %v543 = vadd.f32 0.0, %v542
      %v544 = vpop.f32.mrb[0].mxu0
      %545 = vmatprep.mubr.bf16.mxu0 0
      %546 = vmatmul.mubr.bf16.gmra.mrb[0].mxu0 %v451
      %v547 = vpop.f32.mrb[0].mxu0
      %v548 = vadd.f32 0.0, %v547
      %v549 = vpop.f32.mrb[0].mxu0
      %v550 = vpop.f32.mrb[0].mxu0
      %v551 = vadd.f32 0.0, %v550
      %v552 = vpop.f32.mrb[0].mxu0
      %553 = vmatprep.mubr.bf16.mxu0 0
      %554 = vmatmul.mubr.bf16.gmra.mrb[0].mxu0 %v454
      %v555 = vpop.f32.mrb[0].mxu0
      %v556 = vadd.f32 0.0, %v555
      %v557 = vpop.f32.mrb[0].mxu0
      %v558 = vpop.f32.mrb[0].mxu0
      %v559 = vadd.f32 0.0, %v558
      %v560 = vpop.f32.mrb[0].mxu0
      %561 = vmatprep.mubr.bf16.mxu0 0
      %562 = vmatmul.mubr.bf16.gmra.mrb[0].mxu0 %v457
      %v563 = vpop.f32.mrb[0].mxu0
      %v564 = vadd.f32 0.0, %v563
      %v565 = vpop.f32.mrb[0].mxu0
      %v566 = vpop.f32.mrb[0].mxu0
      %v567 = vadd.f32 0.0, %v566
      %v568 = vpop.f32.mrb[0].mxu0
      %569 = vmatprep.mubr.bf16.mxu0 0
      %570 = vmatmul.mubr.bf16.gmra.mrb[0].mxu0 %v460
      %v571 = vpop.f32.mrb[0].mxu0
      %v572 = vadd.f32 0.0, %v571
      %v573 = vpop.f32.mrb[0].mxu0
      %v574 = vpop.f32.mrb[0].mxu0
      %v575 = vadd.f32 0.0, %v574
      %v576 = vpop.f32.mrb[0].mxu0
      %577 = vmatprep.mubr.bf16.mxu0 0
      %578 = vmatmul.mubr.bf16.gmra.mrb[0].mxu0 %v463
      %v579 = vpop.f32.mrb[0].mxu0
      %v580 = vadd.f32 0.0, %v579
      %v581 = vpop.f32.mrb[0].mxu0
      %v582 = vpop.f32.mrb[0].mxu0
      %v583 = vadd.f32 0.0, %v582
      %v584 = vpop.f32.mrb[0].mxu0
      %585 = vmatprep.mubr.bf16.mxu0 0
      %586 = vmatmul.mubr.bf16.gmra.mrb[0].mxu0 %v466
      %v587 = vpop.f32.mrb[0].mxu0
      %v588 = vadd.f32 0.0, %v587
      %v589 = vpop.f32.mrb[0].mxu0
      %v590 = vpop.f32.mrb[0].mxu0
      %v591 = vadd.f32 0.0, %v590
      %v592 = vpop.f32.mrb[0].mxu0
      %593 = vmatprep.mubr.bf16.mxu0 0
      %594 = vmatmul.mubr.bf16.gmra.mrb[0].mxu0 %v469
      %v595 = vpop.f32.mrb[0].mxu0
      %v596 = vadd.f32 0.0, %v595
      %v597 = vpop.f32.mrb[0].mxu0
      %v598 = vpop.f32.mrb[0].mxu0
      %v599 = vadd.f32 0.0, %v598
      %v600 = vpop.f32.mrb[0].mxu0
      %601 = vmatprep.mubr.bf16.mxu0 0
      %602 = vmatmul.mubr.bf16.gmra.mrb[0].mxu0 %v472
      %v603 = vpop.f32.mrb[0].mxu0
      %v604 = vadd.f32 0.0, %v603
      %v605 = vpop.f32.mrb[0].mxu0
      %v606 = vpop.f32.mrb[0].mxu0
      %v607 = vadd.f32 0.0, %v606
      %v608 = vpop.f32.mrb[0].mxu0
      %609 = vmatprep.mubr.bf16.mxu0 0
      %610 = vmatmul.mubr.bf16.gmra.mrb[0].mxu0 %v475
      %v611 = vpop.f32.mrb[0].mxu0
      %v612 = vadd.f32 0.0, %v611
      %v613 = vpop.f32.mrb[0].mxu0
      %v614 = vpop.f32.mrb[0].mxu0
      %v615 = vadd.f32 0.0, %v614
      %v616 = vpop.f32.mrb[0].mxu0
      %617 = vmatprep.mubr.bf16.mxu0 0
      %618 = vmatmul.mubr.bf16.gmra.mrb[0].mxu0 %v478
      %v619 = vpop.f32.mrb[0].mxu0
      %v620 = vadd.f32 0.0, %v619
      %v621 = vpop.f32.mrb[0].mxu0
      %v622 = vpop.f32.mrb[0].mxu0
      %v623 = vadd.f32 0.0, %v622
      %v624 = vpop.f32.mrb[0].mxu0
      %625 = vmatprep.mubr.bf16.mxu0 0
      %626 = vmatmul.mubr.bf16.gmra.mrb[0].mxu0 %v481
      %v627 = vpop.f32.mrb[0].mxu0
      %v628 = vadd.f32 0.0, %v627
      %v629 = vpop.f32.mrb[0].mxu0
      %v630 = vpop.f32.mrb[0].mxu0
      %v631 = vadd.f32 0.0, %v630
      %v632 = vpop.f32.mrb[0].mxu0
      %633 = vmatprep.mubr.bf16.mxu0 0
      %634 = vmatmul.mubr.bf16.gmra.mrb[0].mxu0 %v484
      %v635 = vpop.f32.mrb[0].mxu0
      %v636 = vadd.f32 0.0, %v635
      %v637 = vpop.f32.mrb[0].mxu0
      %v638 = vpop.f32.mrb[0].mxu0
      %v639 = vadd.f32 0.0, %v638
      %v640 = vpop.f32.mrb[0].mxu0
      %641 = vmatprep.mubr.bf16.mxu0 0
      %642 = vmatmul.mubr.bf16.gmra.mrb[0].mxu0 %v487
      %v643 = vpop.f32.mrb[0].mxu0
      %v644 = vadd.f32 0.0, %v643
      %v645 = vpop.f32.mrb[0].mxu0
      %v646 = vpop.f32.mrb[0].mxu0
      %v647 = vadd.f32 0.0, %v646
      %v648 = vpop.f32.mrb[0].mxu0
      %649 = vmatprep.mubr.bf16.mxu0 0
      %650 = vmatmul.mubr.bf16.gmra.mrb[0].mxu0 %v490
      %v651 = vpop.f32.mrb[0].mxu0
      %v652 = vadd.f32 0.0, %v651
      %v653 = vpop.f32.mrb[0].mxu0
      %v654 = vpop.f32.mrb[0].mxu0
      %v655 = vadd.f32 0.0, %v654
      %v656 = vpop.f32.mrb[0].mxu0
      %657 = vmatprep.mubr.bf16.mxu0 0
      %658 = vmatmul.mubr.bf16.gmra.mrb[0].mxu0 %v493
      %v659 = vpop.f32.mrb[0].mxu0
      %v660 = vadd.f32 0.0, %v659
      %v661 = vpop.f32.mrb[0].mxu0
      %v662 = vpop.f32.mrb[0].mxu0
      %v663 = vadd.f32 0.0, %v662
      %v664 = vpop.f32.mrb[0].mxu0
      %665 = vmatprep.mubr.bf16.mxu0 0
      %666 = vmatmul.mubr.bf16.gmra.mrb[0].mxu0 %v496
      %v667 = vpop.f32.mrb[0].mxu0
      %v668 = vadd.f32 0.0, %v667
      %v669 = vpop.f32.mrb[0].mxu0
      %v670 = vpop.f32.mrb[0].mxu0
      %v671 = vadd.f32 0.0, %v670
      %v672 = vpop.f32.mrb[0].mxu0
      %673 = vmatprep.mubr.bf16.mxu0 0
      %674 = vmatmul.mubr.bf16.gmra.mrb[0].mxu0 %v499
      %v675 = vpop.f32.mrb[0].mxu0
      %v676 = vadd.f32 0.0, %v675
      %v677 = vpop.f32.mrb[0].mxu0
      %v678 = vpop.f32.mrb[0].mxu0
      %v679 = vadd.f32 0.0, %v678
      %v680 = vpop.f32.mrb[0].mxu0
      %681 = vdwg.mxu0
      %v683 = vunpack.c.l.b16 %v207
      %v684 = vpack.c.b16 %v683, %v282
      %v685 = vsel %vm446, %v284, 0
      %v687 = vsel %vm446, %v285, 0
      %v689 = vsel %vm446, %v286, 0
      %v691 = vsel %vm446, %v287, 0
      %v693 = vsel %vm446, %v288, 0
      %v695 = vsel %vm446, %v289, 0
      %v697 = vsel %vm446, %v290, 0
      %v699 = vsel %vm446, %v291, 0
      %v701 = vsel %vm446, %v292, 0
      %v703 = vsel %vm446, %v293, 0
      %v705 = vsel %vm446, %v294, 0
      %v707 = vsel %vm446, %v295, 0
      %v709 = vsel %vm446, %v296, 0
      %v711 = vsel %vm446, %v297, 0
      %v713 = vsel %vm446, %v298, 0
      %v715 = vsel %vm446, %v299, 0
      %v717 = vsel %vm446, %v300, 0
      %v720 = vsel %vm446, %v684, 0
      %v723 = vsel %vm501, %v208, 0
      %725 = vmatprep.subr.bf16.mxu0 0
      %726 = vmatpush1.bf16.msra.mxu0 %v723
      %727 = vmatprep.subr.bf16.mxu0 0
      %728 = vmatpush1.bf16.msra.mxu0 0
      %729 = vmatprep.subr.bf16.mxu0 0
      %730 = vmatpush1.bf16.msra.mxu0 0
      %731 = vmatprep.subr.bf16.mxu0 0
      %732 = vmatpush1.bf16.msra.mxu0 0
      %733 = vmatprep.subr.bf16.mxu0 0
      %734 = vmatpush1.bf16.msra.mxu0 0
      %735 = vmatprep.subr.bf16.mxu0 0
      %736 = vmatpush1.bf16.msra.mxu0 0
      %737 = vmatprep.subr.bf16.mxu0 0
      %738 = vmatpush1.bf16.msra.mxu0 0
      %739 = vmatprep.subr.bf16.mxu0 0
      %740 = vmatpush1.bf16.msra.mxu0 0
      %741 = vmatprep.subr.bf16.mxu0 0
      %742 = vmatpush1.bf16.msra.mxu0 0
      %743 = vmatprep.subr.bf16.mxu0 0
      %744 = vmatpush1.bf16.msra.mxu0 0
      %745 = vmatprep.subr.bf16.mxu0 0
      %746 = vmatpush1.bf16.msra.mxu0 0
      %747 = vmatprep.subr.bf16.mxu0 0
      %748 = vmatpush1.bf16.msra.mxu0 0
      %749 = vmatprep.subr.bf16.mxu0 0
      %750 = vmatpush1.bf16.msra.mxu0 0
      %751 = vmatprep.subr.bf16.mxu0 0
      %752 = vmatpush1.bf16.msra.mxu0 0
      %753 = vmatprep.subr.bf16.mxu0 0
      %754 = vmatpush1.bf16.msra.mxu0 0
      %755 = vmatprep.subr.bf16.mxu0 0
      %756 = vmatpush1.bf16.msra.mxu0 0
      %757 = vmatprep.mubr.bf16.mxu0 0
      %758 = vmatmul.mubr.bf16.gmra.mrb[0].mxu0 %v685
      %v759 = vpop.f32.mrb[0].mxu0
      %v760 = vadd.f32 %v540, %v759
      %v761 = vpop.f32.mrb[0].mxu0
      %v762 = vpop.f32.mrb[0].mxu0
      %v763 = vadd.f32 %v543, %v762
      %v764 = vpop.f32.mrb[0].mxu0
      %765 = vmatprep.mubr.bf16.mxu0 0
      %766 = vmatmul.mubr.bf16.gmra.mrb[0].mxu0 %v687
      %v767 = vpop.f32.mrb[0].mxu0
      %v768 = vadd.f32 %v548, %v767
      %v769 = vpop.f32.mrb[0].mxu0
      %v770 = vpop.f32.mrb[0].mxu0
      %v771 = vadd.f32 %v551, %v770
      %v772 = vpop.f32.mrb[0].mxu0
      %773 = vmatprep.mubr.bf16.mxu0 0
      %774 = vmatmul.mubr.bf16.gmra.mrb[0].mxu0 %v689
      %v775 = vpop.f32.mrb[0].mxu0
      %v776 = vadd.f32 %v556, %v775
      %v777 = vpop.f32.mrb[0].mxu0
      %v778 = vpop.f32.mrb[0].mxu0
      %v779 = vadd.f32 %v559, %v778
      %v780 = vpop.f32.mrb[0].mxu0
      %781 = vmatprep.mubr.bf16.mxu0 0
      %782 = vmatmul.mubr.bf16.gmra.mrb[0].mxu0 %v691
      %v783 = vpop.f32.mrb[0].mxu0
      %v784 = vadd.f32 %v564, %v783
      %v785 = vpop.f32.mrb[0].mxu0
      %v786 = vpop.f32.mrb[0].mxu0
      %v787 = vadd.f32 %v567, %v786
      %v788 = vpop.f32.mrb[0].mxu0
      %789 = vmatprep.mubr.bf16.mxu0 0
      %790 = vmatmul.mubr.bf16.gmra.mrb[0].mxu0 %v693
      %v791 = vpop.f32.mrb[0].mxu0
      %v792 = vadd.f32 %v572, %v791
      %v793 = vpop.f32.mrb[0].mxu0
      %v794 = vpop.f32.mrb[0].mxu0
      %v795 = vadd.f32 %v575, %v794
      %v796 = vpop.f32.mrb[0].mxu0
      %797 = vmatprep.mubr.bf16.mxu0 0
      %798 = vmatmul.mubr.bf16.gmra.mrb[0].mxu0 %v695
      %v799 = vpop.f32.mrb[0].mxu0
      %v800 = vadd.f32 %v580, %v799
      %v801 = vpop.f32.mrb[0].mxu0
      %v802 = vpop.f32.mrb[0].mxu0
      %v803 = vadd.f32 %v583, %v802
      %v804 = vpop.f32.mrb[0].mxu0
      %805 = vmatprep.mubr.bf16.mxu0 0
      %806 = vmatmul.mubr.bf16.gmra.mrb[0].mxu0 %v697
      %v807 = vpop.f32.mrb[0].mxu0
      %v808 = vadd.f32 %v588, %v807
      %v809 = vpop.f32.mrb[0].mxu0
      %v810 = vpop.f32.mrb[0].mxu0
      %v811 = vadd.f32 %v591, %v810
      %v812 = vpop.f32.mrb[0].mxu0
      %813 = vmatprep.mubr.bf16.mxu0 0
      %814 = vmatmul.mubr.bf16.gmra.mrb[0].mxu0 %v699
      %v815 = vpop.f32.mrb[0].mxu0
      %v816 = vadd.f32 %v596, %v815
      %v817 = vpop.f32.mrb[0].mxu0
      %v818 = vpop.f32.mrb[0].mxu0
      %v819 = vadd.f32 %v599, %v818
      %v820 = vpop.f32.mrb[0].mxu0
      %821 = vmatprep.mubr.bf16.mxu0 0
      %822 = vmatmul.mubr.bf16.gmra.mrb[0].mxu0 %v701
      %v823 = vpop.f32.mrb[0].mxu0
      %v824 = vadd.f32 %v604, %v823
      %v825 = vpop.f32.mrb[0].mxu0
      %v826 = vpop.f32.mrb[0].mxu0
      %v827 = vadd.f32 %v607, %v826
      %v828 = vpop.f32.mrb[0].mxu0
      %829 = vmatprep.mubr.bf16.mxu0 0
      %830 = vmatmul.mubr.bf16.gmra.mrb[0].mxu0 %v703
      %v831 = vpop.f32.mrb[0].mxu0
      %v832 = vadd.f32 %v612, %v831
      %v833 = vpop.f32.mrb[0].mxu0
      %v834 = vpop.f32.mrb[0].mxu0
      %v835 = vadd.f32 %v615, %v834
      %v836 = vpop.f32.mrb[0].mxu0
      %837 = vmatprep.mubr.bf16.mxu0 0
      %838 = vmatmul.mubr.bf16.gmra.mrb[0].mxu0 %v705
      %v839 = vpop.f32.mrb[0].mxu0
      %v840 = vadd.f32 %v620, %v839
      %v841 = vpop.f32.mrb[0].mxu0
      %v842 = vpop.f32.mrb[0].mxu0
      %v843 = vadd.f32 %v623, %v842
      %v844 = vpop.f32.mrb[0].mxu0
      %845 = vmatprep.mubr.bf16.mxu0 0
      %846 = vmatmul.mubr.bf16.gmra.mrb[0].mxu0 %v707
      %v847 = vpop.f32.mrb[0].mxu0
      %v848 = vadd.f32 %v628, %v847
      %v849 = vpop.f32.mrb[0].mxu0
      %v850 = vpop.f32.mrb[0].mxu0
      %v851 = vadd.f32 %v631, %v850
      %v852 = vpop.f32.mrb[0].mxu0
      %853 = vmatprep.mubr.bf16.mxu0 0
      %854 = vmatmul.mubr.bf16.gmra.mrb[0].mxu0 %v709
      %v855 = vpop.f32.mrb[0].mxu0
      %v856 = vadd.f32 %v636, %v855
      %v857 = vpop.f32.mrb[0].mxu0
      %v858 = vpop.f32.mrb[0].mxu0
      %v859 = vadd.f32 %v639, %v858
      %v860 = vpop.f32.mrb[0].mxu0
      %861 = vmatprep.mubr.bf16.mxu0 0
      %862 = vmatmul.mubr.bf16.gmra.mrb[0].mxu0 %v711
      %v863 = vpop.f32.mrb[0].mxu0
      %v864 = vadd.f32 %v644, %v863
      %v865 = vpop.f32.mrb[0].mxu0
      %v866 = vpop.f32.mrb[0].mxu0
      %v867 = vadd.f32 %v647, %v866
      %v868 = vpop.f32.mrb[0].mxu0
      %869 = vmatprep.mubr.bf16.mxu0 0
      %870 = vmatmul.mubr.bf16.gmra.mrb[0].mxu0 %v713
      %v871 = vpop.f32.mrb[0].mxu0
      %v872 = vadd.f32 %v652, %v871
      %v873 = vpop.f32.mrb[0].mxu0
      %v874 = vpop.f32.mrb[0].mxu0
      %v875 = vadd.f32 %v655, %v874
      %v876 = vpop.f32.mrb[0].mxu0
      %877 = vmatprep.mubr.bf16.mxu0 0
      %878 = vmatmul.mubr.bf16.gmra.mrb[0].mxu0 %v715
      %v879 = vpop.f32.mrb[0].mxu0
      %v880 = vadd.f32 %v660, %v879
      %v881 = vpop.f32.mrb[0].mxu0
      %v882 = vpop.f32.mrb[0].mxu0
      %v883 = vadd.f32 %v663, %v882
      %v884 = vpop.f32.mrb[0].mxu0
      %885 = vmatprep.mubr.bf16.mxu0 0
      %886 = vmatmul.mubr.bf16.gmra.mrb[0].mxu0 %v717
      %v887 = vpop.f32.mrb[0].mxu0
      %v888 = vadd.f32 %v668, %v887
      %v889 = vpop.f32.mrb[0].mxu0
      %v890 = vpop.f32.mrb[0].mxu0
      %v891 = vadd.f32 %v671, %v890
      %v892 = vpop.f32.mrb[0].mxu0
      %893 = vmatprep.mubr.bf16.mxu0 0
      %894 = vmatmul.mubr.bf16.gmra.mrb[0].mxu0 %v720
      %v895 = vpop.f32.mrb[0].mxu0
      %v896 = vadd.f32 %v676, %v895
      %v897 = vpop.f32.mrb[0].mxu0
      %v898 = vpop.f32.mrb[0].mxu0
      %v899 = vadd.f32 %v679, %v898
      %v900 = vpop.f32.mrb[0].mxu0
      %901 = vdwg.mxu0
      %v902 = vld [vmem:[%s165] sm:$0xe]
      %s903 = scalar_lea.vmem %s1, 4
      %v904 = vld [vmem:[%s903] sm:$0x3]
      %v906 = vunpack.c.l.b16 %v902
      %v907 = vpack.c.b16 %v249, %v906
      %vm908 = vcmask 1046528
      %v909 = vrot.slane %v907, 1
      %v910 = vrot.slane %v285, 1
      %v911 = vsel %vm908, %v909, %v910
      %v912 = vrot.slane %v286, 1
      %v913 = vsel %vm908, %v910, %v912
      %v914 = vrot.slane %v287, 1
      %v915 = vsel %vm908, %v912, %v914
      %v916 = vrot.slane %v288, 1
      %v917 = vsel %vm908, %v914, %v916
      %v918 = vrot.slane %v289, 1
      %v919 = vsel %vm908, %v916, %v918
      %v920 = vrot.slane %v290, 1
      %v921 = vsel %vm908, %v918, %v920
      %v922 = vrot.slane %v291, 1
      %v923 = vsel %vm908, %v920, %v922
      %v924 = vrot.slane %v292, 1
      %v925 = vsel %vm908, %v922, %v924
      %v926 = vrot.slane %v293, 1
      %v927 = vsel %vm908, %v924, %v926
      %v928 = vrot.slane %v294, 1
      %v929 = vsel %vm908, %v926, %v928
      %v930 = vrot.slane %v295, 1
      %v931 = vsel %vm908, %v928, %v930
      %v932 = vrot.slane %v296, 1
      %v933 = vsel %vm908, %v930, %v932
      %v934 = vrot.slane %v297, 1
      %v935 = vsel %vm908, %v932, %v934
      %v936 = vrot.slane %v298, 1
      %v937 = vsel %vm908, %v934, %v936
      %v938 = vrot.slane %v299, 1
      %v939 = vsel %vm908, %v936, %v938
      %v940 = vrot.slane %v300, 1
      %v941 = vsel %vm908, %v938, %v940
      %v942 = vrot.slane %v301, 1
      %v943 = vsel %vm908, %v940, %v942
      %v945 = vsel %vm446, %v911, 0
      %v948 = vsel %vm446, %v913, 0
      %v951 = vsel %vm446, %v915, 0
      %v954 = vsel %vm446, %v917, 0
      %v957 = vsel %vm446, %v919, 0
      %v960 = vsel %vm446, %v921, 0
      %v963 = vsel %vm446, %v923, 0
      %v966 = vsel %vm446, %v925, 0
      %v969 = vsel %vm446, %v927, 0
      %v972 = vsel %vm446, %v929, 0
      %v975 = vsel %vm446, %v931, 0
      %v978 = vsel %vm446, %v933, 0
      %v981 = vsel %vm446, %v935, 0
      %v984 = vsel %vm446, %v937, 0
      %v987 = vsel %vm446, %v939, 0
      %v990 = vsel %vm446, %v941, 0
      %v993 = vsel %vm446, %v943, 0
      %v996 = vsel %vm446, %v942, 0
      %v999 = vsel %vm501, %v904, 0
      %1001 = vmatprep.subr.bf16.mxu0 0
      %1002 = vmatpush1.bf16.msra.mxu0 %v999
      %1003 = vmatprep.subr.bf16.mxu0 0
      %1004 = vmatpush1.bf16.msra.mxu0 0
      %1005 = vmatprep.subr.bf16.mxu0 0
      %1006 = vmatpush1.bf16.msra.mxu0 0
      %1007 = vmatprep.subr.bf16.mxu0 0
      %1008 = vmatpush1.bf16.msra.mxu0 0
      %1009 = vmatprep.subr.bf16.mxu0 0
      %1010 = vmatpush1.bf16.msra.mxu0 0
      %1011 = vmatprep.subr.bf16.mxu0 0
      %1012 = vmatpush1.bf16.msra.mxu0 0
      %1013 = vmatprep.subr.bf16.mxu0 0
      %1014 = vmatpush1.bf16.msra.mxu0 0
      %1015 = vmatprep.subr.bf16.mxu0 0
      %1016 = vmatpush1.bf16.msra.mxu0 0
      %1017 = vmatprep.subr.bf16.mxu0 0
      %1018 = vmatpush1.bf16.msra.mxu0 0
      %1019 = vmatprep.subr.bf16.mxu0 0
      %1020 = vmatpush1.bf16.msra.mxu0 0
      %1021 = vmatprep.subr.bf16.mxu0 0
      %1022 = vmatpush1.bf16.msra.mxu0 0
      %1023 = vmatprep.subr.bf16.mxu0 0
      %1024 = vmatpush1.bf16.msra.mxu0 0
      %1025 = vmatprep.subr.bf16.mxu0 0
      %1026 = vmatpush1.bf16.msra.mxu0 0
      %1027 = vmatprep.subr.bf16.mxu0 0
      %1028 = vmatpush1.bf16.msra.mxu0 0
      %1029 = vmatprep.subr.bf16.mxu0 0
      %1030 = vmatpush1.bf16.msra.mxu0 0
      %1031 = vmatprep.subr.bf16.mxu0 0
      %1032 = vmatpush1.bf16.msra.mxu0 0
      %1033 = vmatprep.mubr.bf16.mxu0 0
      %1034 = vmatmul.mubr.bf16.gmra.mrb[0].mxu0 %v945
      %v1035 = vpop.f32.mrb[0].mxu0
      %v1036 = vadd.f32 0.0, %v1035
      %v1037 = vpop.f32.mrb[0].mxu0
      %v1038 = vpop.f32.mrb[0].mxu0
      %v1039 = vadd.f32 0.0, %v1038
      %v1040 = vpop.f32.mrb[0].mxu0
      %1041 = vmatprep.mubr.bf16.mxu0 0
      %1042 = vmatmul.mubr.bf16.gmra.mrb[0].mxu0 %v948
      %v1043 = vpop.f32.mrb[0].mxu0
      %v1044 = vadd.f32 0.0, %v1043
      %v1045 = vpop.f32.mrb[0].mxu0
      %v1046 = vpop.f32.mrb[0].mxu0
      %v1047 = vadd.f32 0.0, %v1046
      %v1048 = vpop.f32.mrb[0].mxu0
      %1049 = vmatprep.mubr.bf16.mxu0 0
      %1050 = vmatmul.mubr.bf16.gmra.mrb[0].mxu0 %v951
      %v1051 = vpop.f32.mrb[0].mxu0
      %v1052 = vadd.f32 0.0, %v1051
      %v1053 = vpop.f32.mrb[0].mxu0
      %v1054 = vpop.f32.mrb[0].mxu0
      %v1055 = vadd.f32 0.0, %v1054
      %v1056 = vpop.f32.mrb[0].mxu0
      %1057 = vmatprep.mubr.bf16.mxu0 0
      %1058 = vmatmul.mubr.bf16.gmra.mrb[0].mxu0 %v954
      %v1059 = vpop.f32.mrb[0].mxu0
      %v1060 = vadd.f32 0.0, %v1059
      %v1061 = vpop.f32.mrb[0].mxu0
      %v1062 = vpop.f32.mrb[0].mxu0
      %v1063 = vadd.f32 0.0, %v1062
      %v1064 = vpop.f32.mrb[0].mxu0
      %1065 = vmatprep.mubr.bf16.mxu0 0
      %1066 = vmatmul.mubr.bf16.gmra.mrb[0].mxu0 %v957
      %v1067 = vpop.f32.mrb[0].mxu0
      %v1068 = vadd.f32 0.0, %v1067
      %v1069 = vpop.f32.mrb[0].mxu0
      %v1070 = vpop.f32.mrb[0].mxu0
      %v1071 = vadd.f32 0.0, %v1070
      %v1072 = vpop.f32.mrb[0].mxu0
      %1073 = vmatprep.mubr.bf16.mxu0 0
      %1074 = vmatmul.mubr.bf16.gmra.mrb[0].mxu0 %v960
      %v1075 = vpop.f32.mrb[0].mxu0
      %v1076 = vadd.f32 0.0, %v1075
      %v1077 = vpop.f32.mrb[0].mxu0
      %v1078 = vpop.f32.mrb[0].mxu0
      %v1079 = vadd.f32 0.0, %v1078
      %v1080 = vpop.f32.mrb[0].mxu0
      %1081 = vmatprep.mubr.bf16.mxu0 0
      %1082 = vmatmul.mubr.bf16.gmra.mrb[0].mxu0 %v963
      %v1083 = vpop.f32.mrb[0].mxu0
      %v1084 = vadd.f32 0.0, %v1083
      %v1085 = vpop.f32.mrb[0].mxu0
      %v1086 = vpop.f32.mrb[0].mxu0
      %v1087 = vadd.f32 0.0, %v1086
      %v1088 = vpop.f32.mrb[0].mxu0
      %1089 = vmatprep.mubr.bf16.mxu0 0
      %1090 = vmatmul.mubr.bf16.gmra.mrb[0].mxu0 %v966
      %v1091 = vpop.f32.mrb[0].mxu0
      %v1092 = vadd.f32 0.0, %v1091
      %v1093 = vpop.f32.mrb[0].mxu0
      %v1094 = vpop.f32.mrb[0].mxu0
      %v1095 = vadd.f32 0.0, %v1094
      %v1096 = vpop.f32.mrb[0].mxu0
      %1097 = vmatprep.mubr.bf16.mxu0 0
      %1098 = vmatmul.mubr.bf16.gmra.mrb[0].mxu0 %v969
      %v1099 = vpop.f32.mrb[0].mxu0
      %v1100 = vadd.f32 0.0, %v1099
      %v1101 = vpop.f32.mrb[0].mxu0
      %v1102 = vpop.f32.mrb[0].mxu0
      %v1103 = vadd.f32 0.0, %v1102
      %v1104 = vpop.f32.mrb[0].mxu0
      %1105 = vmatprep.mubr.bf16.mxu0 0
      %1106 = vmatmul.mubr.bf16.gmra.mrb[0].mxu0 %v972
      %v1107 = vpop.f32.mrb[0].mxu0
      %v1108 = vadd.f32 0.0, %v1107
      %v1109 = vpop.f32.mrb[0].mxu0
      %v1110 = vpop.f32.mrb[0].mxu0
      %v1111 = vadd.f32 0.0, %v1110
      %v1112 = vpop.f32.mrb[0].mxu0
      %1113 = vmatprep.mubr.bf16.mxu0 0
      %1114 = vmatmul.mubr.bf16.gmra.mrb[0].mxu0 %v975
      %v1115 = vpop.f32.mrb[0].mxu0
      %v1116 = vadd.f32 0.0, %v1115
      %v1117 = vpop.f32.mrb[0].mxu0
      %v1118 = vpop.f32.mrb[0].mxu0
      %v1119 = vadd.f32 0.0, %v1118
      %v1120 = vpop.f32.mrb[0].mxu0
      %1121 = vmatprep.mubr.bf16.mxu0 0
      %1122 = vmatmul.mubr.bf16.gmra.mrb[0].mxu0 %v978
      %v1123 = vpop.f32.mrb[0].mxu0
      %v1124 = vadd.f32 0.0, %v1123
      %v1125 = vpop.f32.mrb[0].mxu0
      %v1126 = vpop.f32.mrb[0].mxu0
      %v1127 = vadd.f32 0.0, %v1126
      %v1128 = vpop.f32.mrb[0].mxu0
      %1129 = vmatprep.mubr.bf16.mxu0 0
      %1130 = vmatmul.mubr.bf16.gmra.mrb[0].mxu0 %v981
      %v1131 = vpop.f32.mrb[0].mxu0
      %v1132 = vadd.f32 0.0, %v1131
      %v1133 = vpop.f32.mrb[0].mxu0
      %v1134 = vpop.f32.mrb[0].mxu0
      %v1135 = vadd.f32 0.0, %v1134
      %v1136 = vpop.f32.mrb[0].mxu0
      %1137 = vmatprep.mubr.bf16.mxu0 0
      %1138 = vmatmul.mubr.bf16.gmra.mrb[0].mxu0 %v984
      %v1139 = vpop.f32.mrb[0].mxu0
      %v1140 = vadd.f32 0.0, %v1139
      %v1141 = vpop.f32.mrb[0].mxu0
      %v1142 = vpop.f32.mrb[0].mxu0
      %v1143 = vadd.f32 0.0, %v1142
      %v1144 = vpop.f32.mrb[0].mxu0
      %1145 = vmatprep.mubr.bf16.mxu0 0
      %1146 = vmatmul.mubr.bf16.gmra.mrb[0].mxu0 %v987
      %v1147 = vpop.f32.mrb[0].mxu0
      %v1148 = vadd.f32 0.0, %v1147
      %v1149 = vpop.f32.mrb[0].mxu0
      %v1150 = vpop.f32.mrb[0].mxu0
      %v1151 = vadd.f32 0.0, %v1150
      %v1152 = vpop.f32.mrb[0].mxu0
      %1153 = vmatprep.mubr.bf16.mxu0 0
      %1154 = vmatmul.mubr.bf16.gmra.mrb[0].mxu0 %v990
      %v1155 = vpop.f32.mrb[0].mxu0
      %v1156 = vadd.f32 0.0, %v1155
      %v1157 = vpop.f32.mrb[0].mxu0
      %v1158 = vpop.f32.mrb[0].mxu0
      %v1159 = vadd.f32 0.0, %v1158
      %v1160 = vpop.f32.mrb[0].mxu0
      %1161 = vmatprep.mubr.bf16.mxu0 0
      %1162 = vmatmul.mubr.bf16.gmra.mrb[0].mxu0 %v993
      %v1163 = vpop.f32.mrb[0].mxu0
      %v1164 = vadd.f32 0.0, %v1163
      %v1165 = vpop.f32.mrb[0].mxu0
      %v1166 = vpop.f32.mrb[0].mxu0
      %v1167 = vadd.f32 0.0, %v1166
      %v1168 = vpop.f32.mrb[0].mxu0
      %1169 = vmatprep.mubr.bf16.mxu0 0
      %1170 = vmatmul.mubr.bf16.gmra.mrb[0].mxu0 %v996
      %v1171 = vpop.f32.mrb[0].mxu0
      %v1172 = vadd.f32 0.0, %v1171
      %v1173 = vpop.f32.mrb[0].mxu0
      %v1174 = vpop.f32.mrb[0].mxu0
      %v1175 = vadd.f32 0.0, %v1174
      %v1176 = vpop.f32.mrb[0].mxu0
      %1177 = vdwg.mxu0
      %v1178 = vadd.f32 %v760, %v1036
      %v1179 = vadd.f32 %v763, %v1039
      %v1180 = vadd.f32 %v768, %v1044
      %v1181 = vadd.f32 %v771, %v1047
      %v1182 = vadd.f32 %v776, %v1052
      %v1183 = vadd.f32 %v779, %v1055
      %v1184 = vadd.f32 %v784, %v1060
      %v1185 = vadd.f32 %v787, %v1063
      %v1186 = vadd.f32 %v792, %v1068
      %v1187 = vadd.f32 %v795, %v1071
      %v1188 = vadd.f32 %v800, %v1076
      %v1189 = vadd.f32 %v803, %v1079
      %v1190 = vadd.f32 %v808, %v1084
      %v1191 = vadd.f32 %v811, %v1087
      %v1192 = vadd.f32 %v816, %v1092
      %v1193 = vadd.f32 %v819, %v1095
      %v1194 = vadd.f32 %v824, %v1100
      %v1195 = vadd.f32 %v827, %v1103
      %v1196 = vadd.f32 %v832, %v1108
      %v1197 = vadd.f32 %v835, %v1111
      %v1198 = vadd.f32 %v840, %v1116
      %v1199 = vadd.f32 %v843, %v1119
      %v1200 = vadd.f32 %v848, %v1124
      %v1201 = vadd.f32 %v851, %v1127
      %v1202 = vadd.f32 %v856, %v1132
      %v1203 = vadd.f32 %v859, %v1135
      %v1204 = vadd.f32 %v864, %v1140
      %v1205 = vadd.f32 %v867, %v1143
      %v1206 = vadd.f32 %v872, %v1148
      %v1207 = vadd.f32 %v875, %v1151
      %v1208 = vadd.f32 %v880, %v1156
      %v1209 = vadd.f32 %v883, %v1159
      %v1210 = vadd.f32 %v888, %v1164
      %v1211 = vadd.f32 %v891, %v1167
      %v1212 = vadd.f32 %v896, %v1172
      %v1213 = vadd.f32 %v899, %v1175
      %v1214 = vld [vmem:[%s165 + $0x8] sm:$0xe]
      %v1215 = vld [vmem:[%s165 + $0xc] sm:$0xf]
      %v1216 = vld [vmem:[%s165 + $0x10] sm:$0xf]
      %v1217 = vld [vmem:[%s165 + $0x14] sm:$0xf]
      %v1218 = vld [vmem:[%s165 + $0x18] sm:$0xf]
      %v1219 = vld [vmem:[%s165 + $0x1c] sm:$0xf]
      %v1220 = vld [vmem:[%s165 + $0x20] sm:$0xf]
      %v1221 = vld [vmem:[%s165 + $0x24] sm:$0xf]
      %v1222 = vld [vmem:[%s165 + $0x28] sm:$0xf]
      %v1223 = vld [vmem:[%s165 + $0x2c] sm:$0xf]
      %v1224 = vld [vmem:[%s165 + $0x30] sm:$0xf]
      %v1225 = vld [vmem:[%s165 + $0x34] sm:$0xf]
      %v1226 = vld [vmem:[%s165 + $0x38] sm:$0xf]
      %v1227 = vld [vmem:[%s165 + $0x3c] sm:$0xf]
      %v1228 = vld [vmem:[%s165 + $0x40] sm:$0xf]
      %v1229 = vld [vmem:[%s165 + $0x44] sm:$0xf]
      %v1230 = vld [vmem:[%s165 + $0x48] sm:$0xf]
      %v1231 = vld [vmem:[%s165 + $0x4c] sm:$0xf]
      %v1232 = vld [vmem:[%s165 + $0x50] sm:$0xf]
      %v1233 = vld [vmem:[%s165 + $0x54] sm:$0xf]
      %v1234 = vld [vmem:[%s165 + $0x58] sm:$0xf]
      %v1235 = vld [vmem:[%s165 + $0x5c] sm:$0xf]
      %v1236 = vld [vmem:[%s165 + $0x60] sm:$0xf]
      %v1237 = vld [vmem:[%s165 + $0x64] sm:$0xf]
      %v1238 = vld [vmem:[%s165 + $0x68] sm:$0xf]
      %v1239 = vld [vmem:[%s165 + $0x6c] sm:$0xf]
      %v1240 = vld [vmem:[%s165 + $0x70] sm:$0xf]
      %v1241 = vld [vmem:[%s165 + $0x74] sm:$0xf]
      %v1242 = vld [vmem:[%s165 + $0x78] sm:$0xf]
      %v1243 = vld [vmem:[%s165 + $0x7c] sm:$0xf]
      %v1244 = vld [vmem:[%s165 + $0x80] sm:$0xf]
      %v1245 = vld [vmem:[%s165 + $0x84] sm:$0xf]
      %v1246 = vld [vmem:[%s165 + $0x88] sm:$0xf]
      %v1247 = vld [vmem:[%s165 + $0x8c] sm:$0xf]
      %v1248 = vld [vmem:[%s165 + $0x90] sm:$0xf]
      %v1249 = vld [vmem:[%s165 + $0x94] sm:$0xf]
      %s1250 = scalar_lea.vmem %s1, 6
      %v1251 = vld [vmem:[%s1250] sm:$0x3]
      %v1288 = vunpack.c.l.b16 %v1214
      %v1289 = vunpack.c.l.b16 %v1215
      %v1290 = vunpack.c.l.b16 %v1216
      %v1291 = vunpack.c.l.b16 %v1217
      %v1292 = vunpack.c.l.b16 %v1218
      %v1293 = vunpack.c.l.b16 %v1219
      %v1294 = vunpack.c.l.b16 %v1220
      %v1295 = vunpack.c.l.b16 %v1221
      %v1296 = vunpack.c.l.b16 %v1222
      %v1297 = vunpack.c.l.b16 %v1223
      %v1298 = vunpack.c.l.b16 %v1224
      %v1299 = vunpack.c.l.b16 %v1225
      %v1300 = vunpack.c.l.b16 %v1226
      %v1301 = vunpack.c.l.b16 %v1227
      %v1302 = vunpack.c.l.b16 %v1228
      %v1303 = vunpack.c.l.b16 %v1229
      %v1304 = vunpack.c.l.b16 %v1230
      %v1305 = vunpack.c.l.b16 %v1231
      %v1306 = vunpack.c.l.b16 %v1232
      %v1307 = vunpack.c.l.b16 %v1233
      %v1308 = vunpack.c.l.b16 %v1234
      %v1309 = vunpack.c.l.b16 %v1235
      %v1310 = vunpack.c.l.b16 %v1236
      %v1311 = vunpack.c.l.b16 %v1237
      %v1312 = vunpack.c.l.b16 %v1238
      %v1313 = vunpack.c.l.b16 %v1239
      %v1314 = vunpack.c.l.b16 %v1240
      %v1315 = vunpack.c.l.b16 %v1241
      %v1316 = vunpack.c.l.b16 %v1242
      %v1317 = vunpack.c.l.b16 %v1243
      %v1318 = vunpack.c.l.b16 %v1244
      %v1319 = vunpack.c.l.b16 %v1245
      %v1320 = vunpack.c.l.b16 %v1246
      %v1321 = vunpack.c.l.b16 %v1247
      %v1322 = vunpack.c.l.b16 %v1248
      %v1323 = vunpack.c.l.b16 %v1249
      %v1324 = vpack.c.b16 %v1289, %v1288
      %v1325 = vpack.c.b16 %v1291, %v1290
      %v1326 = vpack.c.b16 %v1293, %v1292
      %v1327 = vpack.c.b16 %v1295, %v1294
      %v1328 = vpack.c.b16 %v1297, %v1296
      %v1329 = vpack.c.b16 %v1299, %v1298
      %v1330 = vpack.c.b16 %v1301, %v1300
      %v1331 = vpack.c.b16 %v1303, %v1302
      %v1332 = vpack.c.b16 %v1305, %v1304
      %v1333 = vpack.c.b16 %v1307, %v1306
      %v1334 = vpack.c.b16 %v1309, %v1308
      %v1335 = vpack.c.b16 %v1311, %v1310
      %v1336 = vpack.c.b16 %v1313, %v1312
      %v1337 = vpack.c.b16 %v1315, %v1314
      %v1338 = vpack.c.b16 %v1317, %v1316
      %v1339 = vpack.c.b16 %v1319, %v1318
      %v1340 = vpack.c.b16 %v1321, %v1320
      %v1341 = vpack.c.b16 %v1323, %v1322
      %v1342 = vrot.slane %v1324, 1
      %v1343 = vrot.slane %v1325, 1
      %v1344 = vsel %vm908, %v1342, %v1343
      %v1345 = vrot.slane %v1326, 1
      %v1346 = vsel %vm908, %v1343, %v1345
      %v1347 = vrot.slane %v1327, 1
      %v1348 = vsel %vm908, %v1345, %v1347
      %v1349 = vrot.slane %v1328, 1
      %v1350 = vsel %vm908, %v1347, %v1349
      %v1351 = vrot.slane %v1329, 1
      %v1352 = vsel %vm908, %v1349, %v1351
      %v1353 = vrot.slane %v1330, 1
      %v1354 = vsel %vm908, %v1351, %v1353
      %v1355 = vrot.slane %v1331, 1
      %v1356 = vsel %vm908, %v1353, %v1355
      %v1357 = vrot.slane %v1332, 1
      %v1358 = vsel %vm908, %v1355, %v1357
      %v1359 = vrot.slane %v1333, 1
      %v1360 = vsel %vm908, %v1357, %v1359
      %v1361 = vrot.slane %v1334, 1
      %v1362 = vsel %vm908, %v1359, %v1361
      %v1363 = vrot.slane %v1335, 1
      %v1364 = vsel %vm908, %v1361, %v1363
      %v1365 = vrot.slane %v1336, 1
      %v1366 = vsel %vm908, %v1363, %v1365
      %v1367 = vrot.slane %v1337, 1
      %v1368 = vsel %vm908, %v1365, %v1367
      %v1369 = vrot.slane %v1338, 1
      %v1370 = vsel %vm908, %v1367, %v1369
      %v1371 = vrot.slane %v1339, 1
      %v1372 = vsel %vm908, %v1369, %v1371
      %v1373 = vrot.slane %v1340, 1
      %v1374 = vsel %vm908, %v1371, %v1373
      %v1375 = vrot.slane %v1341, 1
      %v1376 = vsel %vm908, %v1373, %v1375
      %v1378 = vsel %vm446, %v1344, 0
      %v1381 = vsel %vm446, %v1346, 0
      %v1384 = vsel %vm446, %v1348, 0
      %v1387 = vsel %vm446, %v1350, 0
      %v1390 = vsel %vm446, %v1352, 0
      %v1393 = vsel %vm446, %v1354, 0
      %v1396 = vsel %vm446, %v1356, 0
      %v1399 = vsel %vm446, %v1358, 0
      %v1402 = vsel %vm446, %v1360, 0
      %v1405 = vsel %vm446, %v1362, 0
      %v1408 = vsel %vm446, %v1364, 0
      %v1411 = vsel %vm446, %v1366, 0
      %v1414 = vsel %vm446, %v1368, 0
      %v1417 = vsel %vm446, %v1370, 0
      %v1420 = vsel %vm446, %v1372, 0
      %v1423 = vsel %vm446, %v1374, 0
      %v1426 = vsel %vm446, %v1376, 0
      %v1429 = vsel %vm446, %v1375, 0
      %v1432 = vsel %vm501, %v1251, 0
      %1434 = vmatprep.subr.bf16.mxu0 0
      %1435 = vmatpush1.bf16.msra.mxu0 %v1432
      %1436 = vmatprep.subr.bf16.mxu0 0
      %1437 = vmatpush1.bf16.msra.mxu0 0
      %1438 = vmatprep.subr.bf16.mxu0 0
      %1439 = vmatpush1.bf16.msra.mxu0 0
      %1440 = vmatprep.subr.bf16.mxu0 0
      %1441 = vmatpush1.bf16.msra.mxu0 0
      %1442 = vmatprep.subr.bf16.mxu0 0
      %1443 = vmatpush1.bf16.msra.mxu0 0
      %1444 = vmatprep.subr.bf16.mxu0 0
      %1445 = vmatpush1.bf16.msra.mxu0 0
      %1446 = vmatprep.subr.bf16.mxu0 0
      %1447 = vmatpush1.bf16.msra.mxu0 0
      %1448 = vmatprep.subr.bf16.mxu0 0
      %1449 = vmatpush1.bf16.msra.mxu0 0
      %1450 = vmatprep.subr.bf16.mxu0 0
      %1451 = vmatpush1.bf16.msra.mxu0 0
      %1452 = vmatprep.subr.bf16.mxu0 0
      %1453 = vmatpush1.bf16.msra.mxu0 0
      %1454 = vmatprep.subr.bf16.mxu0 0
      %1455 = vmatpush1.bf16.msra.mxu0 0
      %1456 = vmatprep.subr.bf16.mxu0 0
      %1457 = vmatpush1.bf16.msra.mxu0 0
      %1458 = vmatprep.subr.bf16.mxu0 0
      %1459 = vmatpush1.bf16.msra.mxu0 0
      %1460 = vmatprep.subr.bf16.mxu0 0
      %1461 = vmatpush1.bf16.msra.mxu0 0
      %1462 = vmatprep.subr.bf16.mxu0 0
      %1463 = vmatpush1.bf16.msra.mxu0 0
      %1464 = vmatprep.subr.bf16.mxu0 0
      %1465 = vmatpush1.bf16.msra.mxu0 0
      %1466 = vmatprep.mubr.bf16.mxu0 0
      %1467 = vmatmul.mubr.bf16.gmra.mrb[0].mxu0 %v1378
      %v1468 = vpop.f32.mrb[0].mxu0
      %v1469 = vadd.f32 0.0, %v1468
      %v1470 = vpop.f32.mrb[0].mxu0
      %v1471 = vpop.f32.mrb[0].mxu0
      %v1472 = vadd.f32 0.0, %v1471
      %v1473 = vpop.f32.mrb[0].mxu0
      %1474 = vmatprep.mubr.bf16.mxu0 0
      %1475 = vmatmul.mubr.bf16.gmra.mrb[0].mxu0 %v1381
      %v1476 = vpop.f32.mrb[0].mxu0
      %v1477 = vadd.f32 0.0, %v1476
      %v1478 = vpop.f32.mrb[0].mxu0
      %v1479 = vpop.f32.mrb[0].mxu0
      %v1480 = vadd.f32 0.0, %v1479
      %v1481 = vpop.f32.mrb[0].mxu0
      %1482 = vmatprep.mubr.bf16.mxu0 0
      %1483 = vmatmul.mubr.bf16.gmra.mrb[0].mxu0 %v1384
      %v1484 = vpop.f32.mrb[0].mxu0
      %v1485 = vadd.f32 0.0, %v1484
      %v1486 = vpop.f32.mrb[0].mxu0
      %v1487 = vpop.f32.mrb[0].mxu0
      %v1488 = vadd.f32 0.0, %v1487
      %v1489 = vpop.f32.mrb[0].mxu0
      %1490 = vmatprep.mubr.bf16.mxu0 0
      %1491 = vmatmul.mubr.bf16.gmra.mrb[0].mxu0 %v1387
      %v1492 = vpop.f32.mrb[0].mxu0
      %v1493 = vadd.f32 0.0, %v1492
      %v1494 = vpop.f32.mrb[0].mxu0
      %v1495 = vpop.f32.mrb[0].mxu0
      %v1496 = vadd.f32 0.0, %v1495
      %v1497 = vpop.f32.mrb[0].mxu0
      %1498 = vmatprep.mubr.bf16.mxu0 0
      %1499 = vmatmul.mubr.bf16.gmra.mrb[0].mxu0 %v1390
      %v1500 = vpop.f32.mrb[0].mxu0
      %v1501 = vadd.f32 0.0, %v1500
      %v1502 = vpop.f32.mrb[0].mxu0
      %v1503 = vpop.f32.mrb[0].mxu0
      %v1504 = vadd.f32 0.0, %v1503
      %v1505 = vpop.f32.mrb[0].mxu0
      %1506 = vmatprep.mubr.bf16.mxu0 0
      %1507 = vmatmul.mubr.bf16.gmra.mrb[0].mxu0 %v1393
      %v1508 = vpop.f32.mrb[0].mxu0
      %v1509 = vadd.f32 0.0, %v1508
      %v1510 = vpop.f32.mrb[0].mxu0
      %v1511 = vpop.f32.mrb[0].mxu0
      %v1512 = vadd.f32 0.0, %v1511
      %v1513 = vpop.f32.mrb[0].mxu0
      %1514 = vmatprep.mubr.bf16.mxu0 0
      %1515 = vmatmul.mubr.bf16.gmra.mrb[0].mxu0 %v1396
      %v1516 = vpop.f32.mrb[0].mxu0
      %v1517 = vadd.f32 0.0, %v1516
      %v1518 = vpop.f32.mrb[0].mxu0
      %v1519 = vpop.f32.mrb[0].mxu0
      %v1520 = vadd.f32 0.0, %v1519
      %v1521 = vpop.f32.mrb[0].mxu0
      %1522 = vmatprep.mubr.bf16.mxu0 0
      %1523 = vmatmul.mubr.bf16.gmra.mrb[0].mxu0 %v1399
      %v1524 = vpop.f32.mrb[0].mxu0
      %v1525 = vadd.f32 0.0, %v1524
      %v1526 = vpop.f32.mrb[0].mxu0
      %v1527 = vpop.f32.mrb[0].mxu0
      %v1528 = vadd.f32 0.0, %v1527
      %v1529 = vpop.f32.mrb[0].mxu0
      %1530 = vmatprep.mubr.bf16.mxu0 0
      %1531 = vmatmul.mubr.bf16.gmra.mrb[0].mxu0 %v1402
      %v1532 = vpop.f32.mrb[0].mxu0
      %v1533 = vadd.f32 0.0, %v1532
      %v1534 = vpop.f32.mrb[0].mxu0
      %v1535 = vpop.f32.mrb[0].mxu0
      %v1536 = vadd.f32 0.0, %v1535
      %v1537 = vpop.f32.mrb[0].mxu0
      %1538 = vmatprep.mubr.bf16.mxu0 0
      %1539 = vmatmul.mubr.bf16.gmra.mrb[0].mxu0 %v1405
      %v1540 = vpop.f32.mrb[0].mxu0
      %v1541 = vadd.f32 0.0, %v1540
      %v1542 = vpop.f32.mrb[0].mxu0
      %v1543 = vpop.f32.mrb[0].mxu0
      %v1544 = vadd.f32 0.0, %v1543
      %v1545 = vpop.f32.mrb[0].mxu0
      %1546 = vmatprep.mubr.bf16.mxu0 0
      %1547 = vmatmul.mubr.bf16.gmra.mrb[0].mxu0 %v1408
      %v1548 = vpop.f32.mrb[0].mxu0
      %v1549 = vadd.f32 0.0, %v1548
      %v1550 = vpop.f32.mrb[0].mxu0
      %v1551 = vpop.f32.mrb[0].mxu0
      %v1552 = vadd.f32 0.0, %v1551
      %v1553 = vpop.f32.mrb[0].mxu0
      %1554 = vmatprep.mubr.bf16.mxu0 0
      %1555 = vmatmul.mubr.bf16.gmra.mrb[0].mxu0 %v1411
      %v1556 = vpop.f32.mrb[0].mxu0
      %v1557 = vadd.f32 0.0, %v1556
      %v1558 = vpop.f32.mrb[0].mxu0
      %v1559 = vpop.f32.mrb[0].mxu0
      %v1560 = vadd.f32 0.0, %v1559
      %v1561 = vpop.f32.mrb[0].mxu0
      %1562 = vmatprep.mubr.bf16.mxu0 0
      %1563 = vmatmul.mubr.bf16.gmra.mrb[0].mxu0 %v1414
      %v1564 = vpop.f32.mrb[0].mxu0
      %v1565 = vadd.f32 0.0, %v1564
      %v1566 = vpop.f32.mrb[0].mxu0
      %v1567 = vpop.f32.mrb[0].mxu0
      %v1568 = vadd.f32 0.0, %v1567
      %v1569 = vpop.f32.mrb[0].mxu0
      %1570 = vmatprep.mubr.bf16.mxu0 0
      %1571 = vmatmul.mubr.bf16.gmra.mrb[0].mxu0 %v1417
      %v1572 = vpop.f32.mrb[0].mxu0
      %v1573 = vadd.f32 0.0, %v1572
      %v1574 = vpop.f32.mrb[0].mxu0
      %v1575 = vpop.f32.mrb[0].mxu0
      %v1576 = vadd.f32 0.0, %v1575
      %v1577 = vpop.f32.mrb[0].mxu0
      %1578 = vmatprep.mubr.bf16.mxu0 0
      %1579 = vmatmul.mubr.bf16.gmra.mrb[0].mxu0 %v1420
      %v1580 = vpop.f32.mrb[0].mxu0
      %v1581 = vadd.f32 0.0, %v1580
      %v1582 = vpop.f32.mrb[0].mxu0
      %v1583 = vpop.f32.mrb[0].mxu0
      %v1584 = vadd.f32 0.0, %v1583
      %v1585 = vpop.f32.mrb[0].mxu0
      %1586 = vmatprep.mubr.bf16.mxu0 0
      %1587 = vmatmul.mubr.bf16.gmra.mrb[0].mxu0 %v1423
      %v1588 = vpop.f32.mrb[0].mxu0
      %v1589 = vadd.f32 0.0, %v1588
      %v1590 = vpop.f32.mrb[0].mxu0
      %v1591 = vpop.f32.mrb[0].mxu0
      %v1592 = vadd.f32 0.0, %v1591
      %v1593 = vpop.f32.mrb[0].mxu0
      %1594 = vmatprep.mubr.bf16.mxu0 0
      %1595 = vmatmul.mubr.bf16.gmra.mrb[0].mxu0 %v1426
      %v1596 = vpop.f32.mrb[0].mxu0
      %v1597 = vadd.f32 0.0, %v1596
      %v1598 = vpop.f32.mrb[0].mxu0
      %v1599 = vpop.f32.mrb[0].mxu0
      %v1600 = vadd.f32 0.0, %v1599
      %v1601 = vpop.f32.mrb[0].mxu0
      %1602 = vmatprep.mubr.bf16.mxu0 0
      %1603 = vmatmul.mubr.bf16.gmra.mrb[0].mxu0 %v1429
      %v1604 = vpop.f32.mrb[0].mxu0
      %v1605 = vadd.f32 0.0, %v1604
      %v1606 = vpop.f32.mrb[0].mxu0
      %v1607 = vpop.f32.mrb[0].mxu0
      %v1608 = vadd.f32 0.0, %v1607
      %v1609 = vpop.f32.mrb[0].mxu0
      %1610 = vdwg.mxu0
      %v1611 = vadd.f32 %v1178, %v1469
      %v1612 = vadd.f32 %v1179, %v1472
      %v1613 = vadd.f32 %v1180, %v1477
      %v1614 = vadd.f32 %v1181, %v1480
      %v1615 = vadd.f32 %v1182, %v1485
      %v1616 = vadd.f32 %v1183, %v1488
      %v1617 = vadd.f32 %v1184, %v1493
      %v1618 = vadd.f32 %v1185, %v1496
      %v1619 = vadd.f32 %v1186, %v1501
      %v1620 = vadd.f32 %v1187, %v1504
      %v1621 = vadd.f32 %v1188, %v1509
      %v1622 = vadd.f32 %v1189, %v1512
      %v1623 = vadd.f32 %v1190, %v1517
      %v1624 = vadd.f32 %v1191, %v1520
      %v1625 = vadd.f32 %v1192, %v1525
      %v1626 = vadd.f32 %v1193, %v1528
      %v1627 = vadd.f32 %v1194, %v1533
      %v1628 = vadd.f32 %v1195, %v1536
      %v1629 = vadd.f32 %v1196, %v1541
      %v1630 = vadd.f32 %v1197, %v1544
      %v1631 = vadd.f32 %v1198, %v1549
      %v1632 = vadd.f32 %v1199, %v1552
      %v1633 = vadd.f32 %v1200, %v1557
      %v1634 = vadd.f32 %v1201, %v1560
      %v1635 = vadd.f32 %v1202, %v1565
      %v1636 = vadd.f32 %v1203, %v1568
      %v1637 = vadd.f32 %v1204, %v1573
      %v1638 = vadd.f32 %v1205, %v1576
      %v1639 = vadd.f32 %v1206, %v1581
      %v1640 = vadd.f32 %v1207, %v1584
      %v1641 = vadd.f32 %v1208, %v1589
      %v1642 = vadd.f32 %v1209, %v1592
      %v1643 = vadd.f32 %v1210, %v1597
      %v1644 = vadd.f32 %v1211, %v1600
      %v1645 = vadd.f32 %v1212, %v1605
      %v1646 = vadd.f32 %v1213, %v1608
      %v1647 = vld [vmem:[%s165 + $0x8] sm:$0xe]
      %v1648 = vld [vmem:[%s165 + $0xc] sm:$0xf]
      %v1649 = vld [vmem:[%s165 + $0x10] sm:$0xf]
      %v1650 = vld [vmem:[%s165 + $0x14] sm:$0xf]
      %v1651 = vld [vmem:[%s165 + $0x18] sm:$0xf]
      %v1652 = vld [vmem:[%s165 + $0x1c] sm:$0xf]
      %v1653 = vld [vmem:[%s165 + $0x20] sm:$0xf]
      %v1654 = vld [vmem:[%s165 + $0x24] sm:$0xf]
      %v1655 = vld [vmem:[%s165 + $0x28] sm:$0xf]
      %v1656 = vld [vmem:[%s165 + $0x2c] sm:$0xf]
      %v1657 = vld [vmem:[%s165 + $0x30] sm:$0xf]
      %v1658 = vld [vmem:[%s165 + $0x34] sm:$0xf]
      %v1659 = vld [vmem:[%s165 + $0x38] sm:$0xf]
      %v1660 = vld [vmem:[%s165 + $0x3c] sm:$0xf]
      %v1661 = vld [vmem:[%s165 + $0x40] sm:$0xf]
      %v1662 = vld [vmem:[%s165 + $0x44] sm:$0xf]
      %v1663 = vld [vmem:[%s165 + $0x48] sm:$0xf]
      %v1664 = vld [vmem:[%s165 + $0x4c] sm:$0xf]
      %v1665 = vld [vmem:[%s165 + $0x50] sm:$0xf]
      %v1666 = vld [vmem:[%s165 + $0x54] sm:$0xf]
      %v1667 = vld [vmem:[%s165 + $0x58] sm:$0xf]
      %v1668 = vld [vmem:[%s165 + $0x5c] sm:$0xf]
      %v1669 = vld [vmem:[%s165 + $0x60] sm:$0xf]
      %v1670 = vld [vmem:[%s165 + $0x64] sm:$0xf]
      %v1671 = vld [vmem:[%s165 + $0x68] sm:$0xf]
      %v1672 = vld [vmem:[%s165 + $0x6c] sm:$0xf]
      %v1673 = vld [vmem:[%s165 + $0x70] sm:$0xf]
      %v1674 = vld [vmem:[%s165 + $0x74] sm:$0xf]
      %v1675 = vld [vmem:[%s165 + $0x78] sm:$0xf]
      %v1676 = vld [vmem:[%s165 + $0x7c] sm:$0xf]
      %v1677 = vld [vmem:[%s165 + $0x80] sm:$0xf]
      %v1678 = vld [vmem:[%s165 + $0x84] sm:$0xf]
      %v1679 = vld [vmem:[%s165 + $0x88] sm:$0xf]
      %v1680 = vld [vmem:[%s165 + $0x8c] sm:$0xf]
      %v1681 = vld [vmem:[%s165 + $0x90] sm:$0xf]
      %v1682 = vld [vmem:[%s165 + $0x94] sm:$0xf]
      %v1683 = vld [vmem:[%s165 + $0x98] sm:$0x1]
      %s1684 = scalar_lea.vmem %s1, 8
      %v1685 = vld [vmem:[%s1684] sm:$0x3]
      %v1723 = vunpack.c.l.b16 %v1647
      %v1724 = vunpack.c.l.b16 %v1648
      %v1725 = vunpack.c.l.b16 %v1649
      %v1726 = vunpack.c.l.b16 %v1650
      %v1727 = vunpack.c.l.b16 %v1651
      %v1728 = vunpack.c.l.b16 %v1652
      %v1729 = vunpack.c.l.b16 %v1653
      %v1730 = vunpack.c.l.b16 %v1654
      %v1731 = vunpack.c.l.b16 %v1655
      %v1732 = vunpack.c.l.b16 %v1656
      %v1733 = vunpack.c.l.b16 %v1657
      %v1734 = vunpack.c.l.b16 %v1658
      %v1735 = vunpack.c.l.b16 %v1659
      %v1736 = vunpack.c.l.b16 %v1660
      %v1737 = vunpack.c.l.b16 %v1661
      %v1738 = vunpack.c.l.b16 %v1662
      %v1739 = vunpack.c.l.b16 %v1663
      %v1740 = vunpack.c.l.b16 %v1664
      %v1741 = vunpack.c.l.b16 %v1665
      %v1742 = vunpack.c.l.b16 %v1666
      %v1743 = vunpack.c.l.b16 %v1667
      %v1744 = vunpack.c.l.b16 %v1668
      %v1745 = vunpack.c.l.b16 %v1669
      %v1746 = vunpack.c.l.b16 %v1670
      %v1747 = vunpack.c.l.b16 %v1671
      %v1748 = vunpack.c.l.b16 %v1672
      %v1749 = vunpack.c.l.b16 %v1673
      %v1750 = vunpack.c.l.b16 %v1674
      %v1751 = vunpack.c.l.b16 %v1675
      %v1752 = vunpack.c.l.b16 %v1676
      %v1753 = vunpack.c.l.b16 %v1677
      %v1754 = vunpack.c.l.b16 %v1678
      %v1755 = vunpack.c.l.b16 %v1679
      %v1756 = vunpack.c.l.b16 %v1680
      %v1757 = vunpack.c.l.b16 %v1681
      %v1758 = vunpack.c.l.b16 %v1682
      %v1759 = vunpack.c.l.b16 %v1683
      %v1760 = vpack.c.b16 %v1724, %v1723
      %v1761 = vpack.c.b16 %v1726, %v1725
      %v1762 = vpack.c.b16 %v1728, %v1727
      %v1763 = vpack.c.b16 %v1730, %v1729
      %v1764 = vpack.c.b16 %v1732, %v1731
      %v1765 = vpack.c.b16 %v1734, %v1733
      %v1766 = vpack.c.b16 %v1736, %v1735
      %v1767 = vpack.c.b16 %v1738, %v1737
      %v1768 = vpack.c.b16 %v1740, %v1739
      %v1769 = vpack.c.b16 %v1742, %v1741
      %v1770 = vpack.c.b16 %v1744, %v1743
      %v1771 = vpack.c.b16 %v1746, %v1745
      %v1772 = vpack.c.b16 %v1748, %v1747
      %v1773 = vpack.c.b16 %v1750, %v1749
      %v1774 = vpack.c.b16 %v1752, %v1751
      %v1775 = vpack.c.b16 %v1754, %v1753
      %v1776 = vpack.c.b16 %v1756, %v1755
      %v1777 = vpack.c.b16 %v1758, %v1757
      %v1778 = vpack.c.b16 %v1759, %v1759
      %vm1779 = vsmask.f32 6400
      %v1781 = vshrl.u32 %v1760, 16
      %v1783 = vrot.slane %v1781, 1
      %v1784 = vshll.u32 %v1760, 16
      %v1786 = vrot.slane %v1784, 2
      %v1787 = vor.u32 %v1783, %v1786
      %v1789 = vshrl.u32 %v1761, 16
      %v1791 = vrot.slane %v1789, 1
      %v1792 = vshll.u32 %v1761, 16
      %v1794 = vrot.slane %v1792, 2
      %v1795 = vor.u32 %v1791, %v1794
      %v1796 = vsel %vm1779, %v1787, %v1795
      %v1798 = vshrl.u32 %v1762, 16
      %v1800 = vrot.slane %v1798, 1
      %v1801 = vshll.u32 %v1762, 16
      %v1803 = vrot.slane %v1801, 2
      %v1804 = vor.u32 %v1800, %v1803
      %v1805 = vsel %vm1779, %v1795, %v1804
      %v1807 = vshrl.u32 %v1763, 16
      %v1809 = vrot.slane %v1807, 1
      %v1810 = vshll.u32 %v1763, 16
      %v1812 = vrot.slane %v1810, 2
      %v1813 = vor.u32 %v1809, %v1812
      %v1814 = vsel %vm1779, %v1804, %v1813
      %v1816 = vshrl.u32 %v1764, 16
      %v1818 = vrot.slane %v1816, 1
      %v1819 = vshll.u32 %v1764, 16
      %v1821 = vrot.slane %v1819, 2
      %v1822 = vor.u32 %v1818, %v1821
      %v1823 = vsel %vm1779, %v1813, %v1822
      %v1825 = vshrl.u32 %v1765, 16
      %v1827 = vrot.slane %v1825, 1
      %v1828 = vshll.u32 %v1765, 16
      %v1830 = vrot.slane %v1828, 2
      %v1831 = vor.u32 %v1827, %v1830
      %v1832 = vsel %vm1779, %v1822, %v1831
      %v1834 = vshrl.u32 %v1766, 16
      %v1836 = vrot.slane %v1834, 1
      %v1837 = vshll.u32 %v1766, 16
      %v1839 = vrot.slane %v1837, 2
      %v1840 = vor.u32 %v1836, %v1839
      %v1841 = vsel %vm1779, %v1831, %v1840
      %v1843 = vshrl.u32 %v1767, 16
      %v1845 = vrot.slane %v1843, 1
      %v1846 = vshll.u32 %v1767, 16
      %v1848 = vrot.slane %v1846, 2
      %v1849 = vor.u32 %v1845, %v1848
      %v1850 = vsel %vm1779, %v1840, %v1849
      %v1852 = vshrl.u32 %v1768, 16
      %v1854 = vrot.slane %v1852, 1
      %v1855 = vshll.u32 %v1768, 16
      %v1857 = vrot.slane %v1855, 2
      %v1858 = vor.u32 %v1854, %v1857
      %v1859 = vsel %vm1779, %v1849, %v1858
      %v1861 = vshrl.u32 %v1769, 16
      %v1863 = vrot.slane %v1861, 1
      %v1864 = vshll.u32 %v1769, 16
      %v1866 = vrot.slane %v1864, 2
      %v1867 = vor.u32 %v1863, %v1866
      %v1868 = vsel %vm1779, %v1858, %v1867
      %v1870 = vshrl.u32 %v1770, 16
      %v1872 = vrot.slane %v1870, 1
      %v1873 = vshll.u32 %v1770, 16
      %v1875 = vrot.slane %v1873, 2
      %v1876 = vor.u32 %v1872, %v1875
      %v1877 = vsel %vm1779, %v1867, %v1876
      %v1879 = vshrl.u32 %v1771, 16
      %v1881 = vrot.slane %v1879, 1
      %v1882 = vshll.u32 %v1771, 16
      %v1884 = vrot.slane %v1882, 2
      %v1885 = vor.u32 %v1881, %v1884
      %v1886 = vsel %vm1779, %v1876, %v1885
      %v1888 = vshrl.u32 %v1772, 16
      %v1890 = vrot.slane %v1888, 1
      %v1891 = vshll.u32 %v1772, 16
      %v1893 = vrot.slane %v1891, 2
      %v1894 = vor.u32 %v1890, %v1893
      %v1895 = vsel %vm1779, %v1885, %v1894
      %v1897 = vshrl.u32 %v1773, 16
      %v1899 = vrot.slane %v1897, 1
      %v1900 = vshll.u32 %v1773, 16
      %v1902 = vrot.slane %v1900, 2
      %v1903 = vor.u32 %v1899, %v1902
      %v1904 = vsel %vm1779, %v1894, %v1903
      %v1906 = vshrl.u32 %v1774, 16
      %v1908 = vrot.slane %v1906, 1
      %v1909 = vshll.u32 %v1774, 16
      %v1911 = vrot.slane %v1909, 2
      %v1912 = vor.u32 %v1908, %v1911
      %v1913 = vsel %vm1779, %v1903, %v1912
      %v1915 = vshrl.u32 %v1775, 16
      %v1917 = vrot.slane %v1915, 1
      %v1918 = vshll.u32 %v1775, 16
      %v1920 = vrot.slane %v1918, 2
      %v1921 = vor.u32 %v1917, %v1920
      %v1922 = vsel %vm1779, %v1912, %v1921
      %v1924 = vshrl.u32 %v1776, 16
      %v1926 = vrot.slane %v1924, 1
      %v1927 = vshll.u32 %v1776, 16
      %v1929 = vrot.slane %v1927, 2
      %v1930 = vor.u32 %v1926, %v1929
      %v1931 = vsel %vm1779, %v1921, %v1930
      %v1933 = vshrl.u32 %v1777, 16
      %v1935 = vrot.slane %v1933, 1
      %v1936 = vshll.u32 %v1777, 16
      %v1938 = vrot.slane %v1936, 2
      %v1939 = vor.u32 %v1935, %v1938
      %v1940 = vsel %vm1779, %v1930, %v1939
      %v1942 = vshll.u32 %v1778, 16
      %v1944 = vrot.slane %v1942, 2
      %v1945 = vsel %vm1779, %v1939, %v1944
      %v1947 = vsel %vm446, %v1796, 0
      %v1950 = vsel %vm446, %v1805, 0
      %v1953 = vsel %vm446, %v1814, 0
      %v1956 = vsel %vm446, %v1823, 0
      %v1959 = vsel %vm446, %v1832, 0
      %v1962 = vsel %vm446, %v1841, 0
      %v1965 = vsel %vm446, %v1850, 0
      %v1968 = vsel %vm446, %v1859, 0
      %v1971 = vsel %vm446, %v1868, 0
      %v1974 = vsel %vm446, %v1877, 0
      %v1977 = vsel %vm446, %v1886, 0
      %v1980 = vsel %vm446, %v1895, 0
      %v1983 = vsel %vm446, %v1904, 0
      %v1986 = vsel %vm446, %v1913, 0
      %v1989 = vsel %vm446, %v1922, 0
      %v1992 = vsel %vm446, %v1931, 0
      %v1995 = vsel %vm446, %v1940, 0
      %v1998 = vsel %vm446, %v1945, 0
      %v2001 = vsel %vm501, %v1685, 0
      %2003 = vmatprep.subr.bf16.mxu0 0
      %2004 = vmatpush1.bf16.msra.mxu0 %v2001
      %2005 = vmatprep.subr.bf16.mxu0 0
      %2006 = vmatpush1.bf16.msra.mxu0 0
      %2007 = vmatprep.subr.bf16.mxu0 0
      %2008 = vmatpush1.bf16.msra.mxu0 0
      %2009 = vmatprep.subr.bf16.mxu0 0
      %2010 = vmatpush1.bf16.msra.mxu0 0
      %2011 = vmatprep.subr.bf16.mxu0 0
      %2012 = vmatpush1.bf16.msra.mxu0 0
      %2013 = vmatprep.subr.bf16.mxu0 0
      %2014 = vmatpush1.bf16.msra.mxu0 0
      %2015 = vmatprep.subr.bf16.mxu0 0
      %2016 = vmatpush1.bf16.msra.mxu0 0
      %2017 = vmatprep.subr.bf16.mxu0 0
      %2018 = vmatpush1.bf16.msra.mxu0 0
      %2019 = vmatprep.subr.bf16.mxu0 0
      %2020 = vmatpush1.bf16.msra.mxu0 0
      %2021 = vmatprep.subr.bf16.mxu0 0
      %2022 = vmatpush1.bf16.msra.mxu0 0
      %2023 = vmatprep.subr.bf16.mxu0 0
      %2024 = vmatpush1.bf16.msra.mxu0 0
      %2025 = vmatprep.subr.bf16.mxu0 0
      %2026 = vmatpush1.bf16.msra.mxu0 0
      %2027 = vmatprep.subr.bf16.mxu0 0
      %2028 = vmatpush1.bf16.msra.mxu0 0
      %2029 = vmatprep.subr.bf16.mxu0 0
      %2030 = vmatpush1.bf16.msra.mxu0 0
      %2031 = vmatprep.subr.bf16.mxu0 0
      %2032 = vmatpush1.bf16.msra.mxu0 0
      %2033 = vmatprep.subr.bf16.mxu0 0
      %2034 = vmatpush1.bf16.msra.mxu0 0
      %2035 = vmatprep.mubr.bf16.mxu0 0
      %2036 = vmatmul.mubr.bf16.gmra.mrb[0].mxu0 %v1947
      %v2037 = vpop.f32.mrb[0].mxu0
      %v2038 = vadd.f32 0.0, %v2037
      %v2039 = vpop.f32.mrb[0].mxu0
      %v2040 = vpop.f32.mrb[0].mxu0
      %v2041 = vadd.f32 0.0, %v2040
      %v2042 = vpop.f32.mrb[0].mxu0
      %2043 = vmatprep.mubr.bf16.mxu0 0
      %2044 = vmatmul.mubr.bf16.gmra.mrb[0].mxu0 %v1950
      %v2045 = vpop.f32.mrb[0].mxu0
      %v2046 = vadd.f32 0.0, %v2045
      %v2047 = vpop.f32.mrb[0].mxu0
      %v2048 = vpop.f32.mrb[0].mxu0
      %v2049 = vadd.f32 0.0, %v2048
      %v2050 = vpop.f32.mrb[0].mxu0
      %2051 = vmatprep.mubr.bf16.mxu0 0
      %2052 = vmatmul.mubr.bf16.gmra.mrb[0].mxu0 %v1953
      %v2053 = vpop.f32.mrb[0].mxu0
      %v2054 = vadd.f32 0.0, %v2053
      %v2055 = vpop.f32.mrb[0].mxu0
      %v2056 = vpop.f32.mrb[0].mxu0
      %v2057 = vadd.f32 0.0, %v2056
      %v2058 = vpop.f32.mrb[0].mxu0
      %2059 = vmatprep.mubr.bf16.mxu0 0
      %2060 = vmatmul.mubr.bf16.gmra.mrb[0].mxu0 %v1956
      %v2061 = vpop.f32.mrb[0].mxu0
      %v2062 = vadd.f32 0.0, %v2061
      %v2063 = vpop.f32.mrb[0].mxu0
      %v2064 = vpop.f32.mrb[0].mxu0
      %v2065 = vadd.f32 0.0, %v2064
      %v2066 = vpop.f32.mrb[0].mxu0
      %2067 = vmatprep.mubr.bf16.mxu0 0
      %2068 = vmatmul.mubr.bf16.gmra.mrb[0].mxu0 %v1959
      %v2069 = vpop.f32.mrb[0].mxu0
      %v2070 = vadd.f32 0.0, %v2069
      %v2071 = vpop.f32.mrb[0].mxu0
      %v2072 = vpop.f32.mrb[0].mxu0
      %v2073 = vadd.f32 0.0, %v2072
      %v2074 = vpop.f32.mrb[0].mxu0
      %2075 = vmatprep.mubr.bf16.mxu0 0
      %2076 = vmatmul.mubr.bf16.gmra.mrb[0].mxu0 %v1962
      %v2077 = vpop.f32.mrb[0].mxu0
      %v2078 = vadd.f32 0.0, %v2077
      %v2079 = vpop.f32.mrb[0].mxu0
      %v2080 = vpop.f32.mrb[0].mxu0
      %v2081 = vadd.f32 0.0, %v2080
      %v2082 = vpop.f32.mrb[0].mxu0
      %2083 = vmatprep.mubr.bf16.mxu0 0
      %2084 = vmatmul.mubr.bf16.gmra.mrb[0].mxu0 %v1965
      %v2085 = vpop.f32.mrb[0].mxu0
      %v2086 = vadd.f32 0.0, %v2085
      %v2087 = vpop.f32.mrb[0].mxu0
      %v2088 = vpop.f32.mrb[0].mxu0
      %v2089 = vadd.f32 0.0, %v2088
      %v2090 = vpop.f32.mrb[0].mxu0
      %2091 = vmatprep.mubr.bf16.mxu0 0
      %2092 = vmatmul.mubr.bf16.gmra.mrb[0].mxu0 %v1968
      %v2093 = vpop.f32.mrb[0].mxu0
      %v2094 = vadd.f32 0.0, %v2093
      %v2095 = vpop.f32.mrb[0].mxu0
      %v2096 = vpop.f32.mrb[0].mxu0
      %v2097 = vadd.f32 0.0, %v2096
      %v2098 = vpop.f32.mrb[0].mxu0
      %2099 = vmatprep.mubr.bf16.mxu0 0
      %2100 = vmatmul.mubr.bf16.gmra.mrb[0].mxu0 %v1971
      %v2101 = vpop.f32.mrb[0].mxu0
      %v2102 = vadd.f32 0.0, %v2101
      %v2103 = vpop.f32.mrb[0].mxu0
      %v2104 = vpop.f32.mrb[0].mxu0
      %v2105 = vadd.f32 0.0, %v2104
      %v2106 = vpop.f32.mrb[0].mxu0
      %2107 = vmatprep.mubr.bf16.mxu0 0
      %2108 = vmatmul.mubr.bf16.gmra.mrb[0].mxu0 %v1974
      %v2109 = vpop.f32.mrb[0].mxu0
      %v2110 = vadd.f32 0.0, %v2109
      %v2111 = vpop.f32.mrb[0].mxu0
      %v2112 = vpop.f32.mrb[0].mxu0
      %v2113 = vadd.f32 0.0, %v2112
      %v2114 = vpop.f32.mrb[0].mxu0
      %2115 = vmatprep.mubr.bf16.mxu0 0
      %2116 = vmatmul.mubr.bf16.gmra.mrb[0].mxu0 %v1977
      %v2117 = vpop.f32.mrb[0].mxu0
      %v2118 = vadd.f32 0.0, %v2117
      %v2119 = vpop.f32.mrb[0].mxu0
      %v2120 = vpop.f32.mrb[0].mxu0
      %v2121 = vadd.f32 0.0, %v2120
      %v2122 = vpop.f32.mrb[0].mxu0
      %2123 = vmatprep.mubr.bf16.mxu0 0
      %2124 = vmatmul.mubr.bf16.gmra.mrb[0].mxu0 %v1980
      %v2125 = vpop.f32.mrb[0].mxu0
      %v2126 = vadd.f32 0.0, %v2125
      %v2127 = vpop.f32.mrb[0].mxu0
      %v2128 = vpop.f32.mrb[0].mxu0
      %v2129 = vadd.f32 0.0, %v2128
      %v2130 = vpop.f32.mrb[0].mxu0
      %2131 = vmatprep.mubr.bf16.mxu0 0
      %2132 = vmatmul.mubr.bf16.gmra.mrb[0].mxu0 %v1983
      %v2133 = vpop.f32.mrb[0].mxu0
      %v2134 = vadd.f32 0.0, %v2133
      %v2135 = vpop.f32.mrb[0].mxu0
      %v2136 = vpop.f32.mrb[0].mxu0
      %v2137 = vadd.f32 0.0, %v2136
      %v2138 = vpop.f32.mrb[0].mxu0
      %2139 = vmatprep.mubr.bf16.mxu0 0
      %2140 = vmatmul.mubr.bf16.gmra.mrb[0].mxu0 %v1986
      %v2141 = vpop.f32.mrb[0].mxu0
      %v2142 = vadd.f32 0.0, %v2141
      %v2143 = vpop.f32.mrb[0].mxu0
      %v2144 = vpop.f32.mrb[0].mxu0
      %v2145 = vadd.f32 0.0, %v2144
      %v2146 = vpop.f32.mrb[0].mxu0
      %2147 = vmatprep.mubr.bf16.mxu0 0
      %2148 = vmatmul.mubr.bf16.gmra.mrb[0].mxu0 %v1989
      %v2149 = vpop.f32.mrb[0].mxu0
      %v2150 = vadd.f32 0.0, %v2149
      %v2151 = vpop.f32.mrb[0].mxu0
      %v2152 = vpop.f32.mrb[0].mxu0
      %v2153 = vadd.f32 0.0, %v2152
      %v2154 = vpop.f32.mrb[0].mxu0
      %2155 = vmatprep.mubr.bf16.mxu0 0
      %2156 = vmatmul.mubr.bf16.gmra.mrb[0].mxu0 %v1992
      %v2157 = vpop.f32.mrb[0].mxu0
      %v2158 = vadd.f32 0.0, %v2157
      %v2159 = vpop.f32.mrb[0].mxu0
      %v2160 = vpop.f32.mrb[0].mxu0
      %v2161 = vadd.f32 0.0, %v2160
      %v2162 = vpop.f32.mrb[0].mxu0
      %2163 = vmatprep.mubr.bf16.mxu0 0
      %2164 = vmatmul.mubr.bf16.gmra.mrb[0].mxu0 %v1995
      %v2165 = vpop.f32.mrb[0].mxu0
      %v2166 = vadd.f32 0.0, %v2165
      %v2167 = vpop.f32.mrb[0].mxu0
      %v2168 = vpop.f32.mrb[0].mxu0
      %v2169 = vadd.f32 0.0, %v2168
      %v2170 = vpop.f32.mrb[0].mxu0
      %2171 = vmatprep.mubr.bf16.mxu0 0
      %2172 = vmatmul.mubr.bf16.gmra.mrb[0].mxu0 %v1998
      %v2173 = vpop.f32.mrb[0].mxu0
      %v2174 = vadd.f32 0.0, %v2173
      %v2175 = vpop.f32.mrb[0].mxu0
      %v2176 = vpop.f32.mrb[0].mxu0
      %v2177 = vadd.f32 0.0, %v2176
      %v2178 = vpop.f32.mrb[0].mxu0
      %2179 = vdwg.mxu0
      %v2180 = vadd.f32 %v1611, %v2038
      %v2181 = vadd.f32 %v1612, %v2041
      %v2182 = vadd.f32 %v1613, %v2046
      %v2183 = vadd.f32 %v1614, %v2049
      %v2184 = vadd.f32 %v1615, %v2054
      %v2185 = vadd.f32 %v1616, %v2057
      %v2186 = vadd.f32 %v1617, %v2062
      %v2187 = vadd.f32 %v1618, %v2065
      %v2188 = vadd.f32 %v1619, %v2070
      %v2189 = vadd.f32 %v1620, %v2073
      %v2190 = vadd.f32 %v1621, %v2078
      %v2191 = vadd.f32 %v1622, %v2081
      %v2192 = vadd.f32 %v1623, %v2086
      %v2193 = vadd.f32 %v1624, %v2089
      %v2194 = vadd.f32 %v1625, %v2094
      %v2195 = vadd.f32 %v1626, %v2097
      %v2196 = vadd.f32 %v1627, %v2102
      %v2197 = vadd.f32 %v1628, %v2105
      %v2198 = vadd.f32 %v1629, %v2110
      %v2199 = vadd.f32 %v1630, %v2113
      %v2200 = vadd.f32 %v1631, %v2118
      %v2201 = vadd.f32 %v1632, %v2121
      %v2202 = vadd.f32 %v1633, %v2126
      %v2203 = vadd.f32 %v1634, %v2129
      %v2204 = vadd.f32 %v1635, %v2134
      %v2205 = vadd.f32 %v1636, %v2137
      %v2206 = vadd.f32 %v1637, %v2142
      %v2207 = vadd.f32 %v1638, %v2145
      %v2208 = vadd.f32 %v1639, %v2150
      %v2209 = vadd.f32 %v1640, %v2153
      %v2210 = vadd.f32 %v1641, %v2158
      %v2211 = vadd.f32 %v1642, %v2161
      %v2212 = vadd.f32 %v1643, %v2166
      %v2213 = vadd.f32 %v1644, %v2169
      %v2214 = vadd.f32 %v1645, %v2174
      %v2215 = vadd.f32 %v1646, %v2177
      %v2216 = vld [vmem:[%s165 + $0x8] sm:$0xc]
      %s2217 = scalar_lea.vmem %s1, 10
      %v2218 = vld [vmem:[%s2217] sm:$0x3]
      %v2220 = vunpack.c.l.b16 %v2216
      %v2221 = vpack.c.b16 %v1724, %v2220
      %vm2222 = vcmask 1045504
      %v2223 = vrot.slane %v2221, 2
      %v2224 = vrot.slane %v1761, 2
      %v2225 = vsel %vm2222, %v2223, %v2224
      %v2226 = vrot.slane %v1762, 2
      %v2227 = vsel %vm2222, %v2224, %v2226
      %v2228 = vrot.slane %v1763, 2
      %v2229 = vsel %vm2222, %v2226, %v2228
      %v2230 = vrot.slane %v1764, 2
      %v2231 = vsel %vm2222, %v2228, %v2230
      %v2232 = vrot.slane %v1765, 2
      %v2233 = vsel %vm2222, %v2230, %v2232
      %v2234 = vrot.slane %v1766, 2
      %v2235 = vsel %vm2222, %v2232, %v2234
      %v2236 = vrot.slane %v1767, 2
      %v2237 = vsel %vm2222, %v2234, %v2236
      %v2238 = vrot.slane %v1768, 2
      %v2239 = vsel %vm2222, %v2236, %v2238
      %v2240 = vrot.slane %v1769, 2
      %v2241 = vsel %vm2222, %v2238, %v2240
      %v2242 = vrot.slane %v1770, 2
      %v2243 = vsel %vm2222, %v2240, %v2242
      %v2244 = vrot.slane %v1771, 2
      %v2245 = vsel %vm2222, %v2242, %v2244
      %v2246 = vrot.slane %v1772, 2
      %v2247 = vsel %vm2222, %v2244, %v2246
      %v2248 = vrot.slane %v1773, 2
      %v2249 = vsel %vm2222, %v2246, %v2248
      %v2250 = vrot.slane %v1774, 2
      %v2251 = vsel %vm2222, %v2248, %v2250
      %v2252 = vrot.slane %v1775, 2
      %v2253 = vsel %vm2222, %v2250, %v2252
      %v2254 = vrot.slane %v1776, 2
      %v2255 = vsel %vm2222, %v2252, %v2254
      %v2256 = vrot.slane %v1777, 2
      %v2257 = vsel %vm2222, %v2254, %v2256
      %v2258 = vrot.slane %v1778, 2
      %v2259 = vsel %vm2222, %v2256, %v2258
      %v2261 = vsel %vm446, %v2225, 0
      %v2264 = vsel %vm446, %v2227, 0
      %v2267 = vsel %vm446, %v2229, 0
      %v2270 = vsel %vm446, %v2231, 0
      %v2273 = vsel %vm446, %v2233, 0
      %v2276 = vsel %vm446, %v2235, 0
      %v2279 = vsel %vm446, %v2237, 0
      %v2282 = vsel %vm446, %v2239, 0
      %v2285 = vsel %vm446, %v2241, 0
      %v2288 = vsel %vm446, %v2243, 0
      %v2291 = vsel %vm446, %v2245, 0
      %v2294 = vsel %vm446, %v2247, 0
      %v2297 = vsel %vm446, %v2249, 0
      %v2300 = vsel %vm446, %v2251, 0
      %v2303 = vsel %vm446, %v2253, 0
      %v2306 = vsel %vm446, %v2255, 0
      %v2309 = vsel %vm446, %v2257, 0
      %v2312 = vsel %vm446, %v2259, 0
      %v2315 = vsel %vm501, %v2218, 0
      %2317 = vmatprep.subr.bf16.mxu0 0
      %2318 = vmatpush1.bf16.msra.mxu0 %v2315
      %2319 = vmatprep.subr.bf16.mxu0 0
      %2320 = vmatpush1.bf16.msra.mxu0 0
      %2321 = vmatprep.subr.bf16.mxu0 0
      %2322 = vmatpush1.bf16.msra.mxu0 0
      %2323 = vmatprep.subr.bf16.mxu0 0
      %2324 = vmatpush1.bf16.msra.mxu0 0
      %2325 = vmatprep.subr.bf16.mxu0 0
      %2326 = vmatpush1.bf16.msra.mxu0 0
      %2327 = vmatprep.subr.bf16.mxu0 0
      %2328 = vmatpush1.bf16.msra.mxu0 0
      %2329 = vmatprep.subr.bf16.mxu0 0
      %2330 = vmatpush1.bf16.msra.mxu0 0
      %2331 = vmatprep.subr.bf16.mxu0 0
      %2332 = vmatpush1.bf16.msra.mxu0 0
      %2333 = vmatprep.subr.bf16.mxu0 0
      %2334 = vmatpush1.bf16.msra.mxu0 0
      %2335 = vmatprep.subr.bf16.mxu0 0
      %2336 = vmatpush1.bf16.msra.mxu0 0
      %2337 = vmatprep.subr.bf16.mxu0 0
      %2338 = vmatpush1.bf16.msra.mxu0 0
      %2339 = vmatprep.subr.bf16.mxu0 0
      %2340 = vmatpush1.bf16.msra.mxu0 0
      %2341 = vmatprep.subr.bf16.mxu0 0
      %2342 = vmatpush1.bf16.msra.mxu0 0
      %2343 = vmatprep.subr.bf16.mxu0 0
      %2344 = vmatpush1.bf16.msra.mxu0 0
      %2345 = vmatprep.subr.bf16.mxu0 0
      %2346 = vmatpush1.bf16.msra.mxu0 0
      %2347 = vmatprep.subr.bf16.mxu0 0
      %2348 = vmatpush1.bf16.msra.mxu0 0
      %2349 = vmatprep.mubr.bf16.mxu0 0
      %2350 = vmatmul.mubr.bf16.gmra.mrb[0].mxu0 %v2261
      %v2351 = vpop.f32.mrb[0].mxu0
      %v2352 = vadd.f32 0.0, %v2351
      %v2353 = vpop.f32.mrb[0].mxu0
      %v2354 = vpop.f32.mrb[0].mxu0
      %v2355 = vadd.f32 0.0, %v2354
      %v2356 = vpop.f32.mrb[0].mxu0
      %2357 = vmatprep.mubr.bf16.mxu0 0
      %2358 = vmatmul.mubr.bf16.gmra.mrb[0].mxu0 %v2264
      %v2359 = vpop.f32.mrb[0].mxu0
      %v2360 = vadd.f32 0.0, %v2359
      %v2361 = vpop.f32.mrb[0].mxu0
      %v2362 = vpop.f32.mrb[0].mxu0
      %v2363 = vadd.f32 0.0, %v2362
      %v2364 = vpop.f32.mrb[0].mxu0
      %2365 = vmatprep.mubr.bf16.mxu0 0
      %2366 = vmatmul.mubr.bf16.gmra.mrb[0].mxu0 %v2267
      %v2367 = vpop.f32.mrb[0].mxu0
      %v2368 = vadd.f32 0.0, %v2367
      %v2369 = vpop.f32.mrb[0].mxu0
      %v2370 = vpop.f32.mrb[0].mxu0
      %v2371 = vadd.f32 0.0, %v2370
      %v2372 = vpop.f32.mrb[0].mxu0
      %2373 = vmatprep.mubr.bf16.mxu0 0
      %2374 = vmatmul.mubr.bf16.gmra.mrb[0].mxu0 %v2270
      %v2375 = vpop.f32.mrb[0].mxu0
      %v2376 = vadd.f32 0.0, %v2375
      %v2377 = vpop.f32.mrb[0].mxu0
      %v2378 = vpop.f32.mrb[0].mxu0
      %v2379 = vadd.f32 0.0, %v2378
      %v2380 = vpop.f32.mrb[0].mxu0
      %2381 = vmatprep.mubr.bf16.mxu0 0
      %2382 = vmatmul.mubr.bf16.gmra.mrb[0].mxu0 %v2273
      %v2383 = vpop.f32.mrb[0].mxu0
      %v2384 = vadd.f32 0.0, %v2383
      %v2385 = vpop.f32.mrb[0].mxu0
      %v2386 = vpop.f32.mrb[0].mxu0
      %v2387 = vadd.f32 0.0, %v2386
      %v2388 = vpop.f32.mrb[0].mxu0
      %2389 = vmatprep.mubr.bf16.mxu0 0
      %2390 = vmatmul.mubr.bf16.gmra.mrb[0].mxu0 %v2276
      %v2391 = vpop.f32.mrb[0].mxu0
      %v2392 = vadd.f32 0.0, %v2391
      %v2393 = vpop.f32.mrb[0].mxu0
      %v2394 = vpop.f32.mrb[0].mxu0
      %v2395 = vadd.f32 0.0, %v2394
      %v2396 = vpop.f32.mrb[0].mxu0
      %2397 = vmatprep.mubr.bf16.mxu0 0
      %2398 = vmatmul.mubr.bf16.gmra.mrb[0].mxu0 %v2279
      %v2399 = vpop.f32.mrb[0].mxu0
      %v2400 = vadd.f32 0.0, %v2399
      %v2401 = vpop.f32.mrb[0].mxu0
      %v2402 = vpop.f32.mrb[0].mxu0
      %v2403 = vadd.f32 0.0, %v2402
      %v2404 = vpop.f32.mrb[0].mxu0
      %2405 = vmatprep.mubr.bf16.mxu0 0
      %2406 = vmatmul.mubr.bf16.gmra.mrb[0].mxu0 %v2282
      %v2407 = vpop.f32.mrb[0].mxu0
      %v2408 = vadd.f32 0.0, %v2407
      %v2409 = vpop.f32.mrb[0].mxu0
      %v2410 = vpop.f32.mrb[0].mxu0
      %v2411 = vadd.f32 0.0, %v2410
      %v2412 = vpop.f32.mrb[0].mxu0
      %2413 = vmatprep.mubr.bf16.mxu0 0
      %2414 = vmatmul.mubr.bf16.gmra.mrb[0].mxu0 %v2285
      %v2415 = vpop.f32.mrb[0].mxu0
      %v2416 = vadd.f32 0.0, %v2415
      %v2417 = vpop.f32.mrb[0].mxu0
      %v2418 = vpop.f32.mrb[0].mxu0
      %v2419 = vadd.f32 0.0, %v2418
      %v2420 = vpop.f32.mrb[0].mxu0
      %2421 = vmatprep.mubr.bf16.mxu0 0
      %2422 = vmatmul.mubr.bf16.gmra.mrb[0].mxu0 %v2288
      %v2423 = vpop.f32.mrb[0].mxu0
      %v2424 = vadd.f32 0.0, %v2423
      %v2425 = vpop.f32.mrb[0].mxu0
      %v2426 = vpop.f32.mrb[0].mxu0
      %v2427 = vadd.f32 0.0, %v2426
      %v2428 = vpop.f32.mrb[0].mxu0
      %2429 = vmatprep.mubr.bf16.mxu0 0
      %2430 = vmatmul.mubr.bf16.gmra.mrb[0].mxu0 %v2291
      %v2431 = vpop.f32.mrb[0].mxu0
      %v2432 = vadd.f32 0.0, %v2431
      %v2433 = vpop.f32.mrb[0].mxu0
      %v2434 = vpop.f32.mrb[0].mxu0
      %v2435 = vadd.f32 0.0, %v2434
      %v2436 = vpop.f32.mrb[0].mxu0
      %2437 = vmatprep.mubr.bf16.mxu0 0
      %2438 = vmatmul.mubr.bf16.gmra.mrb[0].mxu0 %v2294
      %v2439 = vpop.f32.mrb[0].mxu0
      %v2440 = vadd.f32 0.0, %v2439
      %v2441 = vpop.f32.mrb[0].mxu0
      %v2442 = vpop.f32.mrb[0].mxu0
      %v2443 = vadd.f32 0.0, %v2442
      %v2444 = vpop.f32.mrb[0].mxu0
      %2445 = vmatprep.mubr.bf16.mxu0 0
      %2446 = vmatmul.mubr.bf16.gmra.mrb[0].mxu0 %v2297
      %v2447 = vpop.f32.mrb[0].mxu0
      %v2448 = vadd.f32 0.0, %v2447
      %v2449 = vpop.f32.mrb[0].mxu0
      %v2450 = vpop.f32.mrb[0].mxu0
      %v2451 = vadd.f32 0.0, %v2450
      %v2452 = vpop.f32.mrb[0].mxu0
      %2453 = vmatprep.mubr.bf16.mxu0 0
      %2454 = vmatmul.mubr.bf16.gmra.mrb[0].mxu0 %v2300
      %v2455 = vpop.f32.mrb[0].mxu0
      %v2456 = vadd.f32 0.0, %v2455
      %v2457 = vpop.f32.mrb[0].mxu0
      %v2458 = vpop.f32.mrb[0].mxu0
      %v2459 = vadd.f32 0.0, %v2458
      %v2460 = vpop.f32.mrb[0].mxu0
      %2461 = vmatprep.mubr.bf16.mxu0 0
      %2462 = vmatmul.mubr.bf16.gmra.mrb[0].mxu0 %v2303
      %v2463 = vpop.f32.mrb[0].mxu0
      %v2464 = vadd.f32 0.0, %v2463
      %v2465 = vpop.f32.mrb[0].mxu0
      %v2466 = vpop.f32.mrb[0].mxu0
      %v2467 = vadd.f32 0.0, %v2466
      %v2468 = vpop.f32.mrb[0].mxu0
      %2469 = vmatprep.mubr.bf16.mxu0 0
      %2470 = vmatmul.mubr.bf16.gmra.mrb[0].mxu0 %v2306
      %v2471 = vpop.f32.mrb[0].mxu0
      %v2472 = vadd.f32 0.0, %v2471
      %v2473 = vpop.f32.mrb[0].mxu0
      %v2474 = vpop.f32.mrb[0].mxu0
      %v2475 = vadd.f32 0.0, %v2474
      %v2476 = vpop.f32.mrb[0].mxu0
      %2477 = vmatprep.mubr.bf16.mxu0 0
      %2478 = vmatmul.mubr.bf16.gmra.mrb[0].mxu0 %v2309
      %v2479 = vpop.f32.mrb[0].mxu0
      %v2480 = vadd.f32 0.0, %v2479
      %v2481 = vpop.f32.mrb[0].mxu0
      %v2482 = vpop.f32.mrb[0].mxu0
      %v2483 = vadd.f32 0.0, %v2482
      %v2484 = vpop.f32.mrb[0].mxu0
      %2485 = vmatprep.mubr.bf16.mxu0 0
      %2486 = vmatmul.mubr.bf16.gmra.mrb[0].mxu0 %v2312
      %v2487 = vpop.f32.mrb[0].mxu0
      %v2488 = vadd.f32 0.0, %v2487
      %v2489 = vpop.f32.mrb[0].mxu0
      %v2490 = vpop.f32.mrb[0].mxu0
      %v2491 = vadd.f32 0.0, %v2490
      %v2492 = vpop.f32.mrb[0].mxu0
      %2493 = vdwg.mxu0
      %v2494 = vadd.f32 %v2180, %v2352
      %v2495 = vadd.f32 %v2181, %v2355
      %v2496 = vadd.f32 %v2182, %v2360
      %v2497 = vadd.f32 %v2183, %v2363
      %v2498 = vadd.f32 %v2184, %v2368
      %v2499 = vadd.f32 %v2185, %v2371
      %v2500 = vadd.f32 %v2186, %v2376
      %v2501 = vadd.f32 %v2187, %v2379
      %v2502 = vadd.f32 %v2188, %v2384
      %v2503 = vadd.f32 %v2189, %v2387
      %v2504 = vadd.f32 %v2190, %v2392
      %v2505 = vadd.f32 %v2191, %v2395
      %v2506 = vadd.f32 %v2192, %v2400
      %v2507 = vadd.f32 %v2193, %v2403
      %v2508 = vadd.f32 %v2194, %v2408
      %v2509 = vadd.f32 %v2195, %v2411
      %v2510 = vadd.f32 %v2196, %v2416
      %v2511 = vadd.f32 %v2197, %v2419
      %v2512 = vadd.f32 %v2198, %v2424
      %v2513 = vadd.f32 %v2199, %v2427
      %v2514 = vadd.f32 %v2200, %v2432
      %v2515 = vadd.f32 %v2201, %v2435
      %v2516 = vadd.f32 %v2202, %v2440
      %v2517 = vadd.f32 %v2203, %v2443
      %v2518 = vadd.f32 %v2204, %v2448
      %v2519 = vadd.f32 %v2205, %v2451
      %v2520 = vadd.f32 %v2206, %v2456
      %v2521 = vadd.f32 %v2207, %v2459
      %v2522 = vadd.f32 %v2208, %v2464
      %v2523 = vadd.f32 %v2209, %v2467
      %v2524 = vadd.f32 %v2210, %v2472
      %v2525 = vadd.f32 %v2211, %v2475
      %v2526 = vadd.f32 %v2212, %v2480
      %v2527 = vadd.f32 %v2213, %v2483
      %v2528 = vadd.f32 %v2214, %v2488
      %v2529 = vadd.f32 %v2215, %v2491
      %v2530 = vld [vmem:[%s165 + $0x10] sm:$0xc]
      %v2531 = vld [vmem:[%s165 + $0x14] sm:$0xf]
      %v2532 = vld [vmem:[%s165 + $0x18] sm:$0xf]
      %v2533 = vld [vmem:[%s165 + $0x1c] sm:$0xf]
      %v2534 = vld [vmem:[%s165 + $0x20] sm:$0xf]
      %v2535 = vld [vmem:[%s165 + $0x24] sm:$0xf]
      %v2536 = vld [vmem:[%s165 + $0x28] sm:$0xf]
      %v2537 = vld [vmem:[%s165 + $0x2c] sm:$0xf]
      %v2538 = vld [vmem:[%s165 + $0x30] sm:$0xf]
      %v2539 = vld [vmem:[%s165 + $0x34] sm:$0xf]
      %v2540 = vld [vmem:[%s165 + $0x38] sm:$0xf]
      %v2541 = vld [vmem:[%s165 + $0x3c] sm:$0xf]
      %v2542 = vld [vmem:[%s165 + $0x40] sm:$0xf]
      %v2543 = vld [vmem:[%s165 + $0x44] sm:$0xf]
      %v2544 = vld [vmem:[%s165 + $0x48] sm:$0xf]
      %v2545 = vld [vmem:[%s165 + $0x4c] sm:$0xf]
      %v2546 = vld [vmem:[%s165 + $0x50] sm:$0xf]
      %v2547 = vld [vmem:[%s165 + $0x54] sm:$0xf]
      %v2548 = vld [vmem:[%s165 + $0x58] sm:$0xf]
      %v2549 = vld [vmem:[%s165 + $0x5c] sm:$0xf]
      %v2550 = vld [vmem:[%s165 + $0x60] sm:$0xf]
      %v2551 = vld [vmem:[%s165 + $0x64] sm:$0xf]
      %v2552 = vld [vmem:[%s165 + $0x68] sm:$0xf]
      %v2553 = vld [vmem:[%s165 + $0x6c] sm:$0xf]
      %v2554 = vld [vmem:[%s165 + $0x70] sm:$0xf]
      %v2555 = vld [vmem:[%s165 + $0x74] sm:$0xf]
      %v2556 = vld [vmem:[%s165 + $0x78] sm:$0xf]
      %v2557 = vld [vmem:[%s165 + $0x7c] sm:$0xf]
      %v2558 = vld [vmem:[%s165 + $0x80] sm:$0xf]
      %v2559 = vld [vmem:[%s165 + $0x84] sm:$0xf]
      %v2560 = vld [vmem:[%s165 + $0x88] sm:$0xf]
      %v2561 = vld [vmem:[%s165 + $0x8c] sm:$0xf]
      %v2562 = vld [vmem:[%s165 + $0x90] sm:$0xf]
      %v2563 = vld [vmem:[%s165 + $0x94] sm:$0xf]
      %v2564 = vld [vmem:[%s165 + $0x98] sm:$0xf]
      %v2565 = vld [vmem:[%s165 + $0x9c] sm:$0xf]
      %v2566 = vld [vmem:[%s165 + $0xa0] sm:$0x1]
      %s2567 = scalar_lea.vmem %s1, 12
      %v2568 = vld [vmem:[%s2567] sm:$0x3]
      %v2606 = vunpack.c.l.b16 %v2530
      %v2607 = vunpack.c.l.b16 %v2531
      %v2608 = vunpack.c.l.b16 %v2532
      %v2609 = vunpack.c.l.b16 %v2533
      %v2610 = vunpack.c.l.b16 %v2534
      %v2611 = vunpack.c.l.b16 %v2535
      %v2612 = vunpack.c.l.b16 %v2536
      %v2613 = vunpack.c.l.b16 %v2537
      %v2614 = vunpack.c.l.b16 %v2538
      %v2615 = vunpack.c.l.b16 %v2539
      %v2616 = vunpack.c.l.b16 %v2540
      %v2617 = vunpack.c.l.b16 %v2541
      %v2618 = vunpack.c.l.b16 %v2542
      %v2619 = vunpack.c.l.b16 %v2543
      %v2620 = vunpack.c.l.b16 %v2544
      %v2621 = vunpack.c.l.b16 %v2545
      %v2622 = vunpack.c.l.b16 %v2546
      %v2623 = vunpack.c.l.b16 %v2547
      %v2624 = vunpack.c.l.b16 %v2548
      %v2625 = vunpack.c.l.b16 %v2549
      %v2626 = vunpack.c.l.b16 %v2550
      %v2627 = vunpack.c.l.b16 %v2551
      %v2628 = vunpack.c.l.b16 %v2552
      %v2629 = vunpack.c.l.b16 %v2553
      %v2630 = vunpack.c.l.b16 %v2554
      %v2631 = vunpack.c.l.b16 %v2555
      %v2632 = vunpack.c.l.b16 %v2556
      %v2633 = vunpack.c.l.b16 %v2557
      %v2634 = vunpack.c.l.b16 %v2558
      %v2635 = vunpack.c.l.b16 %v2559
      %v2636 = vunpack.c.l.b16 %v2560
      %v2637 = vunpack.c.l.b16 %v2561
      %v2638 = vunpack.c.l.b16 %v2562
      %v2639 = vunpack.c.l.b16 %v2563
      %v2640 = vunpack.c.l.b16 %v2564
      %v2641 = vunpack.c.l.b16 %v2565
      %v2642 = vunpack.c.l.b16 %v2566
      %v2643 = vpack.c.b16 %v2607, %v2606
      %v2644 = vpack.c.b16 %v2609, %v2608
      %v2645 = vpack.c.b16 %v2611, %v2610
      %v2646 = vpack.c.b16 %v2613, %v2612
      %v2647 = vpack.c.b16 %v2615, %v2614
      %v2648 = vpack.c.b16 %v2617, %v2616
      %v2649 = vpack.c.b16 %v2619, %v2618
      %v2650 = vpack.c.b16 %v2621, %v2620
      %v2651 = vpack.c.b16 %v2623, %v2622
      %v2652 = vpack.c.b16 %v2625, %v2624
      %v2653 = vpack.c.b16 %v2627, %v2626
      %v2654 = vpack.c.b16 %v2629, %v2628
      %v2655 = vpack.c.b16 %v2631, %v2630
      %v2656 = vpack.c.b16 %v2633, %v2632
      %v2657 = vpack.c.b16 %v2635, %v2634
      %v2658 = vpack.c.b16 %v2637, %v2636
      %v2659 = vpack.c.b16 %v2639, %v2638
      %v2660 = vpack.c.b16 %v2641, %v2640
      %v2661 = vpack.c.b16 %v2642, %v2642
      %v2662 = vrot.slane %v2643, 2
      %v2663 = vrot.slane %v2644, 2
      %v2664 = vsel %vm2222, %v2662, %v2663
      %v2665 = vrot.slane %v2645, 2
      %v2666 = vsel %vm2222, %v2663, %v2665
      %v2667 = vrot.slane %v2646, 2
      %v2668 = vsel %vm2222, %v2665, %v2667
      %v2669 = vrot.slane %v2647, 2
      %v2670 = vsel %vm2222, %v2667, %v2669
      %v2671 = vrot.slane %v2648, 2
      %v2672 = vsel %vm2222, %v2669, %v2671
      %v2673 = vrot.slane %v2649, 2
      %v2674 = vsel %vm2222, %v2671, %v2673
      %v2675 = vrot.slane %v2650, 2
      %v2676 = vsel %vm2222, %v2673, %v2675
      %v2677 = vrot.slane %v2651, 2
      %v2678 = vsel %vm2222, %v2675, %v2677
      %v2679 = vrot.slane %v2652, 2
      %v2680 = vsel %vm2222, %v2677, %v2679
      %v2681 = vrot.slane %v2653, 2
      %v2682 = vsel %vm2222, %v2679, %v2681
      %v2683 = vrot.slane %v2654, 2
      %v2684 = vsel %vm2222, %v2681, %v2683
      %v2685 = vrot.slane %v2655, 2
      %v2686 = vsel %vm2222, %v2683, %v2685
      %v2687 = vrot.slane %v2656, 2
      %v2688 = vsel %vm2222, %v2685, %v2687
      %v2689 = vrot.slane %v2657, 2
      %v2690 = vsel %vm2222, %v2687, %v2689
      %v2691 = vrot.slane %v2658, 2
      %v2692 = vsel %vm2222, %v2689, %v2691
      %v2693 = vrot.slane %v2659, 2
      %v2694 = vsel %vm2222, %v2691, %v2693
      %v2695 = vrot.slane %v2660, 2
      %v2696 = vsel %vm2222, %v2693, %v2695
      %v2697 = vrot.slane %v2661, 2
      %v2698 = vsel %vm2222, %v2695, %v2697
      %v2700 = vsel %vm446, %v2664, 0
      %v2703 = vsel %vm446, %v2666, 0
      %v2706 = vsel %vm446, %v2668, 0
      %v2709 = vsel %vm446, %v2670, 0
      %v2712 = vsel %vm446, %v2672, 0
      %v2715 = vsel %vm446, %v2674, 0
      %v2718 = vsel %vm446, %v2676, 0
      %v2721 = vsel %vm446, %v2678, 0
      %v2724 = vsel %vm446, %v2680, 0
      %v2727 = vsel %vm446, %v2682, 0
      %v2730 = vsel %vm446, %v2684, 0
      %v2733 = vsel %vm446, %v2686, 0
      %v2736 = vsel %vm446, %v2688, 0
      %v2739 = vsel %vm446, %v2690, 0
      %v2742 = vsel %vm446, %v2692, 0
      %v2745 = vsel %vm446, %v2694, 0
      %v2748 = vsel %vm446, %v2696, 0
      %v2751 = vsel %vm446, %v2698, 0
      %v2754 = vsel %vm501, %v2568, 0
      %2756 = vmatprep.subr.bf16.mxu0 0
      %2757 = vmatpush1.bf16.msra.mxu0 %v2754
      %2758 = vmatprep.subr.bf16.mxu0 0
      %2759 = vmatpush1.bf16.msra.mxu0 0
      %2760 = vmatprep.subr.bf16.mxu0 0
      %2761 = vmatpush1.bf16.msra.mxu0 0
      %2762 = vmatprep.subr.bf16.mxu0 0
      %2763 = vmatpush1.bf16.msra.mxu0 0
      %2764 = vmatprep.subr.bf16.mxu0 0
      %2765 = vmatpush1.bf16.msra.mxu0 0
      %2766 = vmatprep.subr.bf16.mxu0 0
      %2767 = vmatpush1.bf16.msra.mxu0 0
      %2768 = vmatprep.subr.bf16.mxu0 0
      %2769 = vmatpush1.bf16.msra.mxu0 0
      %2770 = vmatprep.subr.bf16.mxu0 0
      %2771 = vmatpush1.bf16.msra.mxu0 0
      %2772 = vmatprep.subr.bf16.mxu0 0
      %2773 = vmatpush1.bf16.msra.mxu0 0
      %2774 = vmatprep.subr.bf16.mxu0 0
      %2775 = vmatpush1.bf16.msra.mxu0 0
      %2776 = vmatprep.subr.bf16.mxu0 0
      %2777 = vmatpush1.bf16.msra.mxu0 0
      %2778 = vmatprep.subr.bf16.mxu0 0
      %2779 = vmatpush1.bf16.msra.mxu0 0
      %2780 = vmatprep.subr.bf16.mxu0 0
      %2781 = vmatpush1.bf16.msra.mxu0 0
      %2782 = vmatprep.subr.bf16.mxu0 0
      %2783 = vmatpush1.bf16.msra.mxu0 0
      %2784 = vmatprep.subr.bf16.mxu0 0
      %2785 = vmatpush1.bf16.msra.mxu0 0
      %2786 = vmatprep.subr.bf16.mxu0 0
      %2787 = vmatpush1.bf16.msra.mxu0 0
      %2788 = vmatprep.mubr.bf16.mxu0 0
      %2789 = vmatmul.mubr.bf16.gmra.mrb[0].mxu0 %v2700
      %v2790 = vpop.f32.mrb[0].mxu0
      %v2791 = vadd.f32 0.0, %v2790
      %v2792 = vpop.f32.mrb[0].mxu0
      %v2793 = vpop.f32.mrb[0].mxu0
      %v2794 = vadd.f32 0.0, %v2793
      %v2795 = vpop.f32.mrb[0].mxu0
      %2796 = vmatprep.mubr.bf16.mxu0 0
      %2797 = vmatmul.mubr.bf16.gmra.mrb[0].mxu0 %v2703
      %v2798 = vpop.f32.mrb[0].mxu0
      %v2799 = vadd.f32 0.0, %v2798
      %v2800 = vpop.f32.mrb[0].mxu0
      %v2801 = vpop.f32.mrb[0].mxu0
      %v2802 = vadd.f32 0.0, %v2801
      %v2803 = vpop.f32.mrb[0].mxu0
      %2804 = vmatprep.mubr.bf16.mxu0 0
      %2805 = vmatmul.mubr.bf16.gmra.mrb[0].mxu0 %v2706
      %v2806 = vpop.f32.mrb[0].mxu0
      %v2807 = vadd.f32 0.0, %v2806
      %v2808 = vpop.f32.mrb[0].mxu0
      %v2809 = vpop.f32.mrb[0].mxu0
      %v2810 = vadd.f32 0.0, %v2809
      %v2811 = vpop.f32.mrb[0].mxu0
      %2812 = vmatprep.mubr.bf16.mxu0 0
      %2813 = vmatmul.mubr.bf16.gmra.mrb[0].mxu0 %v2709
      %v2814 = vpop.f32.mrb[0].mxu0
      %v2815 = vadd.f32 0.0, %v2814
      %v2816 = vpop.f32.mrb[0].mxu0
      %v2817 = vpop.f32.mrb[0].mxu0
      %v2818 = vadd.f32 0.0, %v2817
      %v2819 = vpop.f32.mrb[0].mxu0
      %2820 = vmatprep.mubr.bf16.mxu0 0
      %2821 = vmatmul.mubr.bf16.gmra.mrb[0].mxu0 %v2712
      %v2822 = vpop.f32.mrb[0].mxu0
      %v2823 = vadd.f32 0.0, %v2822
      %v2824 = vpop.f32.mrb[0].mxu0
      %v2825 = vpop.f32.mrb[0].mxu0
      %v2826 = vadd.f32 0.0, %v2825
      %v2827 = vpop.f32.mrb[0].mxu0
      %2828 = vmatprep.mubr.bf16.mxu0 0
      %2829 = vmatmul.mubr.bf16.gmra.mrb[0].mxu0 %v2715
      %v2830 = vpop.f32.mrb[0].mxu0
      %v2831 = vadd.f32 0.0, %v2830
      %v2832 = vpop.f32.mrb[0].mxu0
      %v2833 = vpop.f32.mrb[0].mxu0
      %v2834 = vadd.f32 0.0, %v2833
      %v2835 = vpop.f32.mrb[0].mxu0
      %2836 = vmatprep.mubr.bf16.mxu0 0
      %2837 = vmatmul.mubr.bf16.gmra.mrb[0].mxu0 %v2718
      %v2838 = vpop.f32.mrb[0].mxu0
      %v2839 = vadd.f32 0.0, %v2838
      %v2840 = vpop.f32.mrb[0].mxu0
      %v2841 = vpop.f32.mrb[0].mxu0
      %v2842 = vadd.f32 0.0, %v2841
      %v2843 = vpop.f32.mrb[0].mxu0
      %2844 = vmatprep.mubr.bf16.mxu0 0
      %2845 = vmatmul.mubr.bf16.gmra.mrb[0].mxu0 %v2721
      %v2846 = vpop.f32.mrb[0].mxu0
      %v2847 = vadd.f32 0.0, %v2846
      %v2848 = vpop.f32.mrb[0].mxu0
      %v2849 = vpop.f32.mrb[0].mxu0
      %v2850 = vadd.f32 0.0, %v2849
      %v2851 = vpop.f32.mrb[0].mxu0
      %2852 = vmatprep.mubr.bf16.mxu0 0
      %2853 = vmatmul.mubr.bf16.gmra.mrb[0].mxu0 %v2724
      %v2854 = vpop.f32.mrb[0].mxu0
      %v2855 = vadd.f32 0.0, %v2854
      %v2856 = vpop.f32.mrb[0].mxu0
      %v2857 = vpop.f32.mrb[0].mxu0
      %v2858 = vadd.f32 0.0, %v2857
      %v2859 = vpop.f32.mrb[0].mxu0
      %2860 = vmatprep.mubr.bf16.mxu0 0
      %2861 = vmatmul.mubr.bf16.gmra.mrb[0].mxu0 %v2727
      %v2862 = vpop.f32.mrb[0].mxu0
      %v2863 = vadd.f32 0.0, %v2862
      %v2864 = vpop.f32.mrb[0].mxu0
      %v2865 = vpop.f32.mrb[0].mxu0
      %v2866 = vadd.f32 0.0, %v2865
      %v2867 = vpop.f32.mrb[0].mxu0
      %2868 = vmatprep.mubr.bf16.mxu0 0
      %2869 = vmatmul.mubr.bf16.gmra.mrb[0].mxu0 %v2730
      %v2870 = vpop.f32.mrb[0].mxu0
      %v2871 = vadd.f32 0.0, %v2870
      %v2872 = vpop.f32.mrb[0].mxu0
      %v2873 = vpop.f32.mrb[0].mxu0
      %v2874 = vadd.f32 0.0, %v2873
      %v2875 = vpop.f32.mrb[0].mxu0
      %2876 = vmatprep.mubr.bf16.mxu0 0
      %2877 = vmatmul.mubr.bf16.gmra.mrb[0].mxu0 %v2733
      %v2878 = vpop.f32.mrb[0].mxu0
      %v2879 = vadd.f32 0.0, %v2878
      %v2880 = vpop.f32.mrb[0].mxu0
      %v2881 = vpop.f32.mrb[0].mxu0
      %v2882 = vadd.f32 0.0, %v2881
      %v2883 = vpop.f32.mrb[0].mxu0
      %2884 = vmatprep.mubr.bf16.mxu0 0
      %2885 = vmatmul.mubr.bf16.gmra.mrb[0].mxu0 %v2736
      %v2886 = vpop.f32.mrb[0].mxu0
      %v2887 = vadd.f32 0.0, %v2886
      %v2888 = vpop.f32.mrb[0].mxu0
      %v2889 = vpop.f32.mrb[0].mxu0
      %v2890 = vadd.f32 0.0, %v2889
      %v2891 = vpop.f32.mrb[0].mxu0
      %2892 = vmatprep.mubr.bf16.mxu0 0
      %2893 = vmatmul.mubr.bf16.gmra.mrb[0].mxu0 %v2739
      %v2894 = vpop.f32.mrb[0].mxu0
      %v2895 = vadd.f32 0.0, %v2894
      %v2896 = vpop.f32.mrb[0].mxu0
      %v2897 = vpop.f32.mrb[0].mxu0
      %v2898 = vadd.f32 0.0, %v2897
      %v2899 = vpop.f32.mrb[0].mxu0
      %2900 = vmatprep.mubr.bf16.mxu0 0
      %2901 = vmatmul.mubr.bf16.gmra.mrb[0].mxu0 %v2742
      %v2902 = vpop.f32.mrb[0].mxu0
      %v2903 = vadd.f32 0.0, %v2902
      %v2904 = vpop.f32.mrb[0].mxu0
      %v2905 = vpop.f32.mrb[0].mxu0
      %v2906 = vadd.f32 0.0, %v2905
      %v2907 = vpop.f32.mrb[0].mxu0
      %2908 = vmatprep.mubr.bf16.mxu0 0
      %2909 = vmatmul.mubr.bf16.gmra.mrb[0].mxu0 %v2745
      %v2910 = vpop.f32.mrb[0].mxu0
      %v2911 = vadd.f32 0.0, %v2910
      %v2912 = vpop.f32.mrb[0].mxu0
      %v2913 = vpop.f32.mrb[0].mxu0
      %v2914 = vadd.f32 0.0, %v2913
      %v2915 = vpop.f32.mrb[0].mxu0
      %2916 = vmatprep.mubr.bf16.mxu0 0
      %2917 = vmatmul.mubr.bf16.gmra.mrb[0].mxu0 %v2748
      %v2918 = vpop.f32.mrb[0].mxu0
      %v2919 = vadd.f32 0.0, %v2918
      %v2920 = vpop.f32.mrb[0].mxu0
      %v2921 = vpop.f32.mrb[0].mxu0
      %v2922 = vadd.f32 0.0, %v2921
      %v2923 = vpop.f32.mrb[0].mxu0
      %2924 = vmatprep.mubr.bf16.mxu0 0
      %2925 = vmatmul.mubr.bf16.gmra.mrb[0].mxu0 %v2751
      %v2926 = vpop.f32.mrb[0].mxu0
      %v2927 = vadd.f32 0.0, %v2926
      %v2928 = vpop.f32.mrb[0].mxu0
      %v2929 = vpop.f32.mrb[0].mxu0
      %v2930 = vadd.f32 0.0, %v2929
      %v2931 = vpop.f32.mrb[0].mxu0
      %2932 = vdwg.mxu0
      %v2933 = vadd.f32 %v2494, %v2791
      %v2934 = vadd.f32 %v2495, %v2794
      %v2935 = vadd.f32 %v2496, %v2799
      %v2936 = vadd.f32 %v2497, %v2802
      %v2937 = vadd.f32 %v2498, %v2807
      %v2938 = vadd.f32 %v2499, %v2810
      %v2939 = vadd.f32 %v2500, %v2815
      %v2940 = vadd.f32 %v2501, %v2818
      %v2941 = vadd.f32 %v2502, %v2823
      %v2942 = vadd.f32 %v2503, %v2826
      %v2943 = vadd.f32 %v2504, %v2831
      %v2944 = vadd.f32 %v2505, %v2834
      %v2945 = vadd.f32 %v2506, %v2839
      %v2946 = vadd.f32 %v2507, %v2842
      %v2947 = vadd.f32 %v2508, %v2847
      %v2948 = vadd.f32 %v2509, %v2850
      %v2949 = vadd.f32 %v2510, %v2855
      %v2950 = vadd.f32 %v2511, %v2858
      %v2951 = vadd.f32 %v2512, %v2863
      %v2952 = vadd.f32 %v2513, %v2866
      %v2953 = vadd.f32 %v2514, %v2871
      %v2954 = vadd.f32 %v2515, %v2874
      %v2955 = vadd.f32 %v2516, %v2879
      %v2956 = vadd.f32 %v2517, %v2882
      %v2957 = vadd.f32 %v2518, %v2887
      %v2958 = vadd.f32 %v2519, %v2890
      %v2959 = vadd.f32 %v2520, %v2895
      %v2960 = vadd.f32 %v2521, %v2898
      %v2961 = vadd.f32 %v2522, %v2903
      %v2962 = vadd.f32 %v2523, %v2906
      %v2963 = vadd.f32 %v2524, %v2911
      %v2964 = vadd.f32 %v2525, %v2914
      %v2965 = vadd.f32 %v2526, %v2919
      %v2966 = vadd.f32 %v2527, %v2922
      %v2967 = vadd.f32 %v2528, %v2927
      %v2968 = vadd.f32 %v2529, %v2930
      %v2969 = vld [vmem:[%s165 + $0xa0] sm:$0x3]
      %s2970 = scalar_lea.vmem %s1, 14
      %v2971 = vld [vmem:[%s2970] sm:$0x3]
      %v2973 = vunpack.c.l.b16 %v2969
      %v2974 = vpack.c.b16 %v2973, %v2973
      %vm2975 = vsmask.f32 5376
      %v2977 = vshrl.u32 %v2643, 16
      %v2979 = vrot.slane %v2977, 2
      %v2980 = vshll.u32 %v2643, 16
      %v2982 = vrot.slane %v2980, 3
      %v2983 = vor.u32 %v2979, %v2982
      %v2985 = vshrl.u32 %v2644, 16
      %v2987 = vrot.slane %v2985, 2
      %v2988 = vshll.u32 %v2644, 16
      %v2990 = vrot.slane %v2988, 3
      %v2991 = vor.u32 %v2987, %v2990
      %v2992 = vsel %vm2975, %v2983, %v2991
      %v2994 = vshrl.u32 %v2645, 16
      %v2996 = vrot.slane %v2994, 2
      %v2997 = vshll.u32 %v2645, 16
      %v2999 = vrot.slane %v2997, 3
      %v3000 = vor.u32 %v2996, %v2999
      %v3001 = vsel %vm2975, %v2991, %v3000
      %v3003 = vshrl.u32 %v2646, 16
      %v3005 = vrot.slane %v3003, 2
      %v3006 = vshll.u32 %v2646, 16
      %v3008 = vrot.slane %v3006, 3
      %v3009 = vor.u32 %v3005, %v3008
      %v3010 = vsel %vm2975, %v3000, %v3009
      %v3012 = vshrl.u32 %v2647, 16
      %v3014 = vrot.slane %v3012, 2
      %v3015 = vshll.u32 %v2647, 16
      %v3017 = vrot.slane %v3015, 3
      %v3018 = vor.u32 %v3014, %v3017
      %v3019 = vsel %vm2975, %v3009, %v3018
      %v3021 = vshrl.u32 %v2648, 16
      %v3023 = vrot.slane %v3021, 2
      %v3024 = vshll.u32 %v2648, 16
      %v3026 = vrot.slane %v3024, 3
      %v3027 = vor.u32 %v3023, %v3026
      %v3028 = vsel %vm2975, %v3018, %v3027
      %v3030 = vshrl.u32 %v2649, 16
      %v3032 = vrot.slane %v3030, 2
      %v3033 = vshll.u32 %v2649, 16
      %v3035 = vrot.slane %v3033, 3
      %v3036 = vor.u32 %v3032, %v3035
      %v3037 = vsel %vm2975, %v3027, %v3036
      %v3039 = vshrl.u32 %v2650, 16
      %v3041 = vrot.slane %v3039, 2
      %v3042 = vshll.u32 %v2650, 16
      %v3044 = vrot.slane %v3042, 3
      %v3045 = vor.u32 %v3041, %v3044
      %v3046 = vsel %vm2975, %v3036, %v3045
      %v3048 = vshrl.u32 %v2651, 16
      %v3050 = vrot.slane %v3048, 2
      %v3051 = vshll.u32 %v2651, 16
      %v3053 = vrot.slane %v3051, 3
      %v3054 = vor.u32 %v3050, %v3053
      %v3055 = vsel %vm2975, %v3045, %v3054
      %v3057 = vshrl.u32 %v2652, 16
      %v3059 = vrot.slane %v3057, 2
      %v3060 = vshll.u32 %v2652, 16
      %v3062 = vrot.slane %v3060, 3
      %v3063 = vor.u32 %v3059, %v3062
      %v3064 = vsel %vm2975, %v3054, %v3063
      %v3066 = vshrl.u32 %v2653, 16
      %v3068 = vrot.slane %v3066, 2
      %v3069 = vshll.u32 %v2653, 16
      %v3071 = vrot.slane %v3069, 3
      %v3072 = vor.u32 %v3068, %v3071
      %v3073 = vsel %vm2975, %v3063, %v3072
      %v3075 = vshrl.u32 %v2654, 16
      %v3077 = vrot.slane %v3075, 2
      %v3078 = vshll.u32 %v2654, 16
      %v3080 = vrot.slane %v3078, 3
      %v3081 = vor.u32 %v3077, %v3080
      %v3082 = vsel %vm2975, %v3072, %v3081
      %v3084 = vshrl.u32 %v2655, 16
      %v3086 = vrot.slane %v3084, 2
      %v3087 = vshll.u32 %v2655, 16
      %v3089 = vrot.slane %v3087, 3
      %v3090 = vor.u32 %v3086, %v3089
      %v3091 = vsel %vm2975, %v3081, %v3090
      %v3093 = vshrl.u32 %v2656, 16
      %v3095 = vrot.slane %v3093, 2
      %v3096 = vshll.u32 %v2656, 16
      %v3098 = vrot.slane %v3096, 3
      %v3099 = vor.u32 %v3095, %v3098
      %v3100 = vsel %vm2975, %v3090, %v3099
      %v3102 = vshrl.u32 %v2657, 16
      %v3104 = vrot.slane %v3102, 2
      %v3105 = vshll.u32 %v2657, 16
      %v3107 = vrot.slane %v3105, 3
      %v3108 = vor.u32 %v3104, %v3107
      %v3109 = vsel %vm2975, %v3099, %v3108
      %v3111 = vshrl.u32 %v2658, 16
      %v3113 = vrot.slane %v3111, 2
      %v3114 = vshll.u32 %v2658, 16
      %v3116 = vrot.slane %v3114, 3
      %v3117 = vor.u32 %v3113, %v3116
      %v3118 = vsel %vm2975, %v3108, %v3117
      %v3120 = vshrl.u32 %v2659, 16
      %v3122 = vrot.slane %v3120, 2
      %v3123 = vshll.u32 %v2659, 16
      %v3125 = vrot.slane %v3123, 3
      %v3126 = vor.u32 %v3122, %v3125
      %v3127 = vsel %vm2975, %v3117, %v3126
      %v3129 = vshrl.u32 %v2660, 16
      %v3131 = vrot.slane %v3129, 2
      %v3132 = vshll.u32 %v2660, 16
      %v3134 = vrot.slane %v3132, 3
      %v3135 = vor.u32 %v3131, %v3134
      %v3136 = vsel %vm2975, %v3126, %v3135
      %v3138 = vshrl.u32 %v2974, 16
      %v3140 = vrot.slane %v3138, 2
      %v3141 = vshll.u32 %v2974, 16
      %v3143 = vrot.slane %v3141, 3
      %v3144 = vor.u32 %v3140, %v3143
      %v3145 = vsel %vm2975, %v3135, %v3144
      %v3147 = vsel %vm446, %v2992, 0
      %v3150 = vsel %vm446, %v3001, 0
      %v3153 = vsel %vm446, %v3010, 0
      %v3156 = vsel %vm446, %v3019, 0
      %v3159 = vsel %vm446, %v3028, 0
      %v3162 = vsel %vm446, %v3037, 0
      %v3165 = vsel %vm446, %v3046, 0
      %v3168 = vsel %vm446, %v3055, 0
      %v3171 = vsel %vm446, %v3064, 0
      %v3174 = vsel %vm446, %v3073, 0
      %v3177 = vsel %vm446, %v3082, 0
      %v3180 = vsel %vm446, %v3091, 0
      %v3183 = vsel %vm446, %v3100, 0
      %v3186 = vsel %vm446, %v3109, 0
      %v3189 = vsel %vm446, %v3118, 0
      %v3192 = vsel %vm446, %v3127, 0
      %v3195 = vsel %vm446, %v3136, 0
      %v3198 = vsel %vm446, %v3145, 0
      %v3201 = vsel %vm501, %v2971, 0
      %3203 = vmatprep.subr.bf16.mxu0 0
      %3204 = vmatpush1.bf16.msra.mxu0 %v3201
      %3205 = vmatprep.subr.bf16.mxu0 0
      %3206 = vmatpush1.bf16.msra.mxu0 0
      %3207 = vmatprep.subr.bf16.mxu0 0
      %3208 = vmatpush1.bf16.msra.mxu0 0
      %3209 = vmatprep.subr.bf16.mxu0 0
      %3210 = vmatpush1.bf16.msra.mxu0 0
      %3211 = vmatprep.subr.bf16.mxu0 0
      %3212 = vmatpush1.bf16.msra.mxu0 0
      %3213 = vmatprep.subr.bf16.mxu0 0
      %3214 = vmatpush1.bf16.msra.mxu0 0
      %3215 = vmatprep.subr.bf16.mxu0 0
      %3216 = vmatpush1.bf16.msra.mxu0 0
      %3217 = vmatprep.subr.bf16.mxu0 0
      %3218 = vmatpush1.bf16.msra.mxu0 0
      %3219 = vmatprep.subr.bf16.mxu0 0
      %3220 = vmatpush1.bf16.msra.mxu0 0
      %3221 = vmatprep.subr.bf16.mxu0 0
      %3222 = vmatpush1.bf16.msra.mxu0 0
      %3223 = vmatprep.subr.bf16.mxu0 0
      %3224 = vmatpush1.bf16.msra.mxu0 0
      %3225 = vmatprep.subr.bf16.mxu0 0
      %3226 = vmatpush1.bf16.msra.mxu0 0
      %3227 = vmatprep.subr.bf16.mxu0 0
      %3228 = vmatpush1.bf16.msra.mxu0 0
      %3229 = vmatprep.subr.bf16.mxu0 0
      %3230 = vmatpush1.bf16.msra.mxu0 0
      %3231 = vmatprep.subr.bf16.mxu0 0
      %3232 = vmatpush1.bf16.msra.mxu0 0
      %3233 = vmatprep.subr.bf16.mxu0 0
      %3234 = vmatpush1.bf16.msra.mxu0 0
      %3235 = vmatprep.mubr.bf16.mxu0 0
      %3236 = vmatmul.mubr.bf16.gmra.mrb[0].mxu0 %v3147
      %v3237 = vpop.f32.mrb[0].mxu0
      %v3238 = vadd.f32 0.0, %v3237
      %v3239 = vpop.f32.mrb[0].mxu0
      %v3240 = vpop.f32.mrb[0].mxu0
      %v3241 = vadd.f32 0.0, %v3240
      %v3242 = vpop.f32.mrb[0].mxu0
      %3243 = vmatprep.mubr.bf16.mxu0 0
      %3244 = vmatmul.mubr.bf16.gmra.mrb[0].mxu0 %v3150
      %v3245 = vpop.f32.mrb[0].mxu0
      %v3246 = vadd.f32 0.0, %v3245
      %v3247 = vpop.f32.mrb[0].mxu0
      %v3248 = vpop.f32.mrb[0].mxu0
      %v3249 = vadd.f32 0.0, %v3248
      %v3250 = vpop.f32.mrb[0].mxu0
      %3251 = vmatprep.mubr.bf16.mxu0 0
      %3252 = vmatmul.mubr.bf16.gmra.mrb[0].mxu0 %v3153
      %v3253 = vpop.f32.mrb[0].mxu0
      %v3254 = vadd.f32 0.0, %v3253
      %v3255 = vpop.f32.mrb[0].mxu0
      %v3256 = vpop.f32.mrb[0].mxu0
      %v3257 = vadd.f32 0.0, %v3256
      %v3258 = vpop.f32.mrb[0].mxu0
      %3259 = vmatprep.mubr.bf16.mxu0 0
      %3260 = vmatmul.mubr.bf16.gmra.mrb[0].mxu0 %v3156
      %v3261 = vpop.f32.mrb[0].mxu0
      %v3262 = vadd.f32 0.0, %v3261
      %v3263 = vpop.f32.mrb[0].mxu0
      %v3264 = vpop.f32.mrb[0].mxu0
      %v3265 = vadd.f32 0.0, %v3264
      %v3266 = vpop.f32.mrb[0].mxu0
      %3267 = vmatprep.mubr.bf16.mxu0 0
      %3268 = vmatmul.mubr.bf16.gmra.mrb[0].mxu0 %v3159
      %v3269 = vpop.f32.mrb[0].mxu0
      %v3270 = vadd.f32 0.0, %v3269
      %v3271 = vpop.f32.mrb[0].mxu0
      %v3272 = vpop.f32.mrb[0].mxu0
      %v3273 = vadd.f32 0.0, %v3272
      %v3274 = vpop.f32.mrb[0].mxu0
      %3275 = vmatprep.mubr.bf16.mxu0 0
      %3276 = vmatmul.mubr.bf16.gmra.mrb[0].mxu0 %v3162
      %v3277 = vpop.f32.mrb[0].mxu0
      %v3278 = vadd.f32 0.0, %v3277
      %v3279 = vpop.f32.mrb[0].mxu0
      %v3280 = vpop.f32.mrb[0].mxu0
      %v3281 = vadd.f32 0.0, %v3280
      %v3282 = vpop.f32.mrb[0].mxu0
      %3283 = vmatprep.mubr.bf16.mxu0 0
      %3284 = vmatmul.mubr.bf16.gmra.mrb[0].mxu0 %v3165
      %v3285 = vpop.f32.mrb[0].mxu0
      %v3286 = vadd.f32 0.0, %v3285
      %v3287 = vpop.f32.mrb[0].mxu0
      %v3288 = vpop.f32.mrb[0].mxu0
      %v3289 = vadd.f32 0.0, %v3288
      %v3290 = vpop.f32.mrb[0].mxu0
      %3291 = vmatprep.mubr.bf16.mxu0 0
      %3292 = vmatmul.mubr.bf16.gmra.mrb[0].mxu0 %v3168
      %v3293 = vpop.f32.mrb[0].mxu0
      %v3294 = vadd.f32 0.0, %v3293
      %v3295 = vpop.f32.mrb[0].mxu0
      %v3296 = vpop.f32.mrb[0].mxu0
      %v3297 = vadd.f32 0.0, %v3296
      %v3298 = vpop.f32.mrb[0].mxu0
      %3299 = vmatprep.mubr.bf16.mxu0 0
      %3300 = vmatmul.mubr.bf16.gmra.mrb[0].mxu0 %v3171
      %v3301 = vpop.f32.mrb[0].mxu0
      %v3302 = vadd.f32 0.0, %v3301
      %v3303 = vpop.f32.mrb[0].mxu0
      %v3304 = vpop.f32.mrb[0].mxu0
      %v3305 = vadd.f32 0.0, %v3304
      %v3306 = vpop.f32.mrb[0].mxu0
      %3307 = vmatprep.mubr.bf16.mxu0 0
      %3308 = vmatmul.mubr.bf16.gmra.mrb[0].mxu0 %v3174
      %v3309 = vpop.f32.mrb[0].mxu0
      %v3310 = vadd.f32 0.0, %v3309
      %v3311 = vpop.f32.mrb[0].mxu0
      %v3312 = vpop.f32.mrb[0].mxu0
      %v3313 = vadd.f32 0.0, %v3312
      %v3314 = vpop.f32.mrb[0].mxu0
      %3315 = vmatprep.mubr.bf16.mxu0 0
      %3316 = vmatmul.mubr.bf16.gmra.mrb[0].mxu0 %v3177
      %v3317 = vpop.f32.mrb[0].mxu0
      %v3318 = vadd.f32 0.0, %v3317
      %v3319 = vpop.f32.mrb[0].mxu0
      %v3320 = vpop.f32.mrb[0].mxu0
      %v3321 = vadd.f32 0.0, %v3320
      %v3322 = vpop.f32.mrb[0].mxu0
      %3323 = vmatprep.mubr.bf16.mxu0 0
      %3324 = vmatmul.mubr.bf16.gmra.mrb[0].mxu0 %v3180
      %v3325 = vpop.f32.mrb[0].mxu0
      %v3326 = vadd.f32 0.0, %v3325
      %v3327 = vpop.f32.mrb[0].mxu0
      %v3328 = vpop.f32.mrb[0].mxu0
      %v3329 = vadd.f32 0.0, %v3328
      %v3330 = vpop.f32.mrb[0].mxu0
      %3331 = vmatprep.mubr.bf16.mxu0 0
      %3332 = vmatmul.mubr.bf16.gmra.mrb[0].mxu0 %v3183
      %v3333 = vpop.f32.mrb[0].mxu0
      %v3334 = vadd.f32 0.0, %v3333
      %v3335 = vpop.f32.mrb[0].mxu0
      %v3336 = vpop.f32.mrb[0].mxu0
      %v3337 = vadd.f32 0.0, %v3336
      %v3338 = vpop.f32.mrb[0].mxu0
      %3339 = vmatprep.mubr.bf16.mxu0 0
      %3340 = vmatmul.mubr.bf16.gmra.mrb[0].mxu0 %v3186
      %v3341 = vpop.f32.mrb[0].mxu0
      %v3342 = vadd.f32 0.0, %v3341
      %v3343 = vpop.f32.mrb[0].mxu0
      %v3344 = vpop.f32.mrb[0].mxu0
      %v3345 = vadd.f32 0.0, %v3344
      %v3346 = vpop.f32.mrb[0].mxu0
      %3347 = vmatprep.mubr.bf16.mxu0 0
      %3348 = vmatmul.mubr.bf16.gmra.mrb[0].mxu0 %v3189
      %v3349 = vpop.f32.mrb[0].mxu0
      %v3350 = vadd.f32 0.0, %v3349
      %v3351 = vpop.f32.mrb[0].mxu0
      %v3352 = vpop.f32.mrb[0].mxu0
      %v3353 = vadd.f32 0.0, %v3352
      %v3354 = vpop.f32.mrb[0].mxu0
      %3355 = vmatprep.mubr.bf16.mxu0 0
      %3356 = vmatmul.mubr.bf16.gmra.mrb[0].mxu0 %v3192
      %v3357 = vpop.f32.mrb[0].mxu0
      %v3358 = vadd.f32 0.0, %v3357
      %v3359 = vpop.f32.mrb[0].mxu0
      %v3360 = vpop.f32.mrb[0].mxu0
      %v3361 = vadd.f32 0.0, %v3360
      %v3362 = vpop.f32.mrb[0].mxu0
      %3363 = vmatprep.mubr.bf16.mxu0 0
      %3364 = vmatmul.mubr.bf16.gmra.mrb[0].mxu0 %v3195
      %v3365 = vpop.f32.mrb[0].mxu0
      %v3366 = vadd.f32 0.0, %v3365
      %v3367 = vpop.f32.mrb[0].mxu0
      %v3368 = vpop.f32.mrb[0].mxu0
      %v3369 = vadd.f32 0.0, %v3368
      %v3370 = vpop.f32.mrb[0].mxu0
      %3371 = vmatprep.mubr.bf16.mxu0 0
      %3372 = vmatmul.mubr.bf16.gmra.mrb[0].mxu0 %v3198
      %v3373 = vpop.f32.mrb[0].mxu0
      %v3374 = vadd.f32 0.0, %v3373
      %v3375 = vpop.f32.mrb[0].mxu0
      %v3376 = vpop.f32.mrb[0].mxu0
      %v3377 = vadd.f32 0.0, %v3376
      %v3378 = vpop.f32.mrb[0].mxu0
      %3379 = vdwg.mxu0
      %v3380 = vadd.f32 %v2933, %v3238
      %v3381 = vadd.f32 %v2934, %v3241
      %v3382 = vadd.f32 %v2935, %v3246
      %v3383 = vadd.f32 %v2936, %v3249
      %v3384 = vadd.f32 %v2937, %v3254
      %v3385 = vadd.f32 %v2938, %v3257
      %v3386 = vadd.f32 %v2939, %v3262
      %v3387 = vadd.f32 %v2940, %v3265
      %v3388 = vadd.f32 %v2941, %v3270
      %v3389 = vadd.f32 %v2942, %v3273
      %v3390 = vadd.f32 %v2943, %v3278
      %v3391 = vadd.f32 %v2944, %v3281
      %v3392 = vadd.f32 %v2945, %v3286
      %v3393 = vadd.f32 %v2946, %v3289
      %v3394 = vadd.f32 %v2947, %v3294
      %v3395 = vadd.f32 %v2948, %v3297
      %v3396 = vadd.f32 %v2949, %v3302
      %v3397 = vadd.f32 %v2950, %v3305
      %v3398 = vadd.f32 %v2951, %v3310
      %v3399 = vadd.f32 %v2952, %v3313
      %v3400 = vadd.f32 %v2953, %v3318
      %v3401 = vadd.f32 %v2954, %v3321
      %v3402 = vadd.f32 %v2955, %v3326
      %v3403 = vadd.f32 %v2956, %v3329
      %v3404 = vadd.f32 %v2957, %v3334
      %v3405 = vadd.f32 %v2958, %v3337
      %v3406 = vadd.f32 %v2959, %v3342
      %v3407 = vadd.f32 %v2960, %v3345
      %v3408 = vadd.f32 %v2961, %v3350
      %v3409 = vadd.f32 %v2962, %v3353
      %v3410 = vadd.f32 %v2963, %v3358
      %v3411 = vadd.f32 %v2964, %v3361
      %v3412 = vadd.f32 %v2965, %v3366
      %v3413 = vadd.f32 %v2966, %v3369
      %v3414 = vadd.f32 %v2967, %v3374
      %v3415 = vadd.f32 %v2968, %v3377
      %v3416 = vld [vmem:[%s165 + $0x10] sm:$0x8]
      %s3417 = scalar_lea.vmem %s1, 16
      %v3418 = vld [vmem:[%s3417] sm:$0x3]
      %v3420 = vunpack.c.l.b16 %v3416
      %v3421 = vpack.c.b16 %v2607, %v3420
      %vm3422 = vcmask 1044480
      %v3423 = vrot.slane %v3421, 3
      %v3424 = vrot.slane %v2644, 3
      %v3425 = vsel %vm3422, %v3423, %v3424
      %v3426 = vrot.slane %v2645, 3
      %v3427 = vsel %vm3422, %v3424, %v3426
      %v3428 = vrot.slane %v2646, 3
      %v3429 = vsel %vm3422, %v3426, %v3428
      %v3430 = vrot.slane %v2647, 3
      %v3431 = vsel %vm3422, %v3428, %v3430
      %v3432 = vrot.slane %v2648, 3
      %v3433 = vsel %vm3422, %v3430, %v3432
      %v3434 = vrot.slane %v2649, 3
      %v3435 = vsel %vm3422, %v3432, %v3434
      %v3436 = vrot.slane %v2650, 3
      %v3437 = vsel %vm3422, %v3434, %v3436
      %v3438 = vrot.slane %v2651, 3
      %v3439 = vsel %vm3422, %v3436, %v3438
      %v3440 = vrot.slane %v2652, 3
      %v3441 = vsel %vm3422, %v3438, %v3440
      %v3442 = vrot.slane %v2653, 3
      %v3443 = vsel %vm3422, %v3440, %v3442
      %v3444 = vrot.slane %v2654, 3
      %v3445 = vsel %vm3422, %v3442, %v3444
      %v3446 = vrot.slane %v2655, 3
      %v3447 = vsel %vm3422, %v3444, %v3446
      %v3448 = vrot.slane %v2656, 3
      %v3449 = vsel %vm3422, %v3446, %v3448
      %v3450 = vrot.slane %v2657, 3
      %v3451 = vsel %vm3422, %v3448, %v3450
      %v3452 = vrot.slane %v2658, 3
      %v3453 = vsel %vm3422, %v3450, %v3452
      %v3454 = vrot.slane %v2659, 3
      %v3455 = vsel %vm3422, %v3452, %v3454
      %v3456 = vrot.slane %v2660, 3
      %v3457 = vsel %vm3422, %v3454, %v3456
      %v3458 = vrot.slane %v2974, 3
      %v3459 = vsel %vm3422, %v3456, %v3458
      %v3461 = vsel %vm446, %v3425, 0
      %v3464 = vsel %vm446, %v3427, 0
      %v3467 = vsel %vm446, %v3429, 0
      %v3470 = vsel %vm446, %v3431, 0
      %v3473 = vsel %vm446, %v3433, 0
      %v3476 = vsel %vm446, %v3435, 0
      %v3479 = vsel %vm446, %v3437, 0
      %v3482 = vsel %vm446, %v3439, 0
      %v3485 = vsel %vm446, %v3441, 0
      %v3488 = vsel %vm446, %v3443, 0
      %v3491 = vsel %vm446, %v3445, 0
      %v3494 = vsel %vm446, %v3447, 0
      %v3497 = vsel %vm446, %v3449, 0
      %v3500 = vsel %vm446, %v3451, 0
      %v3503 = vsel %vm446, %v3453, 0
      %v3506 = vsel %vm446, %v3455, 0
      %v3509 = vsel %vm446, %v3457, 0
      %v3512 = vsel %vm446, %v3459, 0
      %v3515 = vsel %vm501, %v3418, 0
      %3517 = vmatprep.subr.bf16.mxu0 0
      %3518 = vmatpush1.bf16.msra.mxu0 %v3515
      %3519 = vmatprep.subr.bf16.mxu0 0
      %3520 = vmatpush1.bf16.msra.mxu0 0
      %3521 = vmatprep.subr.bf16.mxu0 0
      %3522 = vmatpush1.bf16.msra.mxu0 0
      %3523 = vmatprep.subr.bf16.mxu0 0
      %3524 = vmatpush1.bf16.msra.mxu0 0
      %3525 = vmatprep.subr.bf16.mxu0 0
      %3526 = vmatpush1.bf16.msra.mxu0 0
      %3527 = vmatprep.subr.bf16.mxu0 0
      %3528 = vmatpush1.bf16.msra.mxu0 0
      %3529 = vmatprep.subr.bf16.mxu0 0
      %3530 = vmatpush1.bf16.msra.mxu0 0
      %3531 = vmatprep.subr.bf16.mxu0 0
      %3532 = vmatpush1.bf16.msra.mxu0 0
      %3533 = vmatprep.subr.bf16.mxu0 0
      %3534 = vmatpush1.bf16.msra.mxu0 0
      %3535 = vmatprep.subr.bf16.mxu0 0
      %3536 = vmatpush1.bf16.msra.mxu0 0
      %3537 = vmatprep.subr.bf16.mxu0 0
      %3538 = vmatpush1.bf16.msra.mxu0 0
      %3539 = vmatprep.subr.bf16.mxu0 0
      %3540 = vmatpush1.bf16.msra.mxu0 0
      %3541 = vmatprep.subr.bf16.mxu0 0
      %3542 = vmatpush1.bf16.msra.mxu0 0
      %3543 = vmatprep.subr.bf16.mxu0 0
      %3544 = vmatpush1.bf16.msra.mxu0 0
      %3545 = vmatprep.subr.bf16.mxu0 0
      %3546 = vmatpush1.bf16.msra.mxu0 0
      %3547 = vmatprep.subr.bf16.mxu0 0
      %3548 = vmatpush1.bf16.msra.mxu0 0
      %3549 = vmatprep.mubr.bf16.mxu0 0
      %3550 = vmatmul.mubr.bf16.gmra.mrb[0].mxu0 %v3461
      %v3551 = vpop.f32.mrb[0].mxu0
      %v3552 = vadd.f32 0.0, %v3551
      %v3553 = vpop.f32.mrb[0].mxu0
      %v3554 = vpop.f32.mrb[0].mxu0
      %v3555 = vadd.f32 0.0, %v3554
      %v3556 = vpop.f32.mrb[0].mxu0
      %3557 = vmatprep.mubr.bf16.mxu0 0
      %3558 = vmatmul.mubr.bf16.gmra.mrb[0].mxu0 %v3464
      %v3559 = vpop.f32.mrb[0].mxu0
      %v3560 = vadd.f32 0.0, %v3559
      %v3561 = vpop.f32.mrb[0].mxu0
      %v3562 = vpop.f32.mrb[0].mxu0
      %v3563 = vadd.f32 0.0, %v3562
      %v3564 = vpop.f32.mrb[0].mxu0
      %3565 = vmatprep.mubr.bf16.mxu0 0
      %3566 = vmatmul.mubr.bf16.gmra.mrb[0].mxu0 %v3467
      %v3567 = vpop.f32.mrb[0].mxu0
      %v3568 = vadd.f32 0.0, %v3567
      %v3569 = vpop.f32.mrb[0].mxu0
      %v3570 = vpop.f32.mrb[0].mxu0
      %v3571 = vadd.f32 0.0, %v3570
      %v3572 = vpop.f32.mrb[0].mxu0
      %3573 = vmatprep.mubr.bf16.mxu0 0
      %3574 = vmatmul.mubr.bf16.gmra.mrb[0].mxu0 %v3470
      %v3575 = vpop.f32.mrb[0].mxu0
      %v3576 = vadd.f32 0.0, %v3575
      %v3577 = vpop.f32.mrb[0].mxu0
      %v3578 = vpop.f32.mrb[0].mxu0
      %v3579 = vadd.f32 0.0, %v3578
      %v3580 = vpop.f32.mrb[0].mxu0
      %3581 = vmatprep.mubr.bf16.mxu0 0
      %3582 = vmatmul.mubr.bf16.gmra.mrb[0].mxu0 %v3473
      %v3583 = vpop.f32.mrb[0].mxu0
      %v3584 = vadd.f32 0.0, %v3583
      %v3585 = vpop.f32.mrb[0].mxu0
      %v3586 = vpop.f32.mrb[0].mxu0
      %v3587 = vadd.f32 0.0, %v3586
      %v3588 = vpop.f32.mrb[0].mxu0
      %3589 = vmatprep.mubr.bf16.mxu0 0
      %3590 = vmatmul.mubr.bf16.gmra.mrb[0].mxu0 %v3476
      %v3591 = vpop.f32.mrb[0].mxu0
      %v3592 = vadd.f32 0.0, %v3591
      %v3593 = vpop.f32.mrb[0].mxu0
      %v3594 = vpop.f32.mrb[0].mxu0
      %v3595 = vadd.f32 0.0, %v3594
      %v3596 = vpop.f32.mrb[0].mxu0
      %3597 = vmatprep.mubr.bf16.mxu0 0
      %3598 = vmatmul.mubr.bf16.gmra.mrb[0].mxu0 %v3479
      %v3599 = vpop.f32.mrb[0].mxu0
      %v3600 = vadd.f32 0.0, %v3599
      %v3601 = vpop.f32.mrb[0].mxu0
      %v3602 = vpop.f32.mrb[0].mxu0
      %v3603 = vadd.f32 0.0, %v3602
      %v3604 = vpop.f32.mrb[0].mxu0
      %3605 = vmatprep.mubr.bf16.mxu0 0
      %3606 = vmatmul.mubr.bf16.gmra.mrb[0].mxu0 %v3482
      %v3607 = vpop.f32.mrb[0].mxu0
      %v3608 = vadd.f32 0.0, %v3607
      %v3609 = vpop.f32.mrb[0].mxu0
      %v3610 = vpop.f32.mrb[0].mxu0
      %v3611 = vadd.f32 0.0, %v3610
      %v3612 = vpop.f32.mrb[0].mxu0
      %3613 = vmatprep.mubr.bf16.mxu0 0
      %3614 = vmatmul.mubr.bf16.gmra.mrb[0].mxu0 %v3485
      %v3615 = vpop.f32.mrb[0].mxu0
      %v3616 = vadd.f32 0.0, %v3615
      %v3617 = vpop.f32.mrb[0].mxu0
      %v3618 = vpop.f32.mrb[0].mxu0
      %v3619 = vadd.f32 0.0, %v3618
      %v3620 = vpop.f32.mrb[0].mxu0
      %3621 = vmatprep.mubr.bf16.mxu0 0
      %3622 = vmatmul.mubr.bf16.gmra.mrb[0].mxu0 %v3488
      %v3623 = vpop.f32.mrb[0].mxu0
      %v3624 = vadd.f32 0.0, %v3623
      %v3625 = vpop.f32.mrb[0].mxu0
      %v3626 = vpop.f32.mrb[0].mxu0
      %v3627 = vadd.f32 0.0, %v3626
      %v3628 = vpop.f32.mrb[0].mxu0
      %3629 = vmatprep.mubr.bf16.mxu0 0
      %3630 = vmatmul.mubr.bf16.gmra.mrb[0].mxu0 %v3491
      %v3631 = vpop.f32.mrb[0].mxu0
      %v3632 = vadd.f32 0.0, %v3631
      %v3633 = vpop.f32.mrb[0].mxu0
      %v3634 = vpop.f32.mrb[0].mxu0
      %v3635 = vadd.f32 0.0, %v3634
      %v3636 = vpop.f32.mrb[0].mxu0
      %3637 = vmatprep.mubr.bf16.mxu0 0
      %3638 = vmatmul.mubr.bf16.gmra.mrb[0].mxu0 %v3494
      %v3639 = vpop.f32.mrb[0].mxu0
      %v3640 = vadd.f32 0.0, %v3639
      %v3641 = vpop.f32.mrb[0].mxu0
      %v3642 = vpop.f32.mrb[0].mxu0
      %v3643 = vadd.f32 0.0, %v3642
      %v3644 = vpop.f32.mrb[0].mxu0
      %3645 = vmatprep.mubr.bf16.mxu0 0
      %3646 = vmatmul.mubr.bf16.gmra.mrb[0].mxu0 %v3497
      %v3647 = vpop.f32.mrb[0].mxu0
      %v3648 = vadd.f32 0.0, %v3647
      %v3649 = vpop.f32.mrb[0].mxu0
      %v3650 = vpop.f32.mrb[0].mxu0
      %v3651 = vadd.f32 0.0, %v3650
      %v3652 = vpop.f32.mrb[0].mxu0
      %3653 = vmatprep.mubr.bf16.mxu0 0
      %3654 = vmatmul.mubr.bf16.gmra.mrb[0].mxu0 %v3500
      %v3655 = vpop.f32.mrb[0].mxu0
      %v3656 = vadd.f32 0.0, %v3655
      %v3657 = vpop.f32.mrb[0].mxu0
      %v3658 = vpop.f32.mrb[0].mxu0
      %v3659 = vadd.f32 0.0, %v3658
      %v3660 = vpop.f32.mrb[0].mxu0
      %3661 = vmatprep.mubr.bf16.mxu0 0
      %3662 = vmatmul.mubr.bf16.gmra.mrb[0].mxu0 %v3503
      %v3663 = vpop.f32.mrb[0].mxu0
      %v3664 = vadd.f32 0.0, %v3663
      %v3665 = vpop.f32.mrb[0].mxu0
      %v3666 = vpop.f32.mrb[0].mxu0
      %v3667 = vadd.f32 0.0, %v3666
      %v3668 = vpop.f32.mrb[0].mxu0
      %3669 = vmatprep.mubr.bf16.mxu0 0
      %3670 = vmatmul.mubr.bf16.gmra.mrb[0].mxu0 %v3506
      %v3671 = vpop.f32.mrb[0].mxu0
      %v3672 = vadd.f32 0.0, %v3671
      %v3673 = vpop.f32.mrb[0].mxu0
      %v3674 = vpop.f32.mrb[0].mxu0
      %v3675 = vadd.f32 0.0, %v3674
      %v3676 = vpop.f32.mrb[0].mxu0
      %3677 = vmatprep.mubr.bf16.mxu0 0
      %3678 = vmatmul.mubr.bf16.gmra.mrb[0].mxu0 %v3509
      %v3679 = vpop.f32.mrb[0].mxu0
      %v3680 = vadd.f32 0.0, %v3679
      %v3681 = vpop.f32.mrb[0].mxu0
      %v3682 = vpop.f32.mrb[0].mxu0
      %v3683 = vadd.f32 0.0, %v3682
      %v3684 = vpop.f32.mrb[0].mxu0
      %3685 = vmatprep.mubr.bf16.mxu0 0
      %3686 = vmatmul.mubr.bf16.gmra.mrb[0].mxu0 %v3512
      %v3687 = vpop.f32.mrb[0].mxu0
      %v3688 = vadd.f32 0.0, %v3687
      %v3689 = vpop.f32.mrb[0].mxu0
      %v3690 = vpop.f32.mrb[0].mxu0
      %v3691 = vadd.f32 0.0, %v3690
      %v3692 = vpop.f32.mrb[0].mxu0
      %3693 = vdwg.mxu0
      %v3694 = vadd.f32 %v3380, %v3552
      %v3695 = vadd.f32 %v3381, %v3555
      %v3696 = vadd.f32 %v3382, %v3560
      %v3697 = vadd.f32 %v3383, %v3563
      %v3698 = vadd.f32 %v3384, %v3568
      %v3699 = vadd.f32 %v3385, %v3571
      %v3700 = vadd.f32 %v3386, %v3576
      %v3701 = vadd.f32 %v3387, %v3579
      %v3702 = vadd.f32 %v3388, %v3584
      %v3703 = vadd.f32 %v3389, %v3587
      %v3704 = vadd.f32 %v3390, %v3592
      %v3705 = vadd.f32 %v3391, %v3595
      %v3706 = vadd.f32 %v3392, %v3600
      %v3707 = vadd.f32 %v3393, %v3603
      %v3708 = vadd.f32 %v3394, %v3608
      %v3709 = vadd.f32 %v3395, %v3611
      %v3710 = vadd.f32 %v3396, %v3616
      %v3711 = vadd.f32 %v3397, %v3619
      %v3712 = vadd.f32 %v3398, %v3624
      %v3713 = vadd.f32 %v3399, %v3627
      %v3714 = vadd.f32 %v3400, %v3632
      %v3715 = vadd.f32 %v3401, %v3635
      %v3716 = vadd.f32 %v3402, %v3640
      %v3717 = vadd.f32 %v3403, %v3643
      %v3718 = vadd.f32 %v3404, %v3648
      %v3719 = vadd.f32 %v3405, %v3651
      %v3720 = vadd.f32 %v3406, %v3656
      %v3721 = vadd.f32 %v3407, %v3659
      %v3722 = vadd.f32 %v3408, %v3664
      %v3723 = vadd.f32 %v3409, %v3667
      %v3724 = vadd.f32 %v3410, %v3672
      %v3725 = vadd.f32 %v3411, %v3675
      %v3726 = vadd.f32 %v3412, %v3680
      %v3727 = vadd.f32 %v3413, %v3683
      %v3728 = vadd.f32 %v3414, %v3688
      %v3729 = vadd.f32 %v3415, %v3691
      %v3730 = vld [vmem:[%s2] sm:$0x1]
      %v3732 = vlaneseq
      %v3733 = vshrl.u32 %v3732, 7
      %v3734 = vsub.s32 0, %v3733
      %v3735 = vrot.slane %v3730, %v3734
      %v3737 = vadd.f32 %v3694, %v3735
      %v3738 = vadd.f32 %v3695, %v3735
      %v3739 = vadd.f32 %v3696, %v3735
      %v3740 = vadd.f32 %v3697, %v3735
      %v3741 = vadd.f32 %v3698, %v3735
      %v3742 = vadd.f32 %v3699, %v3735
      %v3743 = vadd.f32 %v3700, %v3735
      %v3744 = vadd.f32 %v3701, %v3735
      %v3745 = vadd.f32 %v3702, %v3735
      %v3746 = vadd.f32 %v3703, %v3735
      %v3747 = vadd.f32 %v3704, %v3735
      %v3748 = vadd.f32 %v3705, %v3735
      %v3749 = vadd.f32 %v3706, %v3735
      %v3750 = vadd.f32 %v3707, %v3735
      %v3751 = vadd.f32 %v3708, %v3735
      %v3752 = vadd.f32 %v3709, %v3735
      %v3753 = vadd.f32 %v3710, %v3735
      %v3754 = vadd.f32 %v3711, %v3735
      %v3755 = vadd.f32 %v3712, %v3735
      %v3756 = vadd.f32 %v3713, %v3735
      %v3757 = vadd.f32 %v3714, %v3735
      %v3758 = vadd.f32 %v3715, %v3735
      %v3759 = vadd.f32 %v3716, %v3735
      %v3760 = vadd.f32 %v3717, %v3735
      %v3761 = vadd.f32 %v3718, %v3735
      %v3762 = vadd.f32 %v3719, %v3735
      %v3763 = vadd.f32 %v3720, %v3735
      %v3764 = vadd.f32 %v3721, %v3735
      %v3765 = vadd.f32 %v3722, %v3735
      %v3766 = vadd.f32 %v3723, %v3735
      %v3767 = vadd.f32 %v3724, %v3735
      %v3768 = vadd.f32 %v3725, %v3735
      %v3769 = vadd.f32 %v3726, %v3735
      %v3770 = vadd.f32 %v3727, %v3735
      %v3771 = vadd.f32 %v3728, %v3735
      %v3772 = vadd.f32 %v3729, %v3735
      %v3773 = vmax.f32 %v3737, 0.0
      %v3774 = vmax.f32 %v3738, 0.0
      %v3775 = vmax.f32 %v3739, 0.0
      %v3776 = vmax.f32 %v3740, 0.0
      %v3777 = vmax.f32 %v3741, 0.0
      %v3778 = vmax.f32 %v3742, 0.0
      %v3779 = vmax.f32 %v3743, 0.0
      %v3780 = vmax.f32 %v3744, 0.0
      %v3781 = vmax.f32 %v3745, 0.0
      %v3782 = vmax.f32 %v3746, 0.0
      %v3783 = vmax.f32 %v3747, 0.0
      %v3784 = vmax.f32 %v3748, 0.0
      %v3785 = vmax.f32 %v3749, 0.0
      %v3786 = vmax.f32 %v3750, 0.0
      %v3787 = vmax.f32 %v3751, 0.0
      %v3788 = vmax.f32 %v3752, 0.0
      %v3789 = vmax.f32 %v3753, 0.0
      %v3790 = vmax.f32 %v3754, 0.0
      %v3791 = vmax.f32 %v3755, 0.0
      %v3792 = vmax.f32 %v3756, 0.0
      %v3793 = vmax.f32 %v3757, 0.0
      %v3794 = vmax.f32 %v3758, 0.0
      %v3795 = vmax.f32 %v3759, 0.0
      %v3796 = vmax.f32 %v3760, 0.0
      %v3797 = vmax.f32 %v3761, 0.0
      %v3798 = vmax.f32 %v3762, 0.0
      %v3799 = vmax.f32 %v3763, 0.0
      %v3800 = vmax.f32 %v3764, 0.0
      %v3801 = vmax.f32 %v3765, 0.0
      %v3802 = vmax.f32 %v3766, 0.0
      %v3803 = vmax.f32 %v3767, 0.0
      %v3804 = vmax.f32 %v3768, 0.0
      %v3805 = vmax.f32 %v3769, 0.0
      %v3806 = vmax.f32 %v3770, 0.0
      %v3807 = vmax.f32 %v3771, 0.0
      %v3808 = vmax.f32 %v3772, 0.0
      %v3809 = vpack.c.bf16 %v3774, %v3773
      %v3810 = vpack.c.bf16 %v3776, %v3775
      %v3811 = vpack.c.bf16 %v3778, %v3777
      %v3812 = vpack.c.bf16 %v3780, %v3779
      %v3813 = vpack.c.bf16 %v3782, %v3781
      %v3814 = vpack.c.bf16 %v3784, %v3783
      %v3815 = vpack.c.bf16 %v3786, %v3785
      %v3816 = vpack.c.bf16 %v3788, %v3787
      %v3817 = vpack.c.bf16 %v3790, %v3789
      %v3818 = vpack.c.bf16 %v3792, %v3791
      %v3819 = vpack.c.bf16 %v3794, %v3793
      %v3820 = vpack.c.bf16 %v3796, %v3795
      %v3821 = vpack.c.bf16 %v3798, %v3797
      %v3822 = vpack.c.bf16 %v3800, %v3799
      %v3823 = vpack.c.bf16 %v3802, %v3801
      %v3824 = vpack.c.bf16 %v3804, %v3803
      %v3825 = vpack.c.bf16 %v3806, %v3805
      %v3826 = vpack.c.bf16 %v3808, %v3807
      %v3845 = vunpack.c.l.b16 %v3809
      %v3846 = vunpack.c.h.b16 %v3809
      %v3847 = vunpack.c.l.b16 %v3810
      %v3848 = vunpack.c.h.b16 %v3810
      %v3849 = vunpack.c.l.b16 %v3811
      %v3850 = vunpack.c.h.b16 %v3811
      %v3851 = vunpack.c.l.b16 %v3812
      %v3852 = vunpack.c.h.b16 %v3812
      %v3853 = vunpack.c.l.b16 %v3813
      %v3854 = vunpack.c.h.b16 %v3813
      %v3855 = vunpack.c.l.b16 %v3814
      %v3856 = vunpack.c.h.b16 %v3814
      %v3857 = vunpack.c.l.b16 %v3815
      %v3858 = vunpack.c.h.b16 %v3815
      %v3859 = vunpack.c.l.b16 %v3816
      %v3860 = vunpack.c.h.b16 %v3816
      %v3861 = vunpack.c.l.b16 %v3817
      %v3862 = vunpack.c.h.b16 %v3817
      %v3863 = vunpack.c.l.b16 %v3818
      %v3864 = vunpack.c.h.b16 %v3818
      %v3865 = vunpack.c.l.b16 %v3819
      %v3866 = vunpack.c.h.b16 %v3819
      %v3867 = vunpack.c.l.b16 %v3820
      %v3868 = vunpack.c.h.b16 %v3820
      %v3869 = vunpack.c.l.b16 %v3821
      %v3870 = vunpack.c.h.b16 %v3821
      %v3871 = vunpack.c.l.b16 %v3822
      %v3872 = vunpack.c.h.b16 %v3822
      %v3873 = vunpack.c.l.b16 %v3823
      %v3874 = vunpack.c.h.b16 %v3823
      %v3875 = vunpack.c.l.b16 %v3824
      %v3876 = vunpack.c.h.b16 %v3824
      %v3877 = vunpack.c.l.b16 %v3825
      %v3878 = vunpack.c.h.b16 %v3825
      %v3879 = vunpack.c.l.b16 %v3826
      %v3880 = vunpack.c.h.b16 %v3826
      %v3881 = vpack.c.b16 %v3845, %v3845
      %v3882 = vpack.c.b16 %v3846, %v3846
      %v3883 = vpack.c.b16 %v3847, %v3847
      %v3884 = vpack.c.b16 %v3848, %v3848
      %v3885 = vpack.c.b16 %v3849, %v3849
      %v3886 = vpack.c.b16 %v3850, %v3850
      %v3887 = vpack.c.b16 %v3851, %v3851
      %v3888 = vpack.c.b16 %v3852, %v3852
      %v3889 = vpack.c.b16 %v3853, %v3853
      %v3890 = vpack.c.b16 %v3854, %v3854
      %v3891 = vpack.c.b16 %v3855, %v3855
      %v3892 = vpack.c.b16 %v3856, %v3856
      %v3893 = vpack.c.b16 %v3857, %v3857
      %v3894 = vpack.c.b16 %v3858, %v3858
      %v3895 = vpack.c.b16 %v3859, %v3859
      %v3896 = vpack.c.b16 %v3860, %v3860
      %v3897 = vpack.c.b16 %v3861, %v3861
      %v3898 = vpack.c.b16 %v3862, %v3862
      %v3899 = vpack.c.b16 %v3863, %v3863
      %v3900 = vpack.c.b16 %v3864, %v3864
      %v3901 = vpack.c.b16 %v3865, %v3865
      %v3902 = vpack.c.b16 %v3866, %v3866
      %v3903 = vpack.c.b16 %v3867, %v3867
      %v3904 = vpack.c.b16 %v3868, %v3868
      %v3905 = vpack.c.b16 %v3869, %v3869
      %v3906 = vpack.c.b16 %v3870, %v3870
      %v3907 = vpack.c.b16 %v3871, %v3871
      %v3908 = vpack.c.b16 %v3872, %v3872
      %v3909 = vpack.c.b16 %v3873, %v3873
      %v3910 = vpack.c.b16 %v3874, %v3874
      %v3911 = vpack.c.b16 %v3875, %v3875
      %v3912 = vpack.c.b16 %v3876, %v3876
      %v3913 = vpack.c.b16 %v3877, %v3877
      %v3914 = vpack.c.b16 %v3878, %v3878
      %v3915 = vpack.c.b16 %v3879, %v3879
      %v3916 = vpack.c.b16 %v3880, %v3880
      %vm3953 = vcmask 60416
      %3954 = vst.msk [vmem:[%s170] sm:$0xf] %vm3953, %v3881
      %3955 = vst.msk [vmem:[%s170 + $0x4] sm:$0xf] %vm3953, %v3882
      %3956 = vst.msk [vmem:[%s170 + $0x8] sm:$0xf] %vm3953, %v3883
      %3957 = vst.msk [vmem:[%s170 + $0xc] sm:$0xf] %vm3953, %v3884
      %3958 = vst.msk [vmem:[%s170 + $0x10] sm:$0xf] %vm3953, %v3885
      %3959 = vst.msk [vmem:[%s170 + $0x14] sm:$0xf] %vm3953, %v3886
      %3960 = vst.msk [vmem:[%s170 + $0x18] sm:$0xf] %vm3953, %v3887
      %3961 = vst.msk [vmem:[%s170 + $0x1c] sm:$0xf] %vm3953, %v3888
      %3962 = vst.msk [vmem:[%s170 + $0x20] sm:$0xf] %vm3953, %v3889
      %3963 = vst.msk [vmem:[%s170 + $0x24] sm:$0xf] %vm3953, %v3890
      %3964 = vst.msk [vmem:[%s170 + $0x28] sm:$0xf] %vm3953, %v3891
      %3965 = vst.msk [vmem:[%s170 + $0x2c] sm:$0xf] %vm3953, %v3892
      %3966 = vst.msk [vmem:[%s170 + $0x30] sm:$0xf] %vm3953, %v3893
      %3967 = vst.msk [vmem:[%s170 + $0x34] sm:$0xf] %vm3953, %v3894
      %3968 = vst.msk [vmem:[%s170 + $0x38] sm:$0xf] %vm3953, %v3895
      %3969 = vst.msk [vmem:[%s170 + $0x3c] sm:$0xf] %vm3953, %v3896
      %3970 = vst.msk [vmem:[%s170 + $0x40] sm:$0xf] %vm3953, %v3897
      %3971 = vst.msk [vmem:[%s170 + $0x44] sm:$0xf] %vm3953, %v3898
      %3972 = vst.msk [vmem:[%s170 + $0x48] sm:$0xf] %vm3953, %v3899
      %3973 = vst.msk [vmem:[%s170 + $0x4c] sm:$0xf] %vm3953, %v3900
      %3974 = vst.msk [vmem:[%s170 + $0x50] sm:$0xf] %vm3953, %v3901
      %3975 = vst.msk [vmem:[%s170 + $0x54] sm:$0xf] %vm3953, %v3902
      %3976 = vst.msk [vmem:[%s170 + $0x58] sm:$0xf] %vm3953, %v3903
      %3977 = vst.msk [vmem:[%s170 + $0x5c] sm:$0xf] %vm3953, %v3904
      %3978 = vst.msk [vmem:[%s170 + $0x60] sm:$0xf] %vm3953, %v3905
      %3979 = vst.msk [vmem:[%s170 + $0x64] sm:$0xf] %vm3953, %v3906
      %3980 = vst.msk [vmem:[%s170 + $0x68] sm:$0xf] %vm3953, %v3907
      %3981 = vst.msk [vmem:[%s170 + $0x6c] sm:$0xf] %vm3953, %v3908
      %3982 = vst.msk [vmem:[%s170 + $0x70] sm:$0xf] %vm3953, %v3909
      %3983 = vst.msk [vmem:[%s170 + $0x74] sm:$0xf] %vm3953, %v3910
      %3984 = vst.msk [vmem:[%s170 + $0x78] sm:$0xf] %vm3953, %v3911
      %3985 = vst.msk [vmem:[%s170 + $0x7c] sm:$0xf] %vm3953, %v3912
      %3986 = vst.msk [vmem:[%s170 + $0x80] sm:$0xf] %vm3953, %v3913
      %3987 = vst.msk [vmem:[%s170 + $0x84] sm:$0xf] %vm3953, %v3914
      %3988 = vst.msk [vmem:[%s170 + $0x88] sm:$0xf] %vm3953, %v3915
      %vm3989 = vcmask 59392
      %3990 = vst.msk [vmem:[%s170 + $0x8c] sm:$0x7] %vm3989, %v3916
      %p3991 = scmp.lt.s32.totalorder %s14, 1
      %s3992 = scalar_select %p3991, %s14, 1
      %s3993 = smul.addr %s3992, 36
      %s3994 = smul.addr %s3993, 4
      %s3995 = scalar_lea.vmem %s3, %s3994
      // Predicated region
      $region33: #{customization_net_forward.2} parent=31 // pred_check
        %p3996 = pneg %p100
      $region34: #{customization_net_forward.2} parent=31 // pred_check_branch
        %3998 = sbr.rel (%p3996) target = $region36
      $region35: #{customization_net_forward.2} parent=31 // pred_region
        _
      $region36: #{customization_net_forward.2} parent=31 // pred_fallthru
        _
    $region32: #{customization_net_forward.2} parent=5 // pred_fallthru
      _
    %p3999 = scmp.le.s32.totalorder 2, %s9
    // Predicated region
    $region37: #{customization_net_forward.2} parent=5 // pred_check
      %p4000 = pneg %p3999
    $region38: #{customization_net_forward.2} parent=5 // pred_check_branch
      %4002 = sbr.rel (%p4000) target = $region40
    $region39: #{customization_net_forward.2} parent=5 // pred_region
      %s4003 = ssub.s32 %s9, 2
      // Predicated region
      $region41: #{customization_net_forward.2} parent=39 // pred_check
        %p4004 = pneg %p106
      $region42: #{customization_net_forward.2} parent=39 // pred_check_branch
        %4006 = sbr.rel (%p4004) target = $region44
      $region43: #{customization_net_forward.2} parent=39 // pred_region
        %p4007 = scmp.lt.s32.totalorder %s15, 1
        %s4008 = scalar_select %p4007, %s15, 1
        %s4009 = smul.addr %s4008, 36
        %s4010 = smul.addr %s4009, 4
        %s4011 = scalar_lea.vmem %s3, %s4010
      $region44: #{customization_net_forward.2} parent=39 // pred_fallthru
        _
    $region40: #{customization_net_forward.2} parent=5 // pred_fallthru
      _
  $region6: #{customization_net_forward.2} parent=0 // loop_footer
    %s13 = sadd.s32 1, %s9
  $region7: #{customization_net_forward.2} parent=0 // loop_footer_branch
    %8 = sbr.rel target = $region3
  $region8: #{customization_net_forward.2} parent=0 // loop_exit
    _

</llo_original>
